<compile_context>
chip_gen: v5e
topology: v5e:2x2
jax: 0.10.0
libtpu: 0.0.40
codegen_flags: <defaults>
</compile_context>

<pallas_src>
import math
import functools

import jax
import jax.numpy as jnp
from jax import lax
from jax.experimental import pallas as pl
from jax.experimental.pallas import tpu as pltpu

# ----------------------------- configuration --------------------------------
HIDDEN = 128          # hidden_size D
DEPTH = 2             # number of TransformerBlocks
NUM_HEADS = 4
HEAD_DIM = HIDDEN // NUM_HEADS
VOCAB = 256           # codebooks[0][0]
CANVAS = [1, 2]       # canvas_size (level-0 canvas is 1 token in training path)
BATCH = 2
NORM_EPS = 1e-6
FINAL_EPS = 1e-5      # nn.LayerNorm default eps in FinalLayer.norm_final
FFN_HIDDEN = 4 * HIDDEN
NEG_BIAS = -1e9       # additive bias for padded / cross-batch keys


# ------------------------------- kernel --------------------------------------
def _layernorm(v, eps, gamma=None, beta=None):
    mu = jnp.mean(v, axis=-1, keepdims=True)
    var = jnp.mean(jnp.square(v - mu), axis=-1, keepdims=True)
    y = (v - mu) * lax.rsqrt(var + eps)
    if gamma is not None:
        y = y * gamma + beta
    return y


def transformer_kernel(x_ref, cap_ref, mask_ref,
                       tok_g_ref, tok_b_ref,
                       ada_w_ref, ada_b_ref,
                       wq_ref, wk_ref, wv_ref, wo_ref,
                       w1_ref, w2_ref, w3_ref,
                       an1_g_ref, an1_b_ref, fn1_g_ref, fn1_b_ref,
                       fada_w_ref, fada_b_ref, fin_w_ref, fin_b_ref,
                       out_ref,
                       *, batch, seq_pad, depth, num_heads, head_dim,
                       norm_eps, final_eps):
    rows = batch * seq_pad
    d = x_ref.shape[-1]

    x = x_ref[...]          # (B*Sp, D) batch-flattened, sublane-padded tokens
    cap = cap_ref[...]      # (B, D)
    mask = mask_ref[...]    # (B*Sp, B*Sp) additive float bias (SDPA semantics)

    # token_embedder: LayerNorm(D, eps=norm_eps) with affine.
    x = _layernorm(x, norm_eps, tok_g_ref[...], tok_b_ref[...])

    # adaLN_modulation: Linear(SiLU(cap)) -> (B, 6D), shared by all blocks.
    cap_silu = cap * jax.nn.sigmoid(cap)
    adas = jnp.dot(cap_silu, ada_w_ref[...],
                   preferred_element_type=jnp.float32) + ada_b_ref[...]

    def bcast(a):
        # (B, X) -> (B*Sp, X): repeat each batch row over its Sp token rows.
        # Sublane-broadcast + aligned concat; computed ONCE (hoisted).
        return jnp.concatenate(
            [jnp.broadcast_to(a[i:i + 1, :], (seq_pad, a.shape[-1]))
             for i in range(batch)], axis=0)

    shift_msa = bcast(adas[:, 0 * d:1 * d])
    one_p_scale_msa = bcast(1.0 + adas[:, 1 * d:2 * d])   # hoisted (1 + scale)
    gate_msa = bcast(adas[:, 2 * d:3 * d])
    shift_mlp = bcast(adas[:, 3 * d:4 * d])
    one_p_scale_mlp = bcast(1.0 + adas[:, 4 * d:5 * d])   # hoisted (1 + scale)
    gate_mlp = bcast(adas[:, 5 * d:6 * d])

    sm_scale = 1.0 / math.sqrt(head_dim)

    for l in range(depth):
        # ---------------- attention branch ----------------
        h = _layernorm(x, norm_eps)                    # attention_norm (no affine)
        h = h * one_p_scale_msa + shift_msa            # modulate
        q = jnp.dot(h, wq_ref[l], preferred_element_type=jnp.float32)
        k = jnp.dot(h, wk_ref[l], preferred_element_type=jnp.float32)
        v = jnp.dot(h, wv_ref[l], preferred_element_type=jnp.float32)
        # pos_embed is zeros_like(...) in the reference -> q/k unchanged.

        wo_l = wo_ref[l]                               # load once per layer
        attn = jnp.zeros((rows, d), jnp.float32)
        for hh in range(num_heads):
            lo = hh * head_dim
            qh = q[:, lo:lo + head_dim]
            kh = k[:, lo:lo + head_dim]
            vh = v[:, lo:lo + head_dim]
            sc = lax.dot_general(qh, kh, (((1,), (1,)), ((), ())),
                                 preferred_element_type=jnp.float32)
            sc = sc * sm_scale + mask                  # additive 0/1 float bias
            sc = sc - jnp.max(sc, axis=-1, keepdims=True)
            p = jnp.exp(sc)
            p = p * pl.reciprocal(jnp.sum(p, axis=-1, keepdims=True), approx=True)
            # Accumulate through the output projection per head: keeps a full
            # 128-lane MXU output and removes the per-head concatenate.
            attn = attn + jnp.dot(
                jnp.dot(p, vh, preferred_element_type=jnp.float32),
                wo_l[lo:lo + head_dim, :],
                preferred_element_type=jnp.float32)

        g = gate_msa * attn
        g = _layernorm(g, norm_eps, an1_g_ref[l], an1_b_ref[l])   # attention_norm1
        x = x + g

        # ---------------- feed-forward branch ----------------
        h = _layernorm(x, norm_eps)                    # ffn_norm (no affine)
        h = h * one_p_scale_mlp + shift_mlp            # modulate
        h1 = jnp.dot(h, w1_ref[l], preferred_element_type=jnp.float32)
        h3 = jnp.dot(h, w3_ref[l], preferred_element_type=jnp.float32)
        ff = jnp.dot((h1 * jax.nn.sigmoid(h1)) * h3, w2_ref[l],
                     preferred_element_type=jnp.float32)
        g = gate_mlp * ff
        g = _layernorm(g, norm_eps, fn1_g_ref[l], fn1_b_ref[l])   # ffn_norm1
        x = x + g

    # ---------------- final layer ----------------
    fa = jnp.dot(cap_silu, fada_w_ref[...],
                 preferred_element_type=jnp.float32) + fada_b_ref[...]
    f_shift = bcast(fa[:, 0:d])
    f_one_p_scale = bcast(1.0 + fa[:, d:2 * d])
    out = _layernorm(x, final_eps)                     # norm_final (default eps, no affine)
    out = out * f_one_p_scale + f_shift
    out_ref[...] = (jnp.dot(out, fin_w_ref[...],
                            preferred_element_type=jnp.float32) + fin_b_ref[...])


# ------------------------------ wrapper ---------------------------------------
def run_transformer(total, cap_pooled, mask, params):
    """total: (B, S, D); cap_pooled: (B, D); mask: (S, S) additive 0/1 float.

    Returns (B, S, V) logits.  Pads S to a sublane multiple, flattens the batch
    and runs the entire forward in a single grid-less pallas_call.
    """
    b, s, d = total.shape
    v = params["fin_w"].shape[-1]
    depth = params["wq"].shape[0]
    s_pad = ((s + 7) // 8) * 8
    rows = b * s_pad

    # Pad token rows to the sublane multiple and flatten the batch.
    x_pad = jnp.zeros((b, s_pad, d), total.dtype).at[:, :s, :].set(total)
    xf = x_pad.reshape(rows, d)

    # Batch-block-diagonal additive mask: valid (q,k) pairs inside a batch keep
    # the original 0/1 bias; padded keys and cross-batch keys get NEG_BIAS so
    # they receive exactly zero attention weight.  Padded query rows attend
    # their own batch's valid keys (bias 0) to keep them finite; they are
    # sliced off before returning.
    big_mask = jnp.full((rows, rows), NEG_BIAS, jnp.float32)
    for i in range(b):
        r0 = i * s_pad
        big_mask = big_mask.at[r0:r0 + s, r0:r0 + s].set(mask)
        big_mask = big_mask.at[r0 + s:r0 + s_pad, r0:r0 + s].set(0.0)

    kernel = functools.partial(
        transformer_kernel, batch=b, seq_pad=s_pad, depth=depth,
        num_heads=NUM_HEADS, head_dim=d // NUM_HEADS,
        norm_eps=NORM_EPS, final_eps=FINAL_EPS)

    args = (xf, cap_pooled, big_mask,
            params["tok_g"], params["tok_b"],
            params["ada_w"], params["ada_b"],
            params["wq"], params["wk"], params["wv"], params["wo"],
            params["w1"], params["w2"], params["w3"],
            params["an1_g"], params["an1_b"], params["fn1_g"], params["fn1_b"],
            params["fada_w"], params["fada_b"],
            params["fin_w"], params["fin_b"])

    # Single invocation, no grid: every operand is a whole-array VMEM block,
    # weights are loaded exactly once (~3 MiB total), and the (rows, V) output
    # is lane/sublane aligned -> unmasked stores.
    # TODO(synk): if HIDDEN/DEPTH are scaled up, switch to a depth grid axis
    # (per-layer weight streaming) so only ~2 layers of weights stay resident.
    out = pl.pallas_call(
        kernel,
        out_shape=jax.ShapeDtypeStruct((rows, v), jnp.float32),
        compiler_params=pltpu.CompilerParams(
            vmem_limit_bytes=16 * 1024 * 1024),
    )(*args)

    return out.reshape(b, s_pad, v)[:, :s, :]


# -------------------------- plain-JAX glue & reference -------------------------
def layer_norm_noaffine(x, eps):
    mu = jnp.mean(x, axis=-1, keepdims=True)
    var = jnp.mean(jnp.square(x - mu), axis=-1, keepdims=True)
    return (x - mu) * lax.rsqrt(var + eps)


def layer_norm_jax(x, eps, gamma, beta):
    return layer_norm_noaffine(x, eps) * gamma + beta


def prepare_input_mask(canvas):
    lengths = [c * c for c in canvas]
    s = sum(lengths)
    m = jnp.tril(jnp.ones((s, s), jnp.float32))
    cur = 0
    for l in lengths:
        m = m.at[cur:cur + l, cur:cur + l].set(1.0)
        cur += l
    return m


def prepare_tokens(level_inputs, cap_pooled, params):
    """Reproduces AnyResolutionModel.forward() token prep (training path)."""
    it_g, it_b = params["it_g"], params["it_b"]
    level_emb = params["level_emb"]
    total = []
    for level, current in enumerate(level_inputs):
        if level == 0:
            assert current is None
            flpe = params["first_level_pos_embed"]                  # (1, C*C, D)
            H = W = math.isqrt(flpe.shape[1])
            pe = flpe.reshape(H, W, -1)
            up, left = (H - 1) // 2, (W - 1) // 2
            sel = pe[up:up + 1, left:left + 1].reshape(1, -1)        # (1, D)
            cur = sel[None, :, :] + cap_pooled[:, None, :]           # (B, 1, D)
            cur = layer_norm_jax(cur, NORM_EPS, it_g, it_b)
        else:
            b, c, h, w = current.shape                               # NCHW
            cur = jnp.transpose(current, (0, 2, 3, 1)).reshape(b, h * w, c)
            cur = layer_norm_jax(cur, NORM_EPS, it_g, it_b)
        cur = cur + level_emb[level]
        total.append(cur)
    return jnp.concatenate(total, axis=1)


def transformer_ref(total, cap_pooled, mask, params):
    """Plain-JAX reference of the Transformer forward (for validation)."""
    b, s, d = total.shape
    x = layer_norm_jax(total, NORM_EPS, params["tok_g"], params["tok_b"])
    cap_silu = cap_pooled * jax.nn.sigmoid(cap_pooled)
    adas = cap_silu @ params["ada_w"] + params["ada_b"]
    chunks = [adas[:, i * d:(i + 1) * d][:, None, :] for i in range(6)]
    shift_msa, scale_msa, gate_msa, shift_mlp, scale_mlp, gate_mlp = chunks
    sm = 1.0 / math.sqrt(HEAD_DIM)
    for l in range(DEPTH):
        h = layer_norm_noaffine(x, NORM_EPS) * (1 + scale_msa) + shift_msa
        q = h @ params["wq"][l]
        k = h @ params["wk"][l]
        v = h @ params["wv"][l]
        qh = q.reshape(b, s, NUM_HEADS, HEAD_DIM)
        kh = k.reshape(b, s, NUM_HEADS, HEAD_DIM)
        vh = v.reshape(b, s, NUM_HEADS, HEAD_DIM)
        sc = jnp.einsum('bqhd,bkhd->bhqk', qh, kh) * sm + mask[None, None]
        p = jax.nn.softmax(sc, axis=-1)
        o = jnp.einsum('bhqk,bkhd->bqhd', p, vh).reshape(b, s, d)
        attn = o @ params["wo"][l]
        x = x + layer_norm_jax(gate_msa * attn, NORM_EPS,
                               params["an1_g"][l], params["an1_b"][l])
        h = layer_norm_noaffine(x, NORM_EPS) * (1 + scale_mlp) + shift_mlp
        h1 = h @ params["w1"][l]
        h3 = h @ params["w3"][l]
        ff = (jax.nn.silu(h1) * h3) @ params["w2"][l]
        x = x + layer_norm_jax(gate_mlp * ff, NORM_EPS,
                               params["fn1_g"][l], params["fn1_b"][l])
    fa = cap_silu @ params["fada_w"] + params["fada_b"]
    f_shift = fa[:, :d][:, None, :]
    f_scale = fa[:, d:][:, None, :]
    out = layer_norm_noaffine(x, FINAL_EPS) * (1 + f_scale) + f_shift
    return out @ params["fin_w"] + params["fin_b"]


def init_params(key):
    ks = iter(jax.random.split(key, 64))

    def nrm(shape, std):
        return jax.random.normal(next(ks), shape, jnp.float32) * std

    d, L, V, F = HIDDEN, DEPTH, VOCAB, FFN_HIDDEN
    pe_std = math.sqrt(2.0 / (5.0 * d))
    # NOTE: weights kept f32 to match PyTorch reference numerics exactly; for
    # v6e/v7x MXU throughput they could be cast to bf16 at the matmul sites.
    return {
        "first_level_pos_embed": nrm((1, CANVAS[-1] * CANVAS[-1], d), pe_std),
        "level_emb": nrm((len(CANVAS), d), pe_std),
        "it_g": 1.0 + nrm((d,), 0.02), "it_b": nrm((d,), 0.02),
        "tok_g": 1.0 + nrm((1, d), 0.02), "tok_b": nrm((1, d), 0.02),
        "ada_w": nrm((d, 6 * d), 1.0 / math.sqrt(d)), "ada_b": nrm((1, 6 * d), 0.02),
        "wq": nrm((L, d, d), 1.0 / math.sqrt(d)),
        "wk": nrm((L, d, d), 1.0 / math.sqrt(d)),
        "wv": nrm((L, d, d), 1.0 / math.sqrt(d)),
        "wo": nrm((L, d, d), 1.0 / math.sqrt(d)),
        "w1": nrm((L, d, F), 1.0 / math.sqrt(d)),
        "w2": nrm((L, F, d), 1.0 / math.sqrt(F)),
        "w3": nrm((L, d, F), 1.0 / math.sqrt(d)),
        "an1_g": 1.0 + nrm((L, 1, d), 0.02), "an1_b": nrm((L, 1, d), 0.02),
        "fn1_g": 1.0 + nrm((L, 1, d), 0.02), "fn1_b": nrm((L, 1, d), 0.02),
        "fada_w": nrm((d, 2 * d), 1.0 / math.sqrt(d)), "fada_b": nrm((1, 2 * d), 0.02),
        "fin_w": nrm((d, V), 1.0 / math.sqrt(d)), "fin_b": nrm((1, V), 0.02),
    }
    # TODO(synk): eval-mode level==0 branch references undefined attrs in the
    # reference (self.token_dim / self.cap_to_first_token); only the training
    # forward is implemented.


# ---------------------------------- main ---------------------------------------
if __name__ == "__main__":
    root = jax.random.PRNGKey(0)
    k_params, k_x, k_cap = jax.random.split(root, 3)

    params = init_params(k_params)

    # Inputs, PyTorch conventions: level-0 is None, level-1 is NCHW features.
    x_level1 = jax.random.normal(k_x, (BATCH, HIDDEN, CANVAS[1], CANVAS[1]),
                                 jnp.float32)
    cap_pooled = jax.random.normal(k_cap, (BATCH, HIDDEN), jnp.float32)

    total = prepare_tokens([None, x_level1], cap_pooled, params)   # (B, S, D)
    mask = prepare_input_mask(CANVAS)                              # (S, S)

    logits = run_transformer(total, cap_pooled, mask, params)
    logits = jax.block_until_ready(logits)

    seq = sum(c * c for c in CANVAS)
    assert logits.shape == (BATCH, seq, VOCAB), logits.shape
    assert bool(jnp.all(jnp.isfinite(logits)))

    # Validate the kernel against a plain-JAX reference of the same forward.
    ref = jax.block_until_ready(transformer_ref(total, cap_pooled, mask, params))
    err = float(jnp.max(jnp.abs(logits - ref)))
    assert err < 5e-2, f"kernel vs JAX reference mismatch: max abs err {err}"

    print("KERNEL_OK")
</pallas_src>

<mosaic_0001>
module attributes {stable_mosaic.version = 11 : i64} {
  func.func @transformer_kernel(%arg0: memref<16x128xf32, #tpu.memory_space<vmem>>, %arg1: memref<2x128xf32, #tpu.memory_space<vmem>>, %arg2: memref<16x16xf32, #tpu.memory_space<vmem>>, %arg3: memref<1x128xf32, #tpu.memory_space<vmem>>, %arg4: memref<1x128xf32, #tpu.memory_space<vmem>>, %arg5: memref<128x768xf32, #tpu.memory_space<vmem>>, %arg6: memref<1x768xf32, #tpu.memory_space<vmem>>, %arg7: memref<2x128x128xf32, #tpu.memory_space<vmem>>, %arg8: memref<2x128x128xf32, #tpu.memory_space<vmem>>, %arg9: memref<2x128x128xf32, #tpu.memory_space<vmem>>, %arg10: memref<2x128x128xf32, #tpu.memory_space<vmem>>, %arg11: memref<2x128x512xf32, #tpu.memory_space<vmem>>, %arg12: memref<2x512x128xf32, #tpu.memory_space<vmem>>, %arg13: memref<2x128x512xf32, #tpu.memory_space<vmem>>, %arg14: memref<2x1x128xf32, #tpu.memory_space<vmem>>, %arg15: memref<2x1x128xf32, #tpu.memory_space<vmem>>, %arg16: memref<2x1x128xf32, #tpu.memory_space<vmem>>, %arg17: memref<2x1x128xf32, #tpu.memory_space<vmem>>, %arg18: memref<128x256xf32, #tpu.memory_space<vmem>>, %arg19: memref<1x256xf32, #tpu.memory_space<vmem>>, %arg20: memref<128x256xf32, #tpu.memory_space<vmem>>, %arg21: memref<1x256xf32, #tpu.memory_space<vmem>>, %arg22: memref<16x256xf32, #tpu.memory_space<vmem>>) attributes {dimension_semantics = [], scalar_prefetch = 0 : i64, scratch_operands = 0 : i64, tpu.core_type = #tpu.core_type<tc>} {
    %c0 = arith.constant 0 : index
    %c0_0 = arith.constant 0 : index
    %0 = vector.load %arg0[%c0, %c0_0] : memref<16x128xf32, #tpu.memory_space<vmem>>, vector<16x128xf32>
    %c0_1 = arith.constant 0 : index
    %c0_2 = arith.constant 0 : index
    %1 = vector.load %arg1[%c0_1, %c0_2] : memref<2x128xf32, #tpu.memory_space<vmem>>, vector<2x128xf32>
    %c0_3 = arith.constant 0 : index
    %c0_4 = arith.constant 0 : index
    %2 = vector.load %arg2[%c0_3, %c0_4] : memref<16x16xf32, #tpu.memory_space<vmem>>, vector<16x16xf32>
    %c0_5 = arith.constant 0 : index
    %c0_6 = arith.constant 0 : index
    %3 = vector.load %arg3[%c0_5, %c0_6] : memref<1x128xf32, #tpu.memory_space<vmem>>, vector<1x128xf32>
    %c0_7 = arith.constant 0 : index
    %c0_8 = arith.constant 0 : index
    %4 = vector.load %arg4[%c0_7, %c0_8] : memref<1x128xf32, #tpu.memory_space<vmem>>, vector<1x128xf32>
    %cst = arith.constant dense<0.000000e+00> : vector<16xf32>
    %5 = vector.multi_reduction <add>, %0, %cst [1] : vector<16x128xf32> to vector<16xf32>
    %6 = vector.shape_cast %5 : vector<16xf32> to vector<16x1xf32>
    %cst_9 = arith.constant 1.280000e+02 : f32
    %7 = vector.broadcast %cst_9 : f32 to vector<16x1xf32>
    %8 = arith.divf %6, %7 : vector<16x1xf32>
    %9 = vector.broadcast %8 : vector<16x1xf32> to vector<16x128xf32>
    %10 = arith.subf %0, %9 : vector<16x128xf32>
    %11 = arith.mulf %10, %10 : vector<16x128xf32>
    %cst_10 = arith.constant dense<0.000000e+00> : vector<16xf32>
    %12 = vector.multi_reduction <add>, %11, %cst_10 [1] : vector<16x128xf32> to vector<16xf32>
    %13 = vector.shape_cast %12 : vector<16xf32> to vector<16x1xf32>
    %cst_11 = arith.constant 1.280000e+02 : f32
    %14 = vector.broadcast %cst_11 : f32 to vector<16x1xf32>
    %15 = arith.divf %13, %14 : vector<16x1xf32>
    %16 = vector.broadcast %8 : vector<16x1xf32> to vector<16x128xf32>
    %17 = arith.subf %0, %16 : vector<16x128xf32>
    %cst_12 = arith.constant 9.99999997E-7 : f32
    %18 = vector.broadcast %cst_12 : f32 to vector<16x1xf32>
    %19 = arith.addf %15, %18 : vector<16x1xf32>
    %20 = math.rsqrt %19 : vector<16x1xf32>
    %21 = vector.broadcast %20 : vector<16x1xf32> to vector<16x128xf32>
    %22 = arith.mulf %17, %21 : vector<16x128xf32>
    %23 = vector.broadcast %3 : vector<1x128xf32> to vector<16x128xf32>
    %24 = arith.mulf %22, %23 : vector<16x128xf32>
    %25 = vector.broadcast %4 : vector<1x128xf32> to vector<16x128xf32>
    %26 = arith.addf %24, %25 : vector<16x128xf32>
    %27 = arith.negf %1 : vector<2x128xf32>
    %28 = math.exp %27 : vector<2x128xf32>
    %cst_13 = arith.constant 1.000000e+00 : f32
    %29 = vector.broadcast %cst_13 : f32 to vector<2x128xf32>
    %30 = arith.addf %29, %28 : vector<2x128xf32>
    %31 = arith.divf %29, %30 : vector<2x128xf32>
    %32 = arith.mulf %1, %31 : vector<2x128xf32>
    %c0_14 = arith.constant 0 : index
    %c0_15 = arith.constant 0 : index
    %33 = vector.load %arg5[%c0_14, %c0_15] : memref<128x768xf32, #tpu.memory_space<vmem>>, vector<128x768xf32>
    %cst_16 = arith.constant dense<0.000000e+00> : vector<2x768xf32>
    %34 = tpu.matmul %32, %33, %cst_16 {dimension_numbers = #tpu.dot_dimension_numbers<[1], [0], [0], [1], [0, 0, 1, 1], [], []>} : vector<2x128xf32>, vector<128x768xf32>, vector<2x768xf32> -> vector<2x768xf32>
    %c0_17 = arith.constant 0 : index
    %c0_18 = arith.constant 0 : index
    %35 = vector.load %arg6[%c0_17, %c0_18] : memref<1x768xf32, #tpu.memory_space<vmem>>, vector<1x768xf32>
    %36 = vector.broadcast %35 : vector<1x768xf32> to vector<2x768xf32>
    %37 = arith.addf %34, %36 : vector<2x768xf32>
    %38 = vector.extract_strided_slice %37 {offsets = [0, 0], sizes = [2, 128], strides = [1, 1]} : vector<2x768xf32> to vector<2x128xf32>
    %39 = vector.extract_strided_slice %38 {offsets = [0, 0], sizes = [1, 128], strides = [1, 1]} : vector<2x128xf32> to vector<1x128xf32>
    %40 = vector.shape_cast %39 : vector<1x128xf32> to vector<1x128xf32>
    %41 = vector.broadcast %40 : vector<1x128xf32> to vector<8x128xf32>
    %42 = vector.extract_strided_slice %38 {offsets = [1, 0], sizes = [1, 128], strides = [1, 1]} : vector<2x128xf32> to vector<1x128xf32>
    %43 = vector.shape_cast %42 : vector<1x128xf32> to vector<1x128xf32>
    %44 = vector.broadcast %43 : vector<1x128xf32> to vector<8x128xf32>
    %45 = tpu.concatenate %41, %44 in 0 : vector<8x128xf32>, vector<8x128xf32> -> vector<16x128xf32>
    %46 = vector.extract_strided_slice %37 {offsets = [0, 128], sizes = [2, 128], strides = [1, 1]} : vector<2x768xf32> to vector<2x128xf32>
    %cst_19 = arith.constant 1.000000e+00 : f32
    %47 = vector.broadcast %cst_19 : f32 to vector<2x128xf32>
    %48 = arith.addf %47, %46 : vector<2x128xf32>
    %49 = vector.extract_strided_slice %48 {offsets = [0, 0], sizes = [1, 128], strides = [1, 1]} : vector<2x128xf32> to vector<1x128xf32>
    %50 = vector.shape_cast %49 : vector<1x128xf32> to vector<1x128xf32>
    %51 = vector.broadcast %50 : vector<1x128xf32> to vector<8x128xf32>
    %52 = vector.extract_strided_slice %48 {offsets = [1, 0], sizes = [1, 128], strides = [1, 1]} : vector<2x128xf32> to vector<1x128xf32>
    %53 = vector.shape_cast %52 : vector<1x128xf32> to vector<1x128xf32>
    %54 = vector.broadcast %53 : vector<1x128xf32> to vector<8x128xf32>
    %55 = tpu.concatenate %51, %54 in 0 : vector<8x128xf32>, vector<8x128xf32> -> vector<16x128xf32>
    %56 = vector.extract_strided_slice %37 {offsets = [0, 256], sizes = [2, 128], strides = [1, 1]} : vector<2x768xf32> to vector<2x128xf32>
    %57 = vector.extract_strided_slice %56 {offsets = [0, 0], sizes = [1, 128], strides = [1, 1]} : vector<2x128xf32> to vector<1x128xf32>
    %58 = vector.shape_cast %57 : vector<1x128xf32> to vector<1x128xf32>
    %59 = vector.broadcast %58 : vector<1x128xf32> to vector<8x128xf32>
    %60 = vector.extract_strided_slice %56 {offsets = [1, 0], sizes = [1, 128], strides = [1, 1]} : vector<2x128xf32> to vector<1x128xf32>
    %61 = vector.shape_cast %60 : vector<1x128xf32> to vector<1x128xf32>
    %62 = vector.broadcast %61 : vector<1x128xf32> to vector<8x128xf32>
    %63 = tpu.concatenate %59, %62 in 0 : vector<8x128xf32>, vector<8x128xf32> -> vector<16x128xf32>
    %64 = vector.extract_strided_slice %37 {offsets = [0, 384], sizes = [2, 128], strides = [1, 1]} : vector<2x768xf32> to vector<2x128xf32>
    %65 = vector.extract_strided_slice %64 {offsets = [0, 0], sizes = [1, 128], strides = [1, 1]} : vector<2x128xf32> to vector<1x128xf32>
    %66 = vector.shape_cast %65 : vector<1x128xf32> to vector<1x128xf32>
    %67 = vector.broadcast %66 : vector<1x128xf32> to vector<8x128xf32>
    %68 = vector.extract_strided_slice %64 {offsets = [1, 0], sizes = [1, 128], strides = [1, 1]} : vector<2x128xf32> to vector<1x128xf32>
    %69 = vector.shape_cast %68 : vector<1x128xf32> to vector<1x128xf32>
    %70 = vector.broadcast %69 : vector<1x128xf32> to vector<8x128xf32>
    %71 = tpu.concatenate %67, %70 in 0 : vector<8x128xf32>, vector<8x128xf32> -> vector<16x128xf32>
    %72 = vector.extract_strided_slice %37 {offsets = [0, 512], sizes = [2, 128], strides = [1, 1]} : vector<2x768xf32> to vector<2x128xf32>
    %cst_20 = arith.constant 1.000000e+00 : f32
    %73 = vector.broadcast %cst_20 : f32 to vector<2x128xf32>
    %74 = arith.addf %73, %72 : vector<2x128xf32>
    %75 = vector.extract_strided_slice %74 {offsets = [0, 0], sizes = [1, 128], strides = [1, 1]} : vector<2x128xf32> to vector<1x128xf32>
    %76 = vector.shape_cast %75 : vector<1x128xf32> to vector<1x128xf32>
    %77 = vector.broadcast %76 : vector<1x128xf32> to vector<8x128xf32>
    %78 = vector.extract_strided_slice %74 {offsets = [1, 0], sizes = [1, 128], strides = [1, 1]} : vector<2x128xf32> to vector<1x128xf32>
    %79 = vector.shape_cast %78 : vector<1x128xf32> to vector<1x128xf32>
    %80 = vector.broadcast %79 : vector<1x128xf32> to vector<8x128xf32>
    %81 = tpu.concatenate %77, %80 in 0 : vector<8x128xf32>, vector<8x128xf32> -> vector<16x128xf32>
    %82 = vector.extract_strided_slice %37 {offsets = [0, 640], sizes = [2, 128], strides = [1, 1]} : vector<2x768xf32> to vector<2x128xf32>
    %83 = vector.extract_strided_slice %82 {offsets = [0, 0], sizes = [1, 128], strides = [1, 1]} : vector<2x128xf32> to vector<1x128xf32>
    %84 = vector.shape_cast %83 : vector<1x128xf32> to vector<1x128xf32>
    %85 = vector.broadcast %84 : vector<1x128xf32> to vector<8x128xf32>
    %86 = vector.extract_strided_slice %82 {offsets = [1, 0], sizes = [1, 128], strides = [1, 1]} : vector<2x128xf32> to vector<1x128xf32>
    %87 = vector.shape_cast %86 : vector<1x128xf32> to vector<1x128xf32>
    %88 = vector.broadcast %87 : vector<1x128xf32> to vector<8x128xf32>
    %89 = tpu.concatenate %85, %88 in 0 : vector<8x128xf32>, vector<8x128xf32> -> vector<16x128xf32>
    %cst_21 = arith.constant dense<0.000000e+00> : vector<16xf32>
    %90 = vector.multi_reduction <add>, %26, %cst_21 [1] : vector<16x128xf32> to vector<16xf32>
    %91 = vector.shape_cast %90 : vector<16xf32> to vector<16x1xf32>
    %cst_22 = arith.constant 1.280000e+02 : f32
    %92 = vector.broadcast %cst_22 : f32 to vector<16x1xf32>
    %93 = arith.divf %91, %92 : vector<16x1xf32>
    %94 = vector.broadcast %93 : vector<16x1xf32> to vector<16x128xf32>
    %95 = arith.subf %26, %94 : vector<16x128xf32>
    %96 = arith.mulf %95, %95 : vector<16x128xf32>
    %cst_23 = arith.constant dense<0.000000e+00> : vector<16xf32>
    %97 = vector.multi_reduction <add>, %96, %cst_23 [1] : vector<16x128xf32> to vector<16xf32>
    %98 = vector.shape_cast %97 : vector<16xf32> to vector<16x1xf32>
    %cst_24 = arith.constant 1.280000e+02 : f32
    %99 = vector.broadcast %cst_24 : f32 to vector<16x1xf32>
    %100 = arith.divf %98, %99 : vector<16x1xf32>
    %101 = vector.broadcast %93 : vector<16x1xf32> to vector<16x128xf32>
    %102 = arith.subf %26, %101 : vector<16x128xf32>
    %cst_25 = arith.constant 9.99999997E-7 : f32
    %103 = vector.broadcast %cst_25 : f32 to vector<16x1xf32>
    %104 = arith.addf %100, %103 : vector<16x1xf32>
    %105 = math.rsqrt %104 : vector<16x1xf32>
    %106 = vector.broadcast %105 : vector<16x1xf32> to vector<16x128xf32>
    %107 = arith.mulf %102, %106 : vector<16x128xf32>
    %108 = arith.mulf %107, %55 : vector<16x128xf32>
    %109 = arith.addf %108, %45 : vector<16x128xf32>
    %c0_26 = arith.constant 0 : index
    %c0_27 = arith.constant 0 : index
    %c0_28 = arith.constant 0 : index
    %110 = vector.load %arg7[%c0_26, %c0_27, %c0_28] : memref<2x128x128xf32, #tpu.memory_space<vmem>>, vector<1x128x128xf32>
    %111 = vector.shape_cast %110 : vector<1x128x128xf32> to vector<128x128xf32>
    %cst_29 = arith.constant dense<0.000000e+00> : vector<16x128xf32>
    %112 = tpu.matmul %109, %111, %cst_29 {dimension_numbers = #tpu.dot_dimension_numbers<[1], [0], [0], [1], [0, 0, 1, 1], [], []>} : vector<16x128xf32>, vector<128x128xf32>, vector<16x128xf32> -> vector<16x128xf32>
    %c0_30 = arith.constant 0 : index
    %c0_31 = arith.constant 0 : index
    %c0_32 = arith.constant 0 : index
    %113 = vector.load %arg8[%c0_30, %c0_31, %c0_32] : memref<2x128x128xf32, #tpu.memory_space<vmem>>, vector<1x128x128xf32>
    %114 = vector.shape_cast %113 : vector<1x128x128xf32> to vector<128x128xf32>
    %cst_33 = arith.constant dense<0.000000e+00> : vector<16x128xf32>
    %115 = tpu.matmul %109, %114, %cst_33 {dimension_numbers = #tpu.dot_dimension_numbers<[1], [0], [0], [1], [0, 0, 1, 1], [], []>} : vector<16x128xf32>, vector<128x128xf32>, vector<16x128xf32> -> vector<16x128xf32>
    %c0_34 = arith.constant 0 : index
    %c0_35 = arith.constant 0 : index
    %c0_36 = arith.constant 0 : index
    %116 = vector.load %arg9[%c0_34, %c0_35, %c0_36] : memref<2x128x128xf32, #tpu.memory_space<vmem>>, vector<1x128x128xf32>
    %117 = vector.shape_cast %116 : vector<1x128x128xf32> to vector<128x128xf32>
    %cst_37 = arith.constant dense<0.000000e+00> : vector<16x128xf32>
    %118 = tpu.matmul %109, %117, %cst_37 {dimension_numbers = #tpu.dot_dimension_numbers<[1], [0], [0], [1], [0, 0, 1, 1], [], []>} : vector<16x128xf32>, vector<128x128xf32>, vector<16x128xf32> -> vector<16x128xf32>
    %c0_38 = arith.constant 0 : index
    %c0_39 = arith.constant 0 : index
    %c0_40 = arith.constant 0 : index
    %119 = vector.load %arg10[%c0_38, %c0_39, %c0_40] : memref<2x128x128xf32, #tpu.memory_space<vmem>>, vector<1x128x128xf32>
    %120 = vector.shape_cast %119 : vector<1x128x128xf32> to vector<128x128xf32>
    %cst_41 = arith.constant 0.000000e+00 : f32
    %121 = vector.broadcast %cst_41 : f32 to vector<16x128xf32>
    %122 = vector.extract_strided_slice %112 {offsets = [0, 0], sizes = [16, 32], strides = [1, 1]} : vector<16x128xf32> to vector<16x32xf32>
    %123 = vector.extract_strided_slice %115 {offsets = [0, 0], sizes = [16, 32], strides = [1, 1]} : vector<16x128xf32> to vector<16x32xf32>
    %124 = vector.extract_strided_slice %118 {offsets = [0, 0], sizes = [16, 32], strides = [1, 1]} : vector<16x128xf32> to vector<16x32xf32>
    %cst_42 = arith.constant dense<0.000000e+00> : vector<16x16xf32>
    %125 = tpu.matmul %122, %123, %cst_42 {dimension_numbers = #tpu.dot_dimension_numbers<[1], [1], [0], [0], [0, 0, 1, 0], [], []>} : vector<16x32xf32>, vector<16x32xf32>, vector<16x16xf32> -> vector<16x16xf32>
    %cst_43 = arith.constant 0.176776692 : f32
    %126 = vector.broadcast %cst_43 : f32 to vector<16x16xf32>
    %127 = arith.mulf %125, %126 : vector<16x16xf32>
    %128 = arith.addf %127, %2 : vector<16x16xf32>
    %cst_44 = arith.constant dense<0xFF800000> : vector<16xf32>
    %129 = vector.multi_reduction <maximumf>, %128, %cst_44 [1] : vector<16x16xf32> to vector<16xf32>
    %130 = vector.shape_cast %129 : vector<16xf32> to vector<16x1xf32>
    %131 = vector.broadcast %130 : vector<16x1xf32> to vector<16x16xf32>
    %132 = arith.subf %128, %131 : vector<16x16xf32>
    %133 = math.exp %132 : vector<16x16xf32>
    %cst_45 = arith.constant dense<0.000000e+00> : vector<16xf32>
    %134 = vector.multi_reduction <add>, %133, %cst_45 [1] : vector<16x16xf32> to vector<16xf32>
    %135 = vector.shape_cast %134 : vector<16xf32> to vector<16x1xf32>
    %136 = tpu.reciprocal %135 {approx = true} : vector<16x1xf32> -> vector<16x1xf32>
    %137 = vector.broadcast %136 : vector<16x1xf32> to vector<16x16xf32>
    %138 = arith.mulf %133, %137 : vector<16x16xf32>
    %cst_46 = arith.constant dense<0.000000e+00> : vector<16x32xf32>
    %139 = tpu.matmul %138, %124, %cst_46 {dimension_numbers = #tpu.dot_dimension_numbers<[1], [0], [0], [1], [0, 0, 1, 1], [], []>} : vector<16x16xf32>, vector<16x32xf32>, vector<16x32xf32> -> vector<16x32xf32>
    %140 = vector.extract_strided_slice %120 {offsets = [0, 0], sizes = [32, 128], strides = [1, 1]} : vector<128x128xf32> to vector<32x128xf32>
    %cst_47 = arith.constant dense<0.000000e+00> : vector<16x128xf32>
    %141 = tpu.matmul %139, %140, %cst_47 {dimension_numbers = #tpu.dot_dimension_numbers<[1], [0], [0], [1], [0, 0, 1, 1], [], []>} : vector<16x32xf32>, vector<32x128xf32>, vector<16x128xf32> -> vector<16x128xf32>
    %142 = arith.addf %121, %141 : vector<16x128xf32>
    %143 = vector.extract_strided_slice %112 {offsets = [0, 32], sizes = [16, 32], strides = [1, 1]} : vector<16x128xf32> to vector<16x32xf32>
    %144 = vector.extract_strided_slice %115 {offsets = [0, 32], sizes = [16, 32], strides = [1, 1]} : vector<16x128xf32> to vector<16x32xf32>
    %145 = vector.extract_strided_slice %118 {offsets = [0, 32], sizes = [16, 32], strides = [1, 1]} : vector<16x128xf32> to vector<16x32xf32>
    %cst_48 = arith.constant dense<0.000000e+00> : vector<16x16xf32>
    %146 = tpu.matmul %143, %144, %cst_48 {dimension_numbers = #tpu.dot_dimension_numbers<[1], [1], [0], [0], [0, 0, 1, 0], [], []>} : vector<16x32xf32>, vector<16x32xf32>, vector<16x16xf32> -> vector<16x16xf32>
    %cst_49 = arith.constant 0.176776692 : f32
    %147 = vector.broadcast %cst_49 : f32 to vector<16x16xf32>
    %148 = arith.mulf %146, %147 : vector<16x16xf32>
    %149 = arith.addf %148, %2 : vector<16x16xf32>
    %cst_50 = arith.constant dense<0xFF800000> : vector<16xf32>
    %150 = vector.multi_reduction <maximumf>, %149, %cst_50 [1] : vector<16x16xf32> to vector<16xf32>
    %151 = vector.shape_cast %150 : vector<16xf32> to vector<16x1xf32>
    %152 = vector.broadcast %151 : vector<16x1xf32> to vector<16x16xf32>
    %153 = arith.subf %149, %152 : vector<16x16xf32>
    %154 = math.exp %153 : vector<16x16xf32>
    %cst_51 = arith.constant dense<0.000000e+00> : vector<16xf32>
    %155 = vector.multi_reduction <add>, %154, %cst_51 [1] : vector<16x16xf32> to vector<16xf32>
    %156 = vector.shape_cast %155 : vector<16xf32> to vector<16x1xf32>
    %157 = tpu.reciprocal %156 {approx = true} : vector<16x1xf32> -> vector<16x1xf32>
    %158 = vector.broadcast %157 : vector<16x1xf32> to vector<16x16xf32>
    %159 = arith.mulf %154, %158 : vector<16x16xf32>
    %cst_52 = arith.constant dense<0.000000e+00> : vector<16x32xf32>
    %160 = tpu.matmul %159, %145, %cst_52 {dimension_numbers = #tpu.dot_dimension_numbers<[1], [0], [0], [1], [0, 0, 1, 1], [], []>} : vector<16x16xf32>, vector<16x32xf32>, vector<16x32xf32> -> vector<16x32xf32>
    %161 = vector.extract_strided_slice %120 {offsets = [32, 0], sizes = [32, 128], strides = [1, 1]} : vector<128x128xf32> to vector<32x128xf32>
    %cst_53 = arith.constant dense<0.000000e+00> : vector<16x128xf32>
    %162 = tpu.matmul %160, %161, %cst_53 {dimension_numbers = #tpu.dot_dimension_numbers<[1], [0], [0], [1], [0, 0, 1, 1], [], []>} : vector<16x32xf32>, vector<32x128xf32>, vector<16x128xf32> -> vector<16x128xf32>
    %163 = arith.addf %142, %162 : vector<16x128xf32>
    %164 = vector.extract_strided_slice %112 {offsets = [0, 64], sizes = [16, 32], strides = [1, 1]} : vector<16x128xf32> to vector<16x32xf32>
    %165 = vector.extract_strided_slice %115 {offsets = [0, 64], sizes = [16, 32], strides = [1, 1]} : vector<16x128xf32> to vector<16x32xf32>
    %166 = vector.extract_strided_slice %118 {offsets = [0, 64], sizes = [16, 32], strides = [1, 1]} : vector<16x128xf32> to vector<16x32xf32>
    %cst_54 = arith.constant dense<0.000000e+00> : vector<16x16xf32>
    %167 = tpu.matmul %164, %165, %cst_54 {dimension_numbers = #tpu.dot_dimension_numbers<[1], [1], [0], [0], [0, 0, 1, 0], [], []>} : vector<16x32xf32>, vector<16x32xf32>, vector<16x16xf32> -> vector<16x16xf32>
    %cst_55 = arith.constant 0.176776692 : f32
    %168 = vector.broadcast %cst_55 : f32 to vector<16x16xf32>
    %169 = arith.mulf %167, %168 : vector<16x16xf32>
    %170 = arith.addf %169, %2 : vector<16x16xf32>
    %cst_56 = arith.constant dense<0xFF800000> : vector<16xf32>
    %171 = vector.multi_reduction <maximumf>, %170, %cst_56 [1] : vector<16x16xf32> to vector<16xf32>
    %172 = vector.shape_cast %171 : vector<16xf32> to vector<16x1xf32>
    %173 = vector.broadcast %172 : vector<16x1xf32> to vector<16x16xf32>
    %174 = arith.subf %170, %173 : vector<16x16xf32>
    %175 = math.exp %174 : vector<16x16xf32>
    %cst_57 = arith.constant dense<0.000000e+00> : vector<16xf32>
    %176 = vector.multi_reduction <add>, %175, %cst_57 [1] : vector<16x16xf32> to vector<16xf32>
    %177 = vector.shape_cast %176 : vector<16xf32> to vector<16x1xf32>
    %178 = tpu.reciprocal %177 {approx = true} : vector<16x1xf32> -> vector<16x1xf32>
    %179 = vector.broadcast %178 : vector<16x1xf32> to vector<16x16xf32>
    %180 = arith.mulf %175, %179 : vector<16x16xf32>
    %cst_58 = arith.constant dense<0.000000e+00> : vector<16x32xf32>
    %181 = tpu.matmul %180, %166, %cst_58 {dimension_numbers = #tpu.dot_dimension_numbers<[1], [0], [0], [1], [0, 0, 1, 1], [], []>} : vector<16x16xf32>, vector<16x32xf32>, vector<16x32xf32> -> vector<16x32xf32>
    %182 = vector.extract_strided_slice %120 {offsets = [64, 0], sizes = [32, 128], strides = [1, 1]} : vector<128x128xf32> to vector<32x128xf32>
    %cst_59 = arith.constant dense<0.000000e+00> : vector<16x128xf32>
    %183 = tpu.matmul %181, %182, %cst_59 {dimension_numbers = #tpu.dot_dimension_numbers<[1], [0], [0], [1], [0, 0, 1, 1], [], []>} : vector<16x32xf32>, vector<32x128xf32>, vector<16x128xf32> -> vector<16x128xf32>
    %184 = arith.addf %163, %183 : vector<16x128xf32>
    %185 = vector.extract_strided_slice %112 {offsets = [0, 96], sizes = [16, 32], strides = [1, 1]} : vector<16x128xf32> to vector<16x32xf32>
    %186 = vector.extract_strided_slice %115 {offsets = [0, 96], sizes = [16, 32], strides = [1, 1]} : vector<16x128xf32> to vector<16x32xf32>
    %187 = vector.extract_strided_slice %118 {offsets = [0, 96], sizes = [16, 32], strides = [1, 1]} : vector<16x128xf32> to vector<16x32xf32>
    %cst_60 = arith.constant dense<0.000000e+00> : vector<16x16xf32>
    %188 = tpu.matmul %185, %186, %cst_60 {dimension_numbers = #tpu.dot_dimension_numbers<[1], [1], [0], [0], [0, 0, 1, 0], [], []>} : vector<16x32xf32>, vector<16x32xf32>, vector<16x16xf32> -> vector<16x16xf32>
    %cst_61 = arith.constant 0.176776692 : f32
    %189 = vector.broadcast %cst_61 : f32 to vector<16x16xf32>
    %190 = arith.mulf %188, %189 : vector<16x16xf32>
    %191 = arith.addf %190, %2 : vector<16x16xf32>
    %cst_62 = arith.constant dense<0xFF800000> : vector<16xf32>
    %192 = vector.multi_reduction <maximumf>, %191, %cst_62 [1] : vector<16x16xf32> to vector<16xf32>
    %193 = vector.shape_cast %192 : vector<16xf32> to vector<16x1xf32>
    %194 = vector.broadcast %193 : vector<16x1xf32> to vector<16x16xf32>
    %195 = arith.subf %191, %194 : vector<16x16xf32>
    %196 = math.exp %195 : vector<16x16xf32>
    %cst_63 = arith.constant dense<0.000000e+00> : vector<16xf32>
    %197 = vector.multi_reduction <add>, %196, %cst_63 [1] : vector<16x16xf32> to vector<16xf32>
    %198 = vector.shape_cast %197 : vector<16xf32> to vector<16x1xf32>
    %199 = tpu.reciprocal %198 {approx = true} : vector<16x1xf32> -> vector<16x1xf32>
    %200 = vector.broadcast %199 : vector<16x1xf32> to vector<16x16xf32>
    %201 = arith.mulf %196, %200 : vector<16x16xf32>
    %cst_64 = arith.constant dense<0.000000e+00> : vector<16x32xf32>
    %202 = tpu.matmul %201, %187, %cst_64 {dimension_numbers = #tpu.dot_dimension_numbers<[1], [0], [0], [1], [0, 0, 1, 1], [], []>} : vector<16x16xf32>, vector<16x32xf32>, vector<16x32xf32> -> vector<16x32xf32>
    %203 = vector.extract_strided_slice %120 {offsets = [96, 0], sizes = [32, 128], strides = [1, 1]} : vector<128x128xf32> to vector<32x128xf32>
    %cst_65 = arith.constant dense<0.000000e+00> : vector<16x128xf32>
    %204 = tpu.matmul %202, %203, %cst_65 {dimension_numbers = #tpu.dot_dimension_numbers<[1], [0], [0], [1], [0, 0, 1, 1], [], []>} : vector<16x32xf32>, vector<32x128xf32>, vector<16x128xf32> -> vector<16x128xf32>
    %205 = arith.addf %184, %204 : vector<16x128xf32>
    %206 = arith.mulf %63, %205 : vector<16x128xf32>
    %c0_66 = arith.constant 0 : index
    %c0_67 = arith.constant 0 : index
    %c0_68 = arith.constant 0 : index
    %207 = vector.load %arg14[%c0_66, %c0_67, %c0_68] : memref<2x1x128xf32, #tpu.memory_space<vmem>>, vector<1x1x128xf32>
    %208 = vector.shape_cast %207 : vector<1x1x128xf32> to vector<1x128xf32>
    %c0_69 = arith.constant 0 : index
    %c0_70 = arith.constant 0 : index
    %c0_71 = arith.constant 0 : index
    %209 = vector.load %arg15[%c0_69, %c0_70, %c0_71] : memref<2x1x128xf32, #tpu.memory_space<vmem>>, vector<1x1x128xf32>
    %210 = vector.shape_cast %209 : vector<1x1x128xf32> to vector<1x128xf32>
    %cst_72 = arith.constant dense<0.000000e+00> : vector<16xf32>
    %211 = vector.multi_reduction <add>, %206, %cst_72 [1] : vector<16x128xf32> to vector<16xf32>
    %212 = vector.shape_cast %211 : vector<16xf32> to vector<16x1xf32>
    %cst_73 = arith.constant 1.280000e+02 : f32
    %213 = vector.broadcast %cst_73 : f32 to vector<16x1xf32>
    %214 = arith.divf %212, %213 : vector<16x1xf32>
    %215 = vector.broadcast %214 : vector<16x1xf32> to vector<16x128xf32>
    %216 = arith.subf %206, %215 : vector<16x128xf32>
    %217 = arith.mulf %216, %216 : vector<16x128xf32>
    %cst_74 = arith.constant dense<0.000000e+00> : vector<16xf32>
    %218 = vector.multi_reduction <add>, %217, %cst_74 [1] : vector<16x128xf32> to vector<16xf32>
    %219 = vector.shape_cast %218 : vector<16xf32> to vector<16x1xf32>
    %cst_75 = arith.constant 1.280000e+02 : f32
    %220 = vector.broadcast %cst_75 : f32 to vector<16x1xf32>
    %221 = arith.divf %219, %220 : vector<16x1xf32>
    %222 = vector.broadcast %214 : vector<16x1xf32> to vector<16x128xf32>
    %223 = arith.subf %206, %222 : vector<16x128xf32>
    %cst_76 = arith.constant 9.99999997E-7 : f32
    %224 = vector.broadcast %cst_76 : f32 to vector<16x1xf32>
    %225 = arith.addf %221, %224 : vector<16x1xf32>
    %226 = math.rsqrt %225 : vector<16x1xf32>
    %227 = vector.broadcast %226 : vector<16x1xf32> to vector<16x128xf32>
    %228 = arith.mulf %223, %227 : vector<16x128xf32>
    %229 = vector.broadcast %208 : vector<1x128xf32> to vector<16x128xf32>
    %230 = arith.mulf %228, %229 : vector<16x128xf32>
    %231 = vector.broadcast %210 : vector<1x128xf32> to vector<16x128xf32>
    %232 = arith.addf %230, %231 : vector<16x128xf32>
    %233 = arith.addf %26, %232 : vector<16x128xf32>
    %cst_77 = arith.constant dense<0.000000e+00> : vector<16xf32>
    %234 = vector.multi_reduction <add>, %233, %cst_77 [1] : vector<16x128xf32> to vector<16xf32>
    %235 = vector.shape_cast %234 : vector<16xf32> to vector<16x1xf32>
    %cst_78 = arith.constant 1.280000e+02 : f32
    %236 = vector.broadcast %cst_78 : f32 to vector<16x1xf32>
    %237 = arith.divf %235, %236 : vector<16x1xf32>
    %238 = vector.broadcast %237 : vector<16x1xf32> to vector<16x128xf32>
    %239 = arith.subf %233, %238 : vector<16x128xf32>
    %240 = arith.mulf %239, %239 : vector<16x128xf32>
    %cst_79 = arith.constant dense<0.000000e+00> : vector<16xf32>
    %241 = vector.multi_reduction <add>, %240, %cst_79 [1] : vector<16x128xf32> to vector<16xf32>
    %242 = vector.shape_cast %241 : vector<16xf32> to vector<16x1xf32>
    %cst_80 = arith.constant 1.280000e+02 : f32
    %243 = vector.broadcast %cst_80 : f32 to vector<16x1xf32>
    %244 = arith.divf %242, %243 : vector<16x1xf32>
    %245 = vector.broadcast %237 : vector<16x1xf32> to vector<16x128xf32>
    %246 = arith.subf %233, %245 : vector<16x128xf32>
    %cst_81 = arith.constant 9.99999997E-7 : f32
    %247 = vector.broadcast %cst_81 : f32 to vector<16x1xf32>
    %248 = arith.addf %244, %247 : vector<16x1xf32>
    %249 = math.rsqrt %248 : vector<16x1xf32>
    %250 = vector.broadcast %249 : vector<16x1xf32> to vector<16x128xf32>
    %251 = arith.mulf %246, %250 : vector<16x128xf32>
    %252 = arith.mulf %251, %81 : vector<16x128xf32>
    %253 = arith.addf %252, %71 : vector<16x128xf32>
    %c0_82 = arith.constant 0 : index
    %c0_83 = arith.constant 0 : index
    %c0_84 = arith.constant 0 : index
    %254 = vector.load %arg11[%c0_82, %c0_83, %c0_84] : memref<2x128x512xf32, #tpu.memory_space<vmem>>, vector<1x128x512xf32>
    %255 = vector.shape_cast %254 : vector<1x128x512xf32> to vector<128x512xf32>
    %cst_85 = arith.constant dense<0.000000e+00> : vector<16x512xf32>
    %256 = tpu.matmul %253, %255, %cst_85 {dimension_numbers = #tpu.dot_dimension_numbers<[1], [0], [0], [1], [0, 0, 1, 1], [], []>} : vector<16x128xf32>, vector<128x512xf32>, vector<16x512xf32> -> vector<16x512xf32>
    %c0_86 = arith.constant 0 : index
    %c0_87 = arith.constant 0 : index
    %c0_88 = arith.constant 0 : index
    %257 = vector.load %arg13[%c0_86, %c0_87, %c0_88] : memref<2x128x512xf32, #tpu.memory_space<vmem>>, vector<1x128x512xf32>
    %258 = vector.shape_cast %257 : vector<1x128x512xf32> to vector<128x512xf32>
    %cst_89 = arith.constant dense<0.000000e+00> : vector<16x512xf32>
    %259 = tpu.matmul %253, %258, %cst_89 {dimension_numbers = #tpu.dot_dimension_numbers<[1], [0], [0], [1], [0, 0, 1, 1], [], []>} : vector<16x128xf32>, vector<128x512xf32>, vector<16x512xf32> -> vector<16x512xf32>
    %260 = arith.negf %256 : vector<16x512xf32>
    %261 = math.exp %260 : vector<16x512xf32>
    %cst_90 = arith.constant 1.000000e+00 : f32
    %262 = vector.broadcast %cst_90 : f32 to vector<16x512xf32>
    %263 = arith.addf %262, %261 : vector<16x512xf32>
    %264 = arith.divf %262, %263 : vector<16x512xf32>
    %265 = arith.mulf %256, %264 : vector<16x512xf32>
    %266 = arith.mulf %265, %259 : vector<16x512xf32>
    %c0_91 = arith.constant 0 : index
    %c0_92 = arith.constant 0 : index
    %c0_93 = arith.constant 0 : index
    %267 = vector.load %arg12[%c0_91, %c0_92, %c0_93] : memref<2x512x128xf32, #tpu.memory_space<vmem>>, vector<1x512x128xf32>
    %268 = vector.shape_cast %267 : vector<1x512x128xf32> to vector<512x128xf32>
    %cst_94 = arith.constant dense<0.000000e+00> : vector<16x128xf32>
    %269 = tpu.matmul %266, %268, %cst_94 {dimension_numbers = #tpu.dot_dimension_numbers<[1], [0], [0], [1], [0, 0, 1, 1], [], []>} : vector<16x512xf32>, vector<512x128xf32>, vector<16x128xf32> -> vector<16x128xf32>
    %270 = arith.mulf %89, %269 : vector<16x128xf32>
    %c0_95 = arith.constant 0 : index
    %c0_96 = arith.constant 0 : index
    %c0_97 = arith.constant 0 : index
    %271 = vector.load %arg16[%c0_95, %c0_96, %c0_97] : memref<2x1x128xf32, #tpu.memory_space<vmem>>, vector<1x1x128xf32>
    %272 = vector.shape_cast %271 : vector<1x1x128xf32> to vector<1x128xf32>
    %c0_98 = arith.constant 0 : index
    %c0_99 = arith.constant 0 : index
    %c0_100 = arith.constant 0 : index
    %273 = vector.load %arg17[%c0_98, %c0_99, %c0_100] : memref<2x1x128xf32, #tpu.memory_space<vmem>>, vector<1x1x128xf32>
    %274 = vector.shape_cast %273 : vector<1x1x128xf32> to vector<1x128xf32>
    %cst_101 = arith.constant dense<0.000000e+00> : vector<16xf32>
    %275 = vector.multi_reduction <add>, %270, %cst_101 [1] : vector<16x128xf32> to vector<16xf32>
    %276 = vector.shape_cast %275 : vector<16xf32> to vector<16x1xf32>
    %cst_102 = arith.constant 1.280000e+02 : f32
    %277 = vector.broadcast %cst_102 : f32 to vector<16x1xf32>
    %278 = arith.divf %276, %277 : vector<16x1xf32>
    %279 = vector.broadcast %278 : vector<16x1xf32> to vector<16x128xf32>
    %280 = arith.subf %270, %279 : vector<16x128xf32>
    %281 = arith.mulf %280, %280 : vector<16x128xf32>
    %cst_103 = arith.constant dense<0.000000e+00> : vector<16xf32>
    %282 = vector.multi_reduction <add>, %281, %cst_103 [1] : vector<16x128xf32> to vector<16xf32>
    %283 = vector.shape_cast %282 : vector<16xf32> to vector<16x1xf32>
    %cst_104 = arith.constant 1.280000e+02 : f32
    %284 = vector.broadcast %cst_104 : f32 to vector<16x1xf32>
    %285 = arith.divf %283, %284 : vector<16x1xf32>
    %286 = vector.broadcast %278 : vector<16x1xf32> to vector<16x128xf32>
    %287 = arith.subf %270, %286 : vector<16x128xf32>
    %cst_105 = arith.constant 9.99999997E-7 : f32
    %288 = vector.broadcast %cst_105 : f32 to vector<16x1xf32>
    %289 = arith.addf %285, %288 : vector<16x1xf32>
    %290 = math.rsqrt %289 : vector<16x1xf32>
    %291 = vector.broadcast %290 : vector<16x1xf32> to vector<16x128xf32>
    %292 = arith.mulf %287, %291 : vector<16x128xf32>
    %293 = vector.broadcast %272 : vector<1x128xf32> to vector<16x128xf32>
    %294 = arith.mulf %292, %293 : vector<16x128xf32>
    %295 = vector.broadcast %274 : vector<1x128xf32> to vector<16x128xf32>
    %296 = arith.addf %294, %295 : vector<16x128xf32>
    %297 = arith.addf %233, %296 : vector<16x128xf32>
    %cst_106 = arith.constant dense<0.000000e+00> : vector<16xf32>
    %298 = vector.multi_reduction <add>, %297, %cst_106 [1] : vector<16x128xf32> to vector<16xf32>
    %299 = vector.shape_cast %298 : vector<16xf32> to vector<16x1xf32>
    %cst_107 = arith.constant 1.280000e+02 : f32
    %300 = vector.broadcast %cst_107 : f32 to vector<16x1xf32>
    %301 = arith.divf %299, %300 : vector<16x1xf32>
    %302 = vector.broadcast %301 : vector<16x1xf32> to vector<16x128xf32>
    %303 = arith.subf %297, %302 : vector<16x128xf32>
    %304 = arith.mulf %303, %303 : vector<16x128xf32>
    %cst_108 = arith.constant dense<0.000000e+00> : vector<16xf32>
    %305 = vector.multi_reduction <add>, %304, %cst_108 [1] : vector<16x128xf32> to vector<16xf32>
    %306 = vector.shape_cast %305 : vector<16xf32> to vector<16x1xf32>
    %cst_109 = arith.constant 1.280000e+02 : f32
    %307 = vector.broadcast %cst_109 : f32 to vector<16x1xf32>
    %308 = arith.divf %306, %307 : vector<16x1xf32>
    %309 = vector.broadcast %301 : vector<16x1xf32> to vector<16x128xf32>
    %310 = arith.subf %297, %309 : vector<16x128xf32>
    %cst_110 = arith.constant 9.99999997E-7 : f32
    %311 = vector.broadcast %cst_110 : f32 to vector<16x1xf32>
    %312 = arith.addf %308, %311 : vector<16x1xf32>
    %313 = math.rsqrt %312 : vector<16x1xf32>
    %314 = vector.broadcast %313 : vector<16x1xf32> to vector<16x128xf32>
    %315 = arith.mulf %310, %314 : vector<16x128xf32>
    %316 = arith.mulf %315, %55 : vector<16x128xf32>
    %317 = arith.addf %316, %45 : vector<16x128xf32>
    %c1 = arith.constant 1 : index
    %c0_111 = arith.constant 0 : index
    %c0_112 = arith.constant 0 : index
    %318 = vector.load %arg7[%c1, %c0_111, %c0_112] : memref<2x128x128xf32, #tpu.memory_space<vmem>>, vector<1x128x128xf32>
    %319 = vector.shape_cast %318 : vector<1x128x128xf32> to vector<128x128xf32>
    %cst_113 = arith.constant dense<0.000000e+00> : vector<16x128xf32>
    %320 = tpu.matmul %317, %319, %cst_113 {dimension_numbers = #tpu.dot_dimension_numbers<[1], [0], [0], [1], [0, 0, 1, 1], [], []>} : vector<16x128xf32>, vector<128x128xf32>, vector<16x128xf32> -> vector<16x128xf32>
    %c1_114 = arith.constant 1 : index
    %c0_115 = arith.constant 0 : index
    %c0_116 = arith.constant 0 : index
    %321 = vector.load %arg8[%c1_114, %c0_115, %c0_116] : memref<2x128x128xf32, #tpu.memory_space<vmem>>, vector<1x128x128xf32>
    %322 = vector.shape_cast %321 : vector<1x128x128xf32> to vector<128x128xf32>
    %cst_117 = arith.constant dense<0.000000e+00> : vector<16x128xf32>
    %323 = tpu.matmul %317, %322, %cst_117 {dimension_numbers = #tpu.dot_dimension_numbers<[1], [0], [0], [1], [0, 0, 1, 1], [], []>} : vector<16x128xf32>, vector<128x128xf32>, vector<16x128xf32> -> vector<16x128xf32>
    %c1_118 = arith.constant 1 : index
    %c0_119 = arith.constant 0 : index
    %c0_120 = arith.constant 0 : index
    %324 = vector.load %arg9[%c1_118, %c0_119, %c0_120] : memref<2x128x128xf32, #tpu.memory_space<vmem>>, vector<1x128x128xf32>
    %325 = vector.shape_cast %324 : vector<1x128x128xf32> to vector<128x128xf32>
    %cst_121 = arith.constant dense<0.000000e+00> : vector<16x128xf32>
    %326 = tpu.matmul %317, %325, %cst_121 {dimension_numbers = #tpu.dot_dimension_numbers<[1], [0], [0], [1], [0, 0, 1, 1], [], []>} : vector<16x128xf32>, vector<128x128xf32>, vector<16x128xf32> -> vector<16x128xf32>
    %c1_122 = arith.constant 1 : index
    %c0_123 = arith.constant 0 : index
    %c0_124 = arith.constant 0 : index
    %327 = vector.load %arg10[%c1_122, %c0_123, %c0_124] : memref<2x128x128xf32, #tpu.memory_space<vmem>>, vector<1x128x128xf32>
    %328 = vector.shape_cast %327 : vector<1x128x128xf32> to vector<128x128xf32>
    %cst_125 = arith.constant 0.000000e+00 : f32
    %329 = vector.broadcast %cst_125 : f32 to vector<16x128xf32>
    %330 = vector.extract_strided_slice %320 {offsets = [0, 0], sizes = [16, 32], strides = [1, 1]} : vector<16x128xf32> to vector<16x32xf32>
    %331 = vector.extract_strided_slice %323 {offsets = [0, 0], sizes = [16, 32], strides = [1, 1]} : vector<16x128xf32> to vector<16x32xf32>
    %332 = vector.extract_strided_slice %326 {offsets = [0, 0], sizes = [16, 32], strides = [1, 1]} : vector<16x128xf32> to vector<16x32xf32>
    %cst_126 = arith.constant dense<0.000000e+00> : vector<16x16xf32>
    %333 = tpu.matmul %330, %331, %cst_126 {dimension_numbers = #tpu.dot_dimension_numbers<[1], [1], [0], [0], [0, 0, 1, 0], [], []>} : vector<16x32xf32>, vector<16x32xf32>, vector<16x16xf32> -> vector<16x16xf32>
    %cst_127 = arith.constant 0.176776692 : f32
    %334 = vector.broadcast %cst_127 : f32 to vector<16x16xf32>
    %335 = arith.mulf %333, %334 : vector<16x16xf32>
    %336 = arith.addf %335, %2 : vector<16x16xf32>
    %cst_128 = arith.constant dense<0xFF800000> : vector<16xf32>
    %337 = vector.multi_reduction <maximumf>, %336, %cst_128 [1] : vector<16x16xf32> to vector<16xf32>
    %338 = vector.shape_cast %337 : vector<16xf32> to vector<16x1xf32>
    %339 = vector.broadcast %338 : vector<16x1xf32> to vector<16x16xf32>
    %340 = arith.subf %336, %339 : vector<16x16xf32>
    %341 = math.exp %340 : vector<16x16xf32>
    %cst_129 = arith.constant dense<0.000000e+00> : vector<16xf32>
    %342 = vector.multi_reduction <add>, %341, %cst_129 [1] : vector<16x16xf32> to vector<16xf32>
    %343 = vector.shape_cast %342 : vector<16xf32> to vector<16x1xf32>
    %344 = tpu.reciprocal %343 {approx = true} : vector<16x1xf32> -> vector<16x1xf32>
    %345 = vector.broadcast %344 : vector<16x1xf32> to vector<16x16xf32>
    %346 = arith.mulf %341, %345 : vector<16x16xf32>
    %cst_130 = arith.constant dense<0.000000e+00> : vector<16x32xf32>
    %347 = tpu.matmul %346, %332, %cst_130 {dimension_numbers = #tpu.dot_dimension_numbers<[1], [0], [0], [1], [0, 0, 1, 1], [], []>} : vector<16x16xf32>, vector<16x32xf32>, vector<16x32xf32> -> vector<16x32xf32>
    %348 = vector.extract_strided_slice %328 {offsets = [0, 0], sizes = [32, 128], strides = [1, 1]} : vector<128x128xf32> to vector<32x128xf32>
    %cst_131 = arith.constant dense<0.000000e+00> : vector<16x128xf32>
    %349 = tpu.matmul %347, %348, %cst_131 {dimension_numbers = #tpu.dot_dimension_numbers<[1], [0], [0], [1], [0, 0, 1, 1], [], []>} : vector<16x32xf32>, vector<32x128xf32>, vector<16x128xf32> -> vector<16x128xf32>
    %350 = arith.addf %329, %349 : vector<16x128xf32>
    %351 = vector.extract_strided_slice %320 {offsets = [0, 32], sizes = [16, 32], strides = [1, 1]} : vector<16x128xf32> to vector<16x32xf32>
    %352 = vector.extract_strided_slice %323 {offsets = [0, 32], sizes = [16, 32], strides = [1, 1]} : vector<16x128xf32> to vector<16x32xf32>
    %353 = vector.extract_strided_slice %326 {offsets = [0, 32], sizes = [16, 32], strides = [1, 1]} : vector<16x128xf32> to vector<16x32xf32>
    %cst_132 = arith.constant dense<0.000000e+00> : vector<16x16xf32>
    %354 = tpu.matmul %351, %352, %cst_132 {dimension_numbers = #tpu.dot_dimension_numbers<[1], [1], [0], [0], [0, 0, 1, 0], [], []>} : vector<16x32xf32>, vector<16x32xf32>, vector<16x16xf32> -> vector<16x16xf32>
    %cst_133 = arith.constant 0.176776692 : f32
    %355 = vector.broadcast %cst_133 : f32 to vector<16x16xf32>
    %356 = arith.mulf %354, %355 : vector<16x16xf32>
    %357 = arith.addf %356, %2 : vector<16x16xf32>
    %cst_134 = arith.constant dense<0xFF800000> : vector<16xf32>
    %358 = vector.multi_reduction <maximumf>, %357, %cst_134 [1] : vector<16x16xf32> to vector<16xf32>
    %359 = vector.shape_cast %358 : vector<16xf32> to vector<16x1xf32>
    %360 = vector.broadcast %359 : vector<16x1xf32> to vector<16x16xf32>
    %361 = arith.subf %357, %360 : vector<16x16xf32>
    %362 = math.exp %361 : vector<16x16xf32>
    %cst_135 = arith.constant dense<0.000000e+00> : vector<16xf32>
    %363 = vector.multi_reduction <add>, %362, %cst_135 [1] : vector<16x16xf32> to vector<16xf32>
    %364 = vector.shape_cast %363 : vector<16xf32> to vector<16x1xf32>
    %365 = tpu.reciprocal %364 {approx = true} : vector<16x1xf32> -> vector<16x1xf32>
    %366 = vector.broadcast %365 : vector<16x1xf32> to vector<16x16xf32>
    %367 = arith.mulf %362, %366 : vector<16x16xf32>
    %cst_136 = arith.constant dense<0.000000e+00> : vector<16x32xf32>
    %368 = tpu.matmul %367, %353, %cst_136 {dimension_numbers = #tpu.dot_dimension_numbers<[1], [0], [0], [1], [0, 0, 1, 1], [], []>} : vector<16x16xf32>, vector<16x32xf32>, vector<16x32xf32> -> vector<16x32xf32>
    %369 = vector.extract_strided_slice %328 {offsets = [32, 0], sizes = [32, 128], strides = [1, 1]} : vector<128x128xf32> to vector<32x128xf32>
    %cst_137 = arith.constant dense<0.000000e+00> : vector<16x128xf32>
    %370 = tpu.matmul %368, %369, %cst_137 {dimension_numbers = #tpu.dot_dimension_numbers<[1], [0], [0], [1], [0, 0, 1, 1], [], []>} : vector<16x32xf32>, vector<32x128xf32>, vector<16x128xf32> -> vector<16x128xf32>
    %371 = arith.addf %350, %370 : vector<16x128xf32>
    %372 = vector.extract_strided_slice %320 {offsets = [0, 64], sizes = [16, 32], strides = [1, 1]} : vector<16x128xf32> to vector<16x32xf32>
    %373 = vector.extract_strided_slice %323 {offsets = [0, 64], sizes = [16, 32], strides = [1, 1]} : vector<16x128xf32> to vector<16x32xf32>
    %374 = vector.extract_strided_slice %326 {offsets = [0, 64], sizes = [16, 32], strides = [1, 1]} : vector<16x128xf32> to vector<16x32xf32>
    %cst_138 = arith.constant dense<0.000000e+00> : vector<16x16xf32>
    %375 = tpu.matmul %372, %373, %cst_138 {dimension_numbers = #tpu.dot_dimension_numbers<[1], [1], [0], [0], [0, 0, 1, 0], [], []>} : vector<16x32xf32>, vector<16x32xf32>, vector<16x16xf32> -> vector<16x16xf32>
    %cst_139 = arith.constant 0.176776692 : f32
    %376 = vector.broadcast %cst_139 : f32 to vector<16x16xf32>
    %377 = arith.mulf %375, %376 : vector<16x16xf32>
    %378 = arith.addf %377, %2 : vector<16x16xf32>
    %cst_140 = arith.constant dense<0xFF800000> : vector<16xf32>
    %379 = vector.multi_reduction <maximumf>, %378, %cst_140 [1] : vector<16x16xf32> to vector<16xf32>
    %380 = vector.shape_cast %379 : vector<16xf32> to vector<16x1xf32>
    %381 = vector.broadcast %380 : vector<16x1xf32> to vector<16x16xf32>
    %382 = arith.subf %378, %381 : vector<16x16xf32>
    %383 = math.exp %382 : vector<16x16xf32>
    %cst_141 = arith.constant dense<0.000000e+00> : vector<16xf32>
    %384 = vector.multi_reduction <add>, %383, %cst_141 [1] : vector<16x16xf32> to vector<16xf32>
    %385 = vector.shape_cast %384 : vector<16xf32> to vector<16x1xf32>
    %386 = tpu.reciprocal %385 {approx = true} : vector<16x1xf32> -> vector<16x1xf32>
    %387 = vector.broadcast %386 : vector<16x1xf32> to vector<16x16xf32>
    %388 = arith.mulf %383, %387 : vector<16x16xf32>
    %cst_142 = arith.constant dense<0.000000e+00> : vector<16x32xf32>
    %389 = tpu.matmul %388, %374, %cst_142 {dimension_numbers = #tpu.dot_dimension_numbers<[1], [0], [0], [1], [0, 0, 1, 1], [], []>} : vector<16x16xf32>, vector<16x32xf32>, vector<16x32xf32> -> vector<16x32xf32>
    %390 = vector.extract_strided_slice %328 {offsets = [64, 0], sizes = [32, 128], strides = [1, 1]} : vector<128x128xf32> to vector<32x128xf32>
    %cst_143 = arith.constant dense<0.000000e+00> : vector<16x128xf32>
    %391 = tpu.matmul %389, %390, %cst_143 {dimension_numbers = #tpu.dot_dimension_numbers<[1], [0], [0], [1], [0, 0, 1, 1], [], []>} : vector<16x32xf32>, vector<32x128xf32>, vector<16x128xf32> -> vector<16x128xf32>
    %392 = arith.addf %371, %391 : vector<16x128xf32>
    %393 = vector.extract_strided_slice %320 {offsets = [0, 96], sizes = [16, 32], strides = [1, 1]} : vector<16x128xf32> to vector<16x32xf32>
    %394 = vector.extract_strided_slice %323 {offsets = [0, 96], sizes = [16, 32], strides = [1, 1]} : vector<16x128xf32> to vector<16x32xf32>
    %395 = vector.extract_strided_slice %326 {offsets = [0, 96], sizes = [16, 32], strides = [1, 1]} : vector<16x128xf32> to vector<16x32xf32>
    %cst_144 = arith.constant dense<0.000000e+00> : vector<16x16xf32>
    %396 = tpu.matmul %393, %394, %cst_144 {dimension_numbers = #tpu.dot_dimension_numbers<[1], [1], [0], [0], [0, 0, 1, 0], [], []>} : vector<16x32xf32>, vector<16x32xf32>, vector<16x16xf32> -> vector<16x16xf32>
    %cst_145 = arith.constant 0.176776692 : f32
    %397 = vector.broadcast %cst_145 : f32 to vector<16x16xf32>
    %398 = arith.mulf %396, %397 : vector<16x16xf32>
    %399 = arith.addf %398, %2 : vector<16x16xf32>
    %cst_146 = arith.constant dense<0xFF800000> : vector<16xf32>
    %400 = vector.multi_reduction <maximumf>, %399, %cst_146 [1] : vector<16x16xf32> to vector<16xf32>
    %401 = vector.shape_cast %400 : vector<16xf32> to vector<16x1xf32>
    %402 = vector.broadcast %401 : vector<16x1xf32> to vector<16x16xf32>
    %403 = arith.subf %399, %402 : vector<16x16xf32>
    %404 = math.exp %403 : vector<16x16xf32>
    %cst_147 = arith.constant dense<0.000000e+00> : vector<16xf32>
    %405 = vector.multi_reduction <add>, %404, %cst_147 [1] : vector<16x16xf32> to vector<16xf32>
    %406 = vector.shape_cast %405 : vector<16xf32> to vector<16x1xf32>
    %407 = tpu.reciprocal %406 {approx = true} : vector<16x1xf32> -> vector<16x1xf32>
    %408 = vector.broadcast %407 : vector<16x1xf32> to vector<16x16xf32>
    %409 = arith.mulf %404, %408 : vector<16x16xf32>
    %cst_148 = arith.constant dense<0.000000e+00> : vector<16x32xf32>
    %410 = tpu.matmul %409, %395, %cst_148 {dimension_numbers = #tpu.dot_dimension_numbers<[1], [0], [0], [1], [0, 0, 1, 1], [], []>} : vector<16x16xf32>, vector<16x32xf32>, vector<16x32xf32> -> vector<16x32xf32>
    %411 = vector.extract_strided_slice %328 {offsets = [96, 0], sizes = [32, 128], strides = [1, 1]} : vector<128x128xf32> to vector<32x128xf32>
    %cst_149 = arith.constant dense<0.000000e+00> : vector<16x128xf32>
    %412 = tpu.matmul %410, %411, %cst_149 {dimension_numbers = #tpu.dot_dimension_numbers<[1], [0], [0], [1], [0, 0, 1, 1], [], []>} : vector<16x32xf32>, vector<32x128xf32>, vector<16x128xf32> -> vector<16x128xf32>
    %413 = arith.addf %392, %412 : vector<16x128xf32>
    %414 = arith.mulf %63, %413 : vector<16x128xf32>
    %c1_150 = arith.constant 1 : index
    %c0_151 = arith.constant 0 : index
    %c0_152 = arith.constant 0 : index
    %415 = vector.load %arg14[%c1_150, %c0_151, %c0_152] : memref<2x1x128xf32, #tpu.memory_space<vmem>>, vector<1x1x128xf32>
    %416 = vector.shape_cast %415 : vector<1x1x128xf32> to vector<1x128xf32>
    %c1_153 = arith.constant 1 : index
    %c0_154 = arith.constant 0 : index
    %c0_155 = arith.constant 0 : index
    %417 = vector.load %arg15[%c1_153, %c0_154, %c0_155] : memref<2x1x128xf32, #tpu.memory_space<vmem>>, vector<1x1x128xf32>
    %418 = vector.shape_cast %417 : vector<1x1x128xf32> to vector<1x128xf32>
    %cst_156 = arith.constant dense<0.000000e+00> : vector<16xf32>
    %419 = vector.multi_reduction <add>, %414, %cst_156 [1] : vector<16x128xf32> to vector<16xf32>
    %420 = vector.shape_cast %419 : vector<16xf32> to vector<16x1xf32>
    %cst_157 = arith.constant 1.280000e+02 : f32
    %421 = vector.broadcast %cst_157 : f32 to vector<16x1xf32>
    %422 = arith.divf %420, %421 : vector<16x1xf32>
    %423 = vector.broadcast %422 : vector<16x1xf32> to vector<16x128xf32>
    %424 = arith.subf %414, %423 : vector<16x128xf32>
    %425 = arith.mulf %424, %424 : vector<16x128xf32>
    %cst_158 = arith.constant dense<0.000000e+00> : vector<16xf32>
    %426 = vector.multi_reduction <add>, %425, %cst_158 [1] : vector<16x128xf32> to vector<16xf32>
    %427 = vector.shape_cast %426 : vector<16xf32> to vector<16x1xf32>
    %cst_159 = arith.constant 1.280000e+02 : f32
    %428 = vector.broadcast %cst_159 : f32 to vector<16x1xf32>
    %429 = arith.divf %427, %428 : vector<16x1xf32>
    %430 = vector.broadcast %422 : vector<16x1xf32> to vector<16x128xf32>
    %431 = arith.subf %414, %430 : vector<16x128xf32>
    %cst_160 = arith.constant 9.99999997E-7 : f32
    %432 = vector.broadcast %cst_160 : f32 to vector<16x1xf32>
    %433 = arith.addf %429, %432 : vector<16x1xf32>
    %434 = math.rsqrt %433 : vector<16x1xf32>
    %435 = vector.broadcast %434 : vector<16x1xf32> to vector<16x128xf32>
    %436 = arith.mulf %431, %435 : vector<16x128xf32>
    %437 = vector.broadcast %416 : vector<1x128xf32> to vector<16x128xf32>
    %438 = arith.mulf %436, %437 : vector<16x128xf32>
    %439 = vector.broadcast %418 : vector<1x128xf32> to vector<16x128xf32>
    %440 = arith.addf %438, %439 : vector<16x128xf32>
    %441 = arith.addf %297, %440 : vector<16x128xf32>
    %cst_161 = arith.constant dense<0.000000e+00> : vector<16xf32>
    %442 = vector.multi_reduction <add>, %441, %cst_161 [1] : vector<16x128xf32> to vector<16xf32>
    %443 = vector.shape_cast %442 : vector<16xf32> to vector<16x1xf32>
    %cst_162 = arith.constant 1.280000e+02 : f32
    %444 = vector.broadcast %cst_162 : f32 to vector<16x1xf32>
    %445 = arith.divf %443, %444 : vector<16x1xf32>
    %446 = vector.broadcast %445 : vector<16x1xf32> to vector<16x128xf32>
    %447 = arith.subf %441, %446 : vector<16x128xf32>
    %448 = arith.mulf %447, %447 : vector<16x128xf32>
    %cst_163 = arith.constant dense<0.000000e+00> : vector<16xf32>
    %449 = vector.multi_reduction <add>, %448, %cst_163 [1] : vector<16x128xf32> to vector<16xf32>
    %450 = vector.shape_cast %449 : vector<16xf32> to vector<16x1xf32>
    %cst_164 = arith.constant 1.280000e+02 : f32
    %451 = vector.broadcast %cst_164 : f32 to vector<16x1xf32>
    %452 = arith.divf %450, %451 : vector<16x1xf32>
    %453 = vector.broadcast %445 : vector<16x1xf32> to vector<16x128xf32>
    %454 = arith.subf %441, %453 : vector<16x128xf32>
    %cst_165 = arith.constant 9.99999997E-7 : f32
    %455 = vector.broadcast %cst_165 : f32 to vector<16x1xf32>
    %456 = arith.addf %452, %455 : vector<16x1xf32>
    %457 = math.rsqrt %456 : vector<16x1xf32>
    %458 = vector.broadcast %457 : vector<16x1xf32> to vector<16x128xf32>
    %459 = arith.mulf %454, %458 : vector<16x128xf32>
    %460 = arith.mulf %459, %81 : vector<16x128xf32>
    %461 = arith.addf %460, %71 : vector<16x128xf32>
    %c1_166 = arith.constant 1 : index
    %c0_167 = arith.constant 0 : index
    %c0_168 = arith.constant 0 : index
    %462 = vector.load %arg11[%c1_166, %c0_167, %c0_168] : memref<2x128x512xf32, #tpu.memory_space<vmem>>, vector<1x128x512xf32>
    %463 = vector.shape_cast %462 : vector<1x128x512xf32> to vector<128x512xf32>
    %cst_169 = arith.constant dense<0.000000e+00> : vector<16x512xf32>
    %464 = tpu.matmul %461, %463, %cst_169 {dimension_numbers = #tpu.dot_dimension_numbers<[1], [0], [0], [1], [0, 0, 1, 1], [], []>} : vector<16x128xf32>, vector<128x512xf32>, vector<16x512xf32> -> vector<16x512xf32>
    %c1_170 = arith.constant 1 : index
    %c0_171 = arith.constant 0 : index
    %c0_172 = arith.constant 0 : index
    %465 = vector.load %arg13[%c1_170, %c0_171, %c0_172] : memref<2x128x512xf32, #tpu.memory_space<vmem>>, vector<1x128x512xf32>
    %466 = vector.shape_cast %465 : vector<1x128x512xf32> to vector<128x512xf32>
    %cst_173 = arith.constant dense<0.000000e+00> : vector<16x512xf32>
    %467 = tpu.matmul %461, %466, %cst_173 {dimension_numbers = #tpu.dot_dimension_numbers<[1], [0], [0], [1], [0, 0, 1, 1], [], []>} : vector<16x128xf32>, vector<128x512xf32>, vector<16x512xf32> -> vector<16x512xf32>
    %468 = arith.negf %464 : vector<16x512xf32>
    %469 = math.exp %468 : vector<16x512xf32>
    %cst_174 = arith.constant 1.000000e+00 : f32
    %470 = vector.broadcast %cst_174 : f32 to vector<16x512xf32>
    %471 = arith.addf %470, %469 : vector<16x512xf32>
    %472 = arith.divf %470, %471 : vector<16x512xf32>
    %473 = arith.mulf %464, %472 : vector<16x512xf32>
    %474 = arith.mulf %473, %467 : vector<16x512xf32>
    %c1_175 = arith.constant 1 : index
    %c0_176 = arith.constant 0 : index
    %c0_177 = arith.constant 0 : index
    %475 = vector.load %arg12[%c1_175, %c0_176, %c0_177] : memref<2x512x128xf32, #tpu.memory_space<vmem>>, vector<1x512x128xf32>
    %476 = vector.shape_cast %475 : vector<1x512x128xf32> to vector<512x128xf32>
    %cst_178 = arith.constant dense<0.000000e+00> : vector<16x128xf32>
    %477 = tpu.matmul %474, %476, %cst_178 {dimension_numbers = #tpu.dot_dimension_numbers<[1], [0], [0], [1], [0, 0, 1, 1], [], []>} : vector<16x512xf32>, vector<512x128xf32>, vector<16x128xf32> -> vector<16x128xf32>
    %478 = arith.mulf %89, %477 : vector<16x128xf32>
    %c1_179 = arith.constant 1 : index
    %c0_180 = arith.constant 0 : index
    %c0_181 = arith.constant 0 : index
    %479 = vector.load %arg16[%c1_179, %c0_180, %c0_181] : memref<2x1x128xf32, #tpu.memory_space<vmem>>, vector<1x1x128xf32>
    %480 = vector.shape_cast %479 : vector<1x1x128xf32> to vector<1x128xf32>
    %c1_182 = arith.constant 1 : index
    %c0_183 = arith.constant 0 : index
    %c0_184 = arith.constant 0 : index
    %481 = vector.load %arg17[%c1_182, %c0_183, %c0_184] : memref<2x1x128xf32, #tpu.memory_space<vmem>>, vector<1x1x128xf32>
    %482 = vector.shape_cast %481 : vector<1x1x128xf32> to vector<1x128xf32>
    %cst_185 = arith.constant dense<0.000000e+00> : vector<16xf32>
    %483 = vector.multi_reduction <add>, %478, %cst_185 [1] : vector<16x128xf32> to vector<16xf32>
    %484 = vector.shape_cast %483 : vector<16xf32> to vector<16x1xf32>
    %cst_186 = arith.constant 1.280000e+02 : f32
    %485 = vector.broadcast %cst_186 : f32 to vector<16x1xf32>
    %486 = arith.divf %484, %485 : vector<16x1xf32>
    %487 = vector.broadcast %486 : vector<16x1xf32> to vector<16x128xf32>
    %488 = arith.subf %478, %487 : vector<16x128xf32>
    %489 = arith.mulf %488, %488 : vector<16x128xf32>
    %cst_187 = arith.constant dense<0.000000e+00> : vector<16xf32>
    %490 = vector.multi_reduction <add>, %489, %cst_187 [1] : vector<16x128xf32> to vector<16xf32>
    %491 = vector.shape_cast %490 : vector<16xf32> to vector<16x1xf32>
    %cst_188 = arith.constant 1.280000e+02 : f32
    %492 = vector.broadcast %cst_188 : f32 to vector<16x1xf32>
    %493 = arith.divf %491, %492 : vector<16x1xf32>
    %494 = vector.broadcast %486 : vector<16x1xf32> to vector<16x128xf32>
    %495 = arith.subf %478, %494 : vector<16x128xf32>
    %cst_189 = arith.constant 9.99999997E-7 : f32
    %496 = vector.broadcast %cst_189 : f32 to vector<16x1xf32>
    %497 = arith.addf %493, %496 : vector<16x1xf32>
    %498 = math.rsqrt %497 : vector<16x1xf32>
    %499 = vector.broadcast %498 : vector<16x1xf32> to vector<16x128xf32>
    %500 = arith.mulf %495, %499 : vector<16x128xf32>
    %501 = vector.broadcast %480 : vector<1x128xf32> to vector<16x128xf32>
    %502 = arith.mulf %500, %501 : vector<16x128xf32>
    %503 = vector.broadcast %482 : vector<1x128xf32> to vector<16x128xf32>
    %504 = arith.addf %502, %503 : vector<16x128xf32>
    %505 = arith.addf %441, %504 : vector<16x128xf32>
    %c0_190 = arith.constant 0 : index
    %c0_191 = arith.constant 0 : index
    %506 = vector.load %arg18[%c0_190, %c0_191] : memref<128x256xf32, #tpu.memory_space<vmem>>, vector<128x256xf32>
    %cst_192 = arith.constant dense<0.000000e+00> : vector<2x256xf32>
    %507 = tpu.matmul %32, %506, %cst_192 {dimension_numbers = #tpu.dot_dimension_numbers<[1], [0], [0], [1], [0, 0, 1, 1], [], []>} : vector<2x128xf32>, vector<128x256xf32>, vector<2x256xf32> -> vector<2x256xf32>
    %c0_193 = arith.constant 0 : index
    %c0_194 = arith.constant 0 : index
    %508 = vector.load %arg19[%c0_193, %c0_194] : memref<1x256xf32, #tpu.memory_space<vmem>>, vector<1x256xf32>
    %509 = vector.broadcast %508 : vector<1x256xf32> to vector<2x256xf32>
    %510 = arith.addf %507, %509 : vector<2x256xf32>
    %511 = vector.extract_strided_slice %510 {offsets = [0, 0], sizes = [2, 128], strides = [1, 1]} : vector<2x256xf32> to vector<2x128xf32>
    %512 = vector.extract_strided_slice %511 {offsets = [0, 0], sizes = [1, 128], strides = [1, 1]} : vector<2x128xf32> to vector<1x128xf32>
    %513 = vector.shape_cast %512 : vector<1x128xf32> to vector<1x128xf32>
    %514 = vector.broadcast %513 : vector<1x128xf32> to vector<8x128xf32>
    %515 = vector.extract_strided_slice %511 {offsets = [1, 0], sizes = [1, 128], strides = [1, 1]} : vector<2x128xf32> to vector<1x128xf32>
    %516 = vector.shape_cast %515 : vector<1x128xf32> to vector<1x128xf32>
    %517 = vector.broadcast %516 : vector<1x128xf32> to vector<8x128xf32>
    %518 = tpu.concatenate %514, %517 in 0 : vector<8x128xf32>, vector<8x128xf32> -> vector<16x128xf32>
    %519 = vector.extract_strided_slice %510 {offsets = [0, 128], sizes = [2, 128], strides = [1, 1]} : vector<2x256xf32> to vector<2x128xf32>
    %cst_195 = arith.constant 1.000000e+00 : f32
    %520 = vector.broadcast %cst_195 : f32 to vector<2x128xf32>
    %521 = arith.addf %520, %519 : vector<2x128xf32>
    %522 = vector.extract_strided_slice %521 {offsets = [0, 0], sizes = [1, 128], strides = [1, 1]} : vector<2x128xf32> to vector<1x128xf32>
    %523 = vector.shape_cast %522 : vector<1x128xf32> to vector<1x128xf32>
    %524 = vector.broadcast %523 : vector<1x128xf32> to vector<8x128xf32>
    %525 = vector.extract_strided_slice %521 {offsets = [1, 0], sizes = [1, 128], strides = [1, 1]} : vector<2x128xf32> to vector<1x128xf32>
    %526 = vector.shape_cast %525 : vector<1x128xf32> to vector<1x128xf32>
    %527 = vector.broadcast %526 : vector<1x128xf32> to vector<8x128xf32>
    %528 = tpu.concatenate %524, %527 in 0 : vector<8x128xf32>, vector<8x128xf32> -> vector<16x128xf32>
    %cst_196 = arith.constant dense<0.000000e+00> : vector<16xf32>
    %529 = vector.multi_reduction <add>, %505, %cst_196 [1] : vector<16x128xf32> to vector<16xf32>
    %530 = vector.shape_cast %529 : vector<16xf32> to vector<16x1xf32>
    %cst_197 = arith.constant 1.280000e+02 : f32
    %531 = vector.broadcast %cst_197 : f32 to vector<16x1xf32>
    %532 = arith.divf %530, %531 : vector<16x1xf32>
    %533 = vector.broadcast %532 : vector<16x1xf32> to vector<16x128xf32>
    %534 = arith.subf %505, %533 : vector<16x128xf32>
    %535 = arith.mulf %534, %534 : vector<16x128xf32>
    %cst_198 = arith.constant dense<0.000000e+00> : vector<16xf32>
    %536 = vector.multi_reduction <add>, %535, %cst_198 [1] : vector<16x128xf32> to vector<16xf32>
    %537 = vector.shape_cast %536 : vector<16xf32> to vector<16x1xf32>
    %cst_199 = arith.constant 1.280000e+02 : f32
    %538 = vector.broadcast %cst_199 : f32 to vector<16x1xf32>
    %539 = arith.divf %537, %538 : vector<16x1xf32>
    %540 = vector.broadcast %532 : vector<16x1xf32> to vector<16x128xf32>
    %541 = arith.subf %505, %540 : vector<16x128xf32>
    %cst_200 = arith.constant 9.99999974E-6 : f32
    %542 = vector.broadcast %cst_200 : f32 to vector<16x1xf32>
    %543 = arith.addf %539, %542 : vector<16x1xf32>
    %544 = math.rsqrt %543 : vector<16x1xf32>
    %545 = vector.broadcast %544 : vector<16x1xf32> to vector<16x128xf32>
    %546 = arith.mulf %541, %545 : vector<16x128xf32>
    %547 = arith.mulf %546, %528 : vector<16x128xf32>
    %548 = arith.addf %547, %518 : vector<16x128xf32>
    %c0_201 = arith.constant 0 : index
    %c0_202 = arith.constant 0 : index
    %549 = vector.load %arg20[%c0_201, %c0_202] : memref<128x256xf32, #tpu.memory_space<vmem>>, vector<128x256xf32>
    %cst_203 = arith.constant dense<0.000000e+00> : vector<16x256xf32>
    %550 = tpu.matmul %548, %549, %cst_203 {dimension_numbers = #tpu.dot_dimension_numbers<[1], [0], [0], [1], [0, 0, 1, 1], [], []>} : vector<16x128xf32>, vector<128x256xf32>, vector<16x256xf32> -> vector<16x256xf32>
    %c0_204 = arith.constant 0 : index
    %c0_205 = arith.constant 0 : index
    %551 = vector.load %arg21[%c0_204, %c0_205] : memref<1x256xf32, #tpu.memory_space<vmem>>, vector<1x256xf32>
    %552 = vector.broadcast %551 : vector<1x256xf32> to vector<16x256xf32>
    %553 = arith.addf %550, %552 : vector<16x256xf32>
    %c0_206 = arith.constant 0 : index
    %c0_207 = arith.constant 0 : index
    %554 = vector.load %arg22[%c0_206, %c0_207] : memref<16x256xf32, #tpu.memory_space<vmem>>, vector<16x256xf32>
    tpu.vector_store %arg22[%c0_206, %c0_207], %553 {strides = array<i32>} : memref<16x256xf32, #tpu.memory_space<vmem>>, vector<16x256xf32>,
    return
  }
}

</mosaic_0001>

<llo_original>
// kernel: tpu_custom_call.1
$region0: #{tpu_custom_call.1}
  #allocation0 [shape = 'u32[]', space=smem, size = 0x4, offset = 0x4, fixed_abs, tag = 'smem constant byte address 0x4 - core index']
  #allocation1 [shape = 'u32[72,128]{1,0:T(1,128)}', space=vmem, size = 0x9000, scoped, tag = 'internal scratch']
  %s0 = inlined_call_operand.hbm [shape: f32[16,128], index: 0, kind: input, shape index: {}]
  %s1 = inlined_call_operand.hbm [shape: f32[2,128], index: 1, kind: input, shape index: {}]
  %s2 = inlined_call_operand.hbm [shape: f32[16,16], index: 2, kind: input, shape index: {}]
  %s3 = inlined_call_operand.hbm [shape: f32[1,128], index: 3, kind: input, shape index: {}]
  %s4 = inlined_call_operand.hbm [shape: f32[1,128], index: 4, kind: input, shape index: {}]
  %s5 = inlined_call_operand.hbm [shape: f32[128,768], index: 5, kind: input, shape index: {}]
  %s6 = inlined_call_operand.hbm [shape: f32[1,768], index: 6, kind: input, shape index: {}]
  %s7 = inlined_call_operand.hbm [shape: f32[2,128,128], index: 7, kind: input, shape index: {}]
  %s8 = inlined_call_operand.hbm [shape: f32[2,128,128], index: 8, kind: input, shape index: {}]
  %s9 = inlined_call_operand.hbm [shape: f32[2,128,128], index: 9, kind: input, shape index: {}]
  %s10 = inlined_call_operand.hbm [shape: f32[2,128,128], index: 10, kind: input, shape index: {}]
  %s11 = inlined_call_operand.hbm [shape: f32[2,128,512], index: 11, kind: input, shape index: {}]
  %s12 = inlined_call_operand.hbm [shape: f32[2,512,128], index: 12, kind: input, shape index: {}]
  %s13 = inlined_call_operand.hbm [shape: f32[2,128,512], index: 13, kind: input, shape index: {}]
  %s14 = inlined_call_operand.vmem [shape: f32[2,1,128], index: 14, kind: input, shape index: {}]
  %s15 = inlined_call_operand.vmem [shape: f32[2,1,128], index: 15, kind: input, shape index: {}]
  %s16 = inlined_call_operand.vmem [shape: f32[2,1,128], index: 16, kind: input, shape index: {}]
  %s17 = inlined_call_operand.vmem [shape: f32[2,1,128], index: 17, kind: input, shape index: {}]
  %s18 = inlined_call_operand.hbm [shape: f32[128,256], index: 18, kind: input, shape index: {}]
  %s19 = inlined_call_operand.vmem [shape: f32[1,256], index: 19, kind: input, shape index: {}]
  %s20 = inlined_call_operand.hbm [shape: f32[128,256], index: 20, kind: input, shape index: {}]
  %s21 = inlined_call_operand.vmem [shape: f32[1,256], index: 21, kind: input, shape index: {}]
  %s22 = inlined_call_operand.hbm [shape: f32[16,256], index: 22, kind: output, shape index: {}]
  %s23 = sld [smem:[#allocation0]]
  $region162: #{tpu_custom_call.1} parent=0
    _
  %s25 = ssub.s32 1, %s23
  %s26 = scalar_select 0, %s25, %s23
  $region1: #{tpu_custom_call.1} parent=0
    #allocation2 [shape = 'u8[8192]{0}', space=vmem, size = 0x2000, scoped, tag = 'input window, operand 0, single buffered']
    #allocation3 [shape = 's32[1]{0}', space=sflag, size = 0x4, scoped, tag = 'scoped memory for tpu_custom_call.1']
    #allocation4 [shape = 's32[1]{0}', space=sflag, size = 0x4, scoped, tag = 'scoped memory for tpu_custom_call.1']
    #allocation5 [shape = 'u8[1024]{0}', space=vmem, size = 0x400, scoped, tag = 'input window, operand 1, single buffered']
    #allocation6 [shape = 's32[1]{0}', space=sflag, size = 0x4, scoped, tag = 'scoped memory for tpu_custom_call.1']
    #allocation7 [shape = 'u8[8192]{0}', space=vmem, size = 0x2000, scoped, tag = 'input window, operand 2, single buffered']
    #allocation8 [shape = 'u8[512]{0}', space=vmem, size = 0x400, scoped, tag = 'input window, operand 3, single buffered']
    #allocation9 [shape = 's32[1]{0}', space=sflag, size = 0x4, scoped, tag = 'scoped memory for tpu_custom_call.1']
    #allocation10 [shape = 'u8[512]{0}', space=vmem, size = 0x400, scoped, tag = 'input window, operand 4, single buffered']
    #allocation11 [shape = 'u8[393216]{0}', space=vmem, size = 0x60000, scoped, tag = 'input window, operand 5, single buffered']
    #allocation12 [shape = 's32[1]{0}', space=sflag, size = 0x4, scoped, tag = 'scoped memory for tpu_custom_call.1']
    #allocation13 [shape = 'u8[3072]{0}', space=vmem, size = 0xc00, scoped, tag = 'input window, operand 6, single buffered']
    #allocation14 [shape = 'u8[131072]{0}', space=vmem, size = 0x20000, scoped, tag = 'input window, operand 7, single buffered']
    #allocation15 [shape = 's32[1]{0}', space=sflag, size = 0x4, scoped, tag = 'scoped memory for tpu_custom_call.1']
    #allocation16 [shape = 'u8[131072]{0}', space=vmem, size = 0x20000, scoped, tag = 'input window, operand 8, single buffered']
    #allocation17 [shape = 'u8[131072]{0}', space=vmem, size = 0x20000, scoped, tag = 'input window, operand 9, single buffered']
    #allocation18 [shape = 's32[1]{0}', space=sflag, size = 0x4, scoped, tag = 'scoped memory for tpu_custom_call.1']
    #allocation19 [shape = 'u8[131072]{0}', space=vmem, size = 0x20000, scoped, tag = 'input window, operand 10, single buffered']
    #allocation20 [shape = 'u8[524288]{0}', space=vmem, size = 0x80000, scoped, tag = 'input window, operand 11, single buffered']
    #allocation21 [shape = 's32[1]{0}', space=sflag, size = 0x4, scoped, tag = 'scoped memory for tpu_custom_call.1']
    #allocation22 [shape = 'u8[524288]{0}', space=vmem, size = 0x80000, scoped, tag = 'input window, operand 12, single buffered']
    #allocation23 [shape = 'u8[524288]{0}', space=vmem, size = 0x80000, scoped, tag = 'input window, operand 13, single buffered']
    #allocation24 [shape = 's32[1]{0}', space=sflag, size = 0x4, scoped, tag = 'scoped memory for tpu_custom_call.1']
    #allocation25 [shape = 'u8[131072]{0}', space=vmem, size = 0x20000, scoped, tag = 'input window, operand 18, single buffered']
    #allocation26 [shape = 'u8[131072]{0}', space=vmem, size = 0x20000, scoped, tag = 'input window, operand 20, single buffered']
    #allocation27 [shape = 's32[1]{0}', space=sflag, size = 0x4, scoped, tag = 'scoped memory for tpu_custom_call.1']
    #allocation28 [shape = 'u8[16384]{0}', space=vmem, size = 0x4000, scoped, tag = 'output window, operand 0, single buffered']
    %27 = vsyncpa [#allocation3], 0
    %28 = vsyncpa [#allocation6], 0
    %29 = vsyncpa [#allocation9], 0
    %30 = vsyncpa [#allocation12], 0
    %31 = vsyncpa [#allocation15], 0
    %32 = vsyncpa [#allocation18], 0
    %33 = vsyncpa [#allocation21], 0
    %34 = vsyncpa [#allocation24], 0
    %35 = vsyncpa [#allocation27], 0
    %36 = vsyncpa [#allocation4], 0
    // Predicated region
    $region2: #{tpu_custom_call.1} parent=1 // pred_check
      _
    $region3: #{tpu_custom_call.1} parent=1 // pred_check_branch
      %38 = sbr.rel (0) target = $region5
    $region4: #{tpu_custom_call.1} parent=1 // pred_region
      %40 = vsyncadd [#allocation3], 0
      %s41 = sshll.u32 %s0, 4
      %s42 = int_to_ptr.hbm [resolvable:$true] %s41
      %s43 = sshll.u32 [#allocation2], 4
      %s44 = int_to_ptr.vmem [resolvable:$true] %s43
      %49 = dma.hbm_to_vmem [thread:$0]  %s42, 256, %s44, [#allocation3], 128, 128, 8
    $region5: #{tpu_custom_call.1} parent=1 // pred_fallthru
      _
    // Predicated region
    $region6: #{tpu_custom_call.1} parent=1 // pred_check
      _
    $region7: #{tpu_custom_call.1} parent=1 // pred_check_branch
      %51 = sbr.rel (0) target = $region9
    $region8: #{tpu_custom_call.1} parent=1 // pred_region
      %53 = vsyncadd [#allocation6], 0
      %s55 = sshll.u32 %s1, 4
      %s56 = int_to_ptr.hbm [resolvable:$true] %s55
      %s57 = sshll.u32 [#allocation5], 4
      %s58 = int_to_ptr.vmem [resolvable:$true] %s57
      %60 = dma.hbm_to_vmem [thread:$0]  %s56, 32, %s58, [#allocation6]
    $region9: #{tpu_custom_call.1} parent=1 // pred_fallthru
      _
    // Predicated region
    $region10: #{tpu_custom_call.1} parent=1 // pred_check
      _
    $region11: #{tpu_custom_call.1} parent=1 // pred_check_branch
      %62 = sbr.rel (0) target = $region13
    $region12: #{tpu_custom_call.1} parent=1 // pred_region
      %64 = vsyncadd [#allocation6], 0
      %s65 = sshll.u32 %s2, 4
      %s66 = int_to_ptr.hbm [resolvable:$true] %s65
      %s67 = sshll.u32 [#allocation7], 4
      %s68 = int_to_ptr.vmem [resolvable:$true] %s67
      %73 = dma.hbm_to_vmem [thread:$0]  %s66, 256, %s68, [#allocation6], 128, 128, 8
    $region13: #{tpu_custom_call.1} parent=1 // pred_fallthru
      _
    // Predicated region
    $region14: #{tpu_custom_call.1} parent=1 // pred_check
      _
    $region15: #{tpu_custom_call.1} parent=1 // pred_check_branch
      %75 = sbr.rel (0) target = $region17
    $region16: #{tpu_custom_call.1} parent=1 // pred_region
      %77 = vsyncadd [#allocation9], 0
      %s79 = sshll.u32 %s3, 4
      %s80 = int_to_ptr.hbm [resolvable:$true] %s79
      %s81 = sshll.u32 [#allocation8], 4
      %s82 = int_to_ptr.vmem [resolvable:$true] %s81
      %84 = dma.hbm_to_vmem [thread:$0]  %s80, 16, %s82, [#allocation9]
    $region17: #{tpu_custom_call.1} parent=1 // pred_fallthru
      _
    // Predicated region
    $region18: #{tpu_custom_call.1} parent=1 // pred_check
      _
    $region19: #{tpu_custom_call.1} parent=1 // pred_check_branch
      %86 = sbr.rel (0) target = $region21
    $region20: #{tpu_custom_call.1} parent=1 // pred_region
      %88 = vsyncadd [#allocation9], 0
      %s90 = sshll.u32 %s4, 4
      %s91 = int_to_ptr.hbm [resolvable:$true] %s90
      %s92 = sshll.u32 [#allocation10], 4
      %s93 = int_to_ptr.vmem [resolvable:$true] %s92
      %95 = dma.hbm_to_vmem [thread:$0]  %s91, 16, %s93, [#allocation9]
    $region21: #{tpu_custom_call.1} parent=1 // pred_fallthru
      _
    // Predicated region
    $region22: #{tpu_custom_call.1} parent=1 // pred_check
      _
    $region23: #{tpu_custom_call.1} parent=1 // pred_check_branch
      %97 = sbr.rel (0) target = $region25
    $region24: #{tpu_custom_call.1} parent=1 // pred_region
      %99 = vsyncadd [#allocation12], 0
      %s100 = sshll.u32 %s5, 4
      %s101 = int_to_ptr.hbm [resolvable:$true] %s100
      %s102 = sshll.u32 [#allocation11], 4
      %s103 = int_to_ptr.vmem [resolvable:$true] %s102
      %108 = dma.hbm_to_vmem [thread:$0]  %s101, 12288, %s103, [#allocation12], 768, 768, 48
    $region25: #{tpu_custom_call.1} parent=1 // pred_fallthru
      _
    // Predicated region
    $region26: #{tpu_custom_call.1} parent=1 // pred_check
      _
    $region27: #{tpu_custom_call.1} parent=1 // pred_check_branch
      %110 = sbr.rel (0) target = $region29
    $region28: #{tpu_custom_call.1} parent=1 // pred_region
      %112 = vsyncadd [#allocation12], 0
      %s114 = sshll.u32 %s6, 4
      %s115 = int_to_ptr.hbm [resolvable:$true] %s114
      %s116 = sshll.u32 [#allocation13], 4
      %s117 = int_to_ptr.vmem [resolvable:$true] %s116
      %119 = dma.hbm_to_vmem [thread:$0]  %s115, 96, %s117, [#allocation12]
    $region29: #{tpu_custom_call.1} parent=1 // pred_fallthru
      _
    // Predicated region
    $region30: #{tpu_custom_call.1} parent=1 // pred_check
      _
    $region31: #{tpu_custom_call.1} parent=1 // pred_check_branch
      %121 = sbr.rel (0) target = $region33
    $region32: #{tpu_custom_call.1} parent=1 // pred_region
      %123 = vsyncadd [#allocation15], 0
      %s124 = sshll.u32 %s7, 4
      %s125 = int_to_ptr.hbm [resolvable:$true] %s124
      %s126 = sshll.u32 [#allocation14], 4
      %s127 = int_to_ptr.vmem [resolvable:$true] %s126
      %132 = dma.hbm_to_vmem [thread:$0]  %s125, 4096, %s127, [#allocation15], 128, 128, 8
    $region33: #{tpu_custom_call.1} parent=1 // pred_fallthru
      _
    // Predicated region
    $region34: #{tpu_custom_call.1} parent=1 // pred_check
      _
    $region35: #{tpu_custom_call.1} parent=1 // pred_check_branch
      %134 = sbr.rel (0) target = $region37
    $region36: #{tpu_custom_call.1} parent=1 // pred_region
      %136 = vsyncadd [#allocation15], 0
      %s137 = sshll.u32 %s8, 4
      %s138 = int_to_ptr.hbm [resolvable:$true] %s137
      %s139 = sshll.u32 [#allocation16], 4
      %s140 = int_to_ptr.vmem [resolvable:$true] %s139
      %145 = dma.hbm_to_vmem [thread:$0]  %s138, 4096, %s140, [#allocation15], 128, 128, 8
    $region37: #{tpu_custom_call.1} parent=1 // pred_fallthru
      _
    // Predicated region
    $region38: #{tpu_custom_call.1} parent=1 // pred_check
      _
    $region39: #{tpu_custom_call.1} parent=1 // pred_check_branch
      %147 = sbr.rel (0) target = $region41
    $region40: #{tpu_custom_call.1} parent=1 // pred_region
      %149 = vsyncadd [#allocation18], 0
      %s150 = sshll.u32 %s9, 4
      %s151 = int_to_ptr.hbm [resolvable:$true] %s150
      %s152 = sshll.u32 [#allocation17], 4
      %s153 = int_to_ptr.vmem [resolvable:$true] %s152
      %158 = dma.hbm_to_vmem [thread:$0]  %s151, 4096, %s153, [#allocation18], 128, 128, 8
    $region41: #{tpu_custom_call.1} parent=1 // pred_fallthru
      _
    // Predicated region
    $region42: #{tpu_custom_call.1} parent=1 // pred_check
      _
    $region43: #{tpu_custom_call.1} parent=1 // pred_check_branch
      %160 = sbr.rel (0) target = $region45
    $region44: #{tpu_custom_call.1} parent=1 // pred_region
      %162 = vsyncadd [#allocation18], 0
      %s163 = sshll.u32 %s10, 4
      %s164 = int_to_ptr.hbm [resolvable:$true] %s163
      %s165 = sshll.u32 [#allocation19], 4
      %s166 = int_to_ptr.vmem [resolvable:$true] %s165
      %171 = dma.hbm_to_vmem [thread:$0]  %s164, 4096, %s166, [#allocation18], 128, 128, 8
    $region45: #{tpu_custom_call.1} parent=1 // pred_fallthru
      _
    // Predicated region
    $region46: #{tpu_custom_call.1} parent=1 // pred_check
      _
    $region47: #{tpu_custom_call.1} parent=1 // pred_check_branch
      %173 = sbr.rel (0) target = $region49
    $region48: #{tpu_custom_call.1} parent=1 // pred_region
      %175 = vsyncadd [#allocation21], 0
      %s176 = sshll.u32 %s11, 4
      %s177 = int_to_ptr.hbm [resolvable:$true] %s176
      %s178 = sshll.u32 [#allocation20], 4
      %s179 = int_to_ptr.vmem [resolvable:$true] %s178
      %184 = dma.hbm_to_vmem [thread:$0]  %s177, 16384, %s179, [#allocation21], 512, 512, 32
    $region49: #{tpu_custom_call.1} parent=1 // pred_fallthru
      _
    // Predicated region
    $region50: #{tpu_custom_call.1} parent=1 // pred_check
      _
    $region51: #{tpu_custom_call.1} parent=1 // pred_check_branch
      %186 = sbr.rel (0) target = $region53
    $region52: #{tpu_custom_call.1} parent=1 // pred_region
      %188 = vsyncadd [#allocation21], 0
      %s189 = sshll.u32 %s12, 4
      %s190 = int_to_ptr.hbm [resolvable:$true] %s189
      %s191 = sshll.u32 [#allocation22], 4
      %s192 = int_to_ptr.vmem [resolvable:$true] %s191
      %197 = dma.hbm_to_vmem [thread:$0]  %s190, 16384, %s192, [#allocation21], 128, 128, 8
    $region53: #{tpu_custom_call.1} parent=1 // pred_fallthru
      _
    // Predicated region
    $region54: #{tpu_custom_call.1} parent=1 // pred_check
      _
    $region55: #{tpu_custom_call.1} parent=1 // pred_check_branch
      %199 = sbr.rel (0) target = $region57
    $region56: #{tpu_custom_call.1} parent=1 // pred_region
      %201 = vsyncadd [#allocation24], 0
      %s202 = sshll.u32 %s13, 4
      %s203 = int_to_ptr.hbm [resolvable:$true] %s202
      %s204 = sshll.u32 [#allocation23], 4
      %s205 = int_to_ptr.vmem [resolvable:$true] %s204
      %210 = dma.hbm_to_vmem [thread:$0]  %s203, 16384, %s205, [#allocation24], 512, 512, 32
    $region57: #{tpu_custom_call.1} parent=1 // pred_fallthru
      _
    // Predicated region
    $region58: #{tpu_custom_call.1} parent=1 // pred_check
      _
    $region59: #{tpu_custom_call.1} parent=1 // pred_check_branch
      %212 = sbr.rel (0) target = $region61
    $region60: #{tpu_custom_call.1} parent=1 // pred_region
      _
    $region61: #{tpu_custom_call.1} parent=1 // pred_fallthru
      _
    // Predicated region
    $region62: #{tpu_custom_call.1} parent=1 // pred_check
      _
    $region63: #{tpu_custom_call.1} parent=1 // pred_check_branch
      %214 = sbr.rel (0) target = $region65
    $region64: #{tpu_custom_call.1} parent=1 // pred_region
      _
    $region65: #{tpu_custom_call.1} parent=1 // pred_fallthru
      _
    // Predicated region
    $region66: #{tpu_custom_call.1} parent=1 // pred_check
      _
    $region67: #{tpu_custom_call.1} parent=1 // pred_check_branch
      %216 = sbr.rel (0) target = $region69
    $region68: #{tpu_custom_call.1} parent=1 // pred_region
      _
    $region69: #{tpu_custom_call.1} parent=1 // pred_fallthru
      _
    // Predicated region
    $region70: #{tpu_custom_call.1} parent=1 // pred_check
      _
    $region71: #{tpu_custom_call.1} parent=1 // pred_check_branch
      %218 = sbr.rel (0) target = $region73
    $region72: #{tpu_custom_call.1} parent=1 // pred_region
      _
    $region73: #{tpu_custom_call.1} parent=1 // pred_fallthru
      _
    // Predicated region
    $region74: #{tpu_custom_call.1} parent=1 // pred_check
      _
    $region75: #{tpu_custom_call.1} parent=1 // pred_check_branch
      %220 = sbr.rel (0) target = $region77
    $region76: #{tpu_custom_call.1} parent=1 // pred_region
      %222 = vsyncadd [#allocation24], 0
      %s223 = sshll.u32 %s18, 4
      %s224 = int_to_ptr.hbm [resolvable:$true] %s223
      %s225 = sshll.u32 [#allocation25], 4
      %s226 = int_to_ptr.vmem [resolvable:$true] %s225
      %231 = dma.hbm_to_vmem [thread:$0]  %s224, 4096, %s226, [#allocation24], 256, 256, 16
    $region77: #{tpu_custom_call.1} parent=1 // pred_fallthru
      _
    // Predicated region
    $region78: #{tpu_custom_call.1} parent=1 // pred_check
      _
    $region79: #{tpu_custom_call.1} parent=1 // pred_check_branch
      %233 = sbr.rel (0) target = $region81
    $region80: #{tpu_custom_call.1} parent=1 // pred_region
      _
    $region81: #{tpu_custom_call.1} parent=1 // pred_fallthru
      _
    // Predicated region
    $region82: #{tpu_custom_call.1} parent=1 // pred_check
      _
    $region83: #{tpu_custom_call.1} parent=1 // pred_check_branch
      %235 = sbr.rel (0) target = $region85
    $region84: #{tpu_custom_call.1} parent=1 // pred_region
      %237 = vsyncadd [#allocation27], 0
      %s238 = sshll.u32 %s20, 4
      %s239 = int_to_ptr.hbm [resolvable:$true] %s238
      %s240 = sshll.u32 [#allocation26], 4
      %s241 = int_to_ptr.vmem [resolvable:$true] %s240
      %246 = dma.hbm_to_vmem [thread:$0]  %s239, 4096, %s241, [#allocation27], 256, 256, 16
    $region85: #{tpu_custom_call.1} parent=1 // pred_fallthru
      _
    // Predicated region
    $region86: #{tpu_custom_call.1} parent=1 // pred_check
      _
    $region87: #{tpu_custom_call.1} parent=1 // pred_check_branch
      %248 = sbr.rel (0) target = $region89
    $region88: #{tpu_custom_call.1} parent=1 // pred_region
      _
    $region89: #{tpu_custom_call.1} parent=1 // pred_fallthru
      _
    // Predicated region
    $region90: #{tpu_custom_call.1} parent=1 // pred_check
      _
    $region91: #{tpu_custom_call.1} parent=1 // pred_check_branch
      %250 = sbr.rel (0) target = $region93
    $region92: #{tpu_custom_call.1} parent=1 // pred_region
      %252 = dma.done [#allocation3], 256
    $region93: #{tpu_custom_call.1} parent=1 // pred_fallthru
      _
    // Predicated region
    $region94: #{tpu_custom_call.1} parent=1 // pred_check
      _
    $region95: #{tpu_custom_call.1} parent=1 // pred_check_branch
      %254 = sbr.rel (0) target = $region97
    $region96: #{tpu_custom_call.1} parent=1 // pred_region
      %256 = dma.done [#allocation6], 32
    $region97: #{tpu_custom_call.1} parent=1 // pred_fallthru
      _
    // Predicated region
    $region98: #{tpu_custom_call.1} parent=1 // pred_check
      _
    $region99: #{tpu_custom_call.1} parent=1 // pred_check_branch
      %258 = sbr.rel (0) target = $region101
    $region100: #{tpu_custom_call.1} parent=1 // pred_region
      %260 = dma.done [#allocation6], 256
    $region101: #{tpu_custom_call.1} parent=1 // pred_fallthru
      _
    // Predicated region
    $region102: #{tpu_custom_call.1} parent=1 // pred_check
      _
    $region103: #{tpu_custom_call.1} parent=1 // pred_check_branch
      %262 = sbr.rel (0) target = $region105
    $region104: #{tpu_custom_call.1} parent=1 // pred_region
      %264 = dma.done [#allocation9], 16
    $region105: #{tpu_custom_call.1} parent=1 // pred_fallthru
      _
    // Predicated region
    $region106: #{tpu_custom_call.1} parent=1 // pred_check
      _
    $region107: #{tpu_custom_call.1} parent=1 // pred_check_branch
      %266 = sbr.rel (0) target = $region109
    $region108: #{tpu_custom_call.1} parent=1 // pred_region
      %268 = dma.done [#allocation9], 16
    $region109: #{tpu_custom_call.1} parent=1 // pred_fallthru
      _
    // Predicated region
    $region110: #{tpu_custom_call.1} parent=1 // pred_check
      _
    $region111: #{tpu_custom_call.1} parent=1 // pred_check_branch
      %270 = sbr.rel (0) target = $region113
    $region112: #{tpu_custom_call.1} parent=1 // pred_region
      %272 = dma.done [#allocation12], 12288
    $region113: #{tpu_custom_call.1} parent=1 // pred_fallthru
      _
    // Predicated region
    $region114: #{tpu_custom_call.1} parent=1 // pred_check
      _
    $region115: #{tpu_custom_call.1} parent=1 // pred_check_branch
      %274 = sbr.rel (0) target = $region117
    $region116: #{tpu_custom_call.1} parent=1 // pred_region
      %276 = dma.done [#allocation12], 96
    $region117: #{tpu_custom_call.1} parent=1 // pred_fallthru
      _
    // Predicated region
    $region118: #{tpu_custom_call.1} parent=1 // pred_check
      _
    $region119: #{tpu_custom_call.1} parent=1 // pred_check_branch
      %278 = sbr.rel (0) target = $region121
    $region120: #{tpu_custom_call.1} parent=1 // pred_region
      %280 = dma.done [#allocation15], 4096
    $region121: #{tpu_custom_call.1} parent=1 // pred_fallthru
      _
    // Predicated region
    $region122: #{tpu_custom_call.1} parent=1 // pred_check
      _
    $region123: #{tpu_custom_call.1} parent=1 // pred_check_branch
      %282 = sbr.rel (0) target = $region125
    $region124: #{tpu_custom_call.1} parent=1 // pred_region
      %284 = dma.done [#allocation15], 4096
    $region125: #{tpu_custom_call.1} parent=1 // pred_fallthru
      _
    // Predicated region
    $region126: #{tpu_custom_call.1} parent=1 // pred_check
      _
    $region127: #{tpu_custom_call.1} parent=1 // pred_check_branch
      %286 = sbr.rel (0) target = $region129
    $region128: #{tpu_custom_call.1} parent=1 // pred_region
      %288 = dma.done [#allocation18], 4096
    $region129: #{tpu_custom_call.1} parent=1 // pred_fallthru
      _
    // Predicated region
    $region130: #{tpu_custom_call.1} parent=1 // pred_check
      _
    $region131: #{tpu_custom_call.1} parent=1 // pred_check_branch
      %290 = sbr.rel (0) target = $region133
    $region132: #{tpu_custom_call.1} parent=1 // pred_region
      %292 = dma.done [#allocation18], 4096
    $region133: #{tpu_custom_call.1} parent=1 // pred_fallthru
      _
    // Predicated region
    $region134: #{tpu_custom_call.1} parent=1 // pred_check
      _
    $region135: #{tpu_custom_call.1} parent=1 // pred_check_branch
      %294 = sbr.rel (0) target = $region137
    $region136: #{tpu_custom_call.1} parent=1 // pred_region
      %296 = dma.done [#allocation21], 16384
    $region137: #{tpu_custom_call.1} parent=1 // pred_fallthru
      _
    // Predicated region
    $region138: #{tpu_custom_call.1} parent=1 // pred_check
      _
    $region139: #{tpu_custom_call.1} parent=1 // pred_check_branch
      %298 = sbr.rel (0) target = $region141
    $region140: #{tpu_custom_call.1} parent=1 // pred_region
      %300 = dma.done [#allocation21], 16384
    $region141: #{tpu_custom_call.1} parent=1 // pred_fallthru
      _
    // Predicated region
    $region142: #{tpu_custom_call.1} parent=1 // pred_check
      _
    $region143: #{tpu_custom_call.1} parent=1 // pred_check_branch
      %302 = sbr.rel (0) target = $region145
    $region144: #{tpu_custom_call.1} parent=1 // pred_region
      %304 = dma.done [#allocation24], 16384
    $region145: #{tpu_custom_call.1} parent=1 // pred_fallthru
      _
    // Predicated region
    $region146: #{tpu_custom_call.1} parent=1 // pred_check
      _
    $region147: #{tpu_custom_call.1} parent=1 // pred_check_branch
      %306 = sbr.rel (0) target = $region149
    $region148: #{tpu_custom_call.1} parent=1 // pred_region
      %308 = dma.done [#allocation24], 4096
    $region149: #{tpu_custom_call.1} parent=1 // pred_fallthru
      _
    // Predicated region
    $region150: #{tpu_custom_call.1} parent=1 // pred_check
      _
    $region151: #{tpu_custom_call.1} parent=1 // pred_check_branch
      %310 = sbr.rel (0) target = $region153
    $region152: #{tpu_custom_call.1} parent=1 // pred_region
      %312 = dma.done [#allocation27], 4096
    $region153: #{tpu_custom_call.1} parent=1 // pred_fallthru
      _
    %v313 = vld [vmem:[#allocation2] sm:$0xff]
    %v314 = vld [vmem:[#allocation2 + $0x8] sm:$0xff]
    %v315 = vld [vmem:[#allocation5] sm:$0x3]
    %v316 = vld [vmem:[#allocation7] sm:$0xff]
    %v317 = vld [vmem:[#allocation7 + $0x8] sm:$0xff]
    %v318 = vld [vmem:[#allocation8] sm:$0x1]
    %v319 = vld [vmem:[#allocation10] sm:$0x1]
    %320 = vadd.xlane.f32.xlu0 %v313
    %v321 = vpop.xlane.xlu0 %320
    %322 = vadd.xlane.f32.xlu0 %v314
    %v323 = vpop.xlane.xlu0 %322
    %v324 = vrcp.pop 128.0
    %v325 = vmul.f32 128.0, %v324
    %v326 = vsub.f32 1.0, %v325
    %v327 = vmul.f32 %v324, %v326
    %v328 = vadd.f32 %v324, %v327
    %vm329 = vweird.f32 %v324
    %v330 = vsel %vm329, %v324, %v328
    %v331 = vmul.f32 %v321, %v330
    %v332 = vmul.f32 %v323, %v330
    %v333 = vsub.f32 %v313, %v331
    %v334 = vsub.f32 %v314, %v332
    %v335 = vmul.f32 %v333, %v333
    %v336 = vmul.f32 %v334, %v334
    %337 = vadd.xlane.f32.xlu0 %v335
    %v338 = vpop.xlane.xlu0 %337
    %339 = vadd.xlane.f32.xlu0 %v336
    %v340 = vpop.xlane.xlu0 %339
    %v341 = vmul.f32 %v338, %v330
    %v342 = vmul.f32 %v340, %v330
    %v343 = vadd.f32 %v341, 1e-06
    %v344 = vadd.f32 %v342, 1e-06
    %v345 = vrsqrt.pop %v343
    %v346 = vmul.f32 %v345, %v343
    %v347 = vmul.f32 %v346, %v345
    %v348 = vmul.f32 0.5, %v347
    %v349 = vsub.f32 1.5, %v348
    %v350 = vmul.f32 %v345, %v349
    %vm351 = vweird.f32 %v343
    %vm352 = vweird.f32 %v345
    %vm353 = vmor %vm351, %vm352
    %v354 = vsel %vm353, %v345, %v350
    %v355 = vrsqrt.pop %v344
    %v356 = vmul.f32 %v355, %v344
    %v357 = vmul.f32 %v356, %v355
    %v358 = vmul.f32 0.5, %v357
    %v359 = vsub.f32 1.5, %v358
    %v360 = vmul.f32 %v355, %v359
    %vm361 = vweird.f32 %v344
    %vm362 = vweird.f32 %v355
    %vm363 = vmor %vm361, %vm362
    %v364 = vsel %vm363, %v355, %v360
    %v365 = vmul.f32 %v333, %v354
    %v366 = vmul.f32 %v334, %v364
    %v368 = vperm.slane %v318, 0
    %v370 = vmul.f32 %v365, %v368
    %v371 = vmul.f32 %v366, %v368
    %v373 = vperm.slane %v319, 0
    %v375 = vadd.f32 %v370, %v373
    %v376 = vadd.f32 %v371, %v373
    %v377 = vxor.u32 %v315, 2147483648
    %v378 = vmul.f32 %v377, 1.442695
    %v379 = vpow.pop %v378
    %v380 = vadd.f32 %v379, 1.0
    %v381 = vrcp.pop %v380
    %v382 = vmul.f32 %v380, %v381
    %v383 = vsub.f32 1.0, %v382
    %v384 = vmul.f32 %v381, %v383
    %v385 = vadd.f32 %v381, %v384
    %vm386 = vweird.f32 %v380
    %vm387 = vweird.f32 %v381
    %vm388 = vmor %vm386, %vm387
    %v389 = vsel %vm388, %v381, %v385
    %v390 = vand.u32 2147483647, %v380
    %vm391 = vcmp.eq.f32.partialorder %v390, 8.507059e+37
    %v392 = vand.u32 %v380, 2147483648
    %v393 = vor.u32 1.1754944e-38, %v392
    %v394 = vsel %vm391, %v393, %v389
    %v395 = vmul.f32 1.0, %v394
    %v396 = vmul.f32 %v315, %v395
    %v397 = vld [vmem:[#allocation11] sm:$0xff]
    %v398 = vld [vmem:[#allocation11 + $0x8] sm:$0xff]
    %v399 = vld [vmem:[#allocation11 + $0x10] sm:$0xff]
    %v400 = vld [vmem:[#allocation11 + $0x18] sm:$0xff]
    %v401 = vld [vmem:[#allocation11 + $0x20] sm:$0xff]
    %v402 = vld [vmem:[#allocation11 + $0x28] sm:$0xff]
    %v403 = vld [vmem:[#allocation11 + $0x30] sm:$0xff]
    %v404 = vld [vmem:[#allocation11 + $0x38] sm:$0xff]
    %v405 = vld [vmem:[#allocation11 + $0x40] sm:$0xff]
    %v406 = vld [vmem:[#allocation11 + $0x48] sm:$0xff]
    %v407 = vld [vmem:[#allocation11 + $0x50] sm:$0xff]
    %v408 = vld [vmem:[#allocation11 + $0x58] sm:$0xff]
    %v409 = vld [vmem:[#allocation11 + $0x60] sm:$0xff]
    %v410 = vld [vmem:[#allocation11 + $0x68] sm:$0xff]
    %v411 = vld [vmem:[#allocation11 + $0x70] sm:$0xff]
    %v412 = vld [vmem:[#allocation11 + $0x78] sm:$0xff]
    %v413 = vld [vmem:[#allocation11 + $0x80] sm:$0xff]
    %v414 = vld [vmem:[#allocation11 + $0x88] sm:$0xff]
    %v415 = vld [vmem:[#allocation11 + $0x90] sm:$0xff]
    %v416 = vld [vmem:[#allocation11 + $0x98] sm:$0xff]
    %v417 = vld [vmem:[#allocation11 + $0xa0] sm:$0xff]
    %v418 = vld [vmem:[#allocation11 + $0xa8] sm:$0xff]
    %v419 = vld [vmem:[#allocation11 + $0xb0] sm:$0xff]
    %v420 = vld [vmem:[#allocation11 + $0xb8] sm:$0xff]
    %v421 = vld [vmem:[#allocation11 + $0xc0] sm:$0xff]
    %v422 = vld [vmem:[#allocation11 + $0xc8] sm:$0xff]
    %v423 = vld [vmem:[#allocation11 + $0xd0] sm:$0xff]
    %v424 = vld [vmem:[#allocation11 + $0xd8] sm:$0xff]
    %v425 = vld [vmem:[#allocation11 + $0xe0] sm:$0xff]
    %v426 = vld [vmem:[#allocation11 + $0xe8] sm:$0xff]
    %v427 = vld [vmem:[#allocation11 + $0xf0] sm:$0xff]
    %v428 = vld [vmem:[#allocation11 + $0xf8] sm:$0xff]
    %v429 = vld [vmem:[#allocation11 + $0x100] sm:$0xff]
    %v430 = vld [vmem:[#allocation11 + $0x108] sm:$0xff]
    %v431 = vld [vmem:[#allocation11 + $0x110] sm:$0xff]
    %v432 = vld [vmem:[#allocation11 + $0x118] sm:$0xff]
    %v433 = vld [vmem:[#allocation11 + $0x120] sm:$0xff]
    %v434 = vld [vmem:[#allocation11 + $0x128] sm:$0xff]
    %v435 = vld [vmem:[#allocation11 + $0x130] sm:$0xff]
    %v436 = vld [vmem:[#allocation11 + $0x138] sm:$0xff]
    %v437 = vld [vmem:[#allocation11 + $0x140] sm:$0xff]
    %v438 = vld [vmem:[#allocation11 + $0x148] sm:$0xff]
    %v439 = vld [vmem:[#allocation11 + $0x150] sm:$0xff]
    %v440 = vld [vmem:[#allocation11 + $0x158] sm:$0xff]
    %v441 = vld [vmem:[#allocation11 + $0x160] sm:$0xff]
    %v442 = vld [vmem:[#allocation11 + $0x168] sm:$0xff]
    %v443 = vld [vmem:[#allocation11 + $0x170] sm:$0xff]
    %v444 = vld [vmem:[#allocation11 + $0x178] sm:$0xff]
    %v445 = vld [vmem:[#allocation11 + $0x180] sm:$0xff]
    %v446 = vld [vmem:[#allocation11 + $0x188] sm:$0xff]
    %v447 = vld [vmem:[#allocation11 + $0x190] sm:$0xff]
    %v448 = vld [vmem:[#allocation11 + $0x198] sm:$0xff]
    %v449 = vld [vmem:[#allocation11 + $0x1a0] sm:$0xff]
    %v450 = vld [vmem:[#allocation11 + $0x1a8] sm:$0xff]
    %v451 = vld [vmem:[#allocation11 + $0x1b0] sm:$0xff]
    %v452 = vld [vmem:[#allocation11 + $0x1b8] sm:$0xff]
    %v453 = vld [vmem:[#allocation11 + $0x1c0] sm:$0xff]
    %v454 = vld [vmem:[#allocation11 + $0x1c8] sm:$0xff]
    %v455 = vld [vmem:[#allocation11 + $0x1d0] sm:$0xff]
    %v456 = vld [vmem:[#allocation11 + $0x1d8] sm:$0xff]
    %v457 = vld [vmem:[#allocation11 + $0x1e0] sm:$0xff]
    %v458 = vld [vmem:[#allocation11 + $0x1e8] sm:$0xff]
    %v459 = vld [vmem:[#allocation11 + $0x1f0] sm:$0xff]
    %v460 = vld [vmem:[#allocation11 + $0x1f8] sm:$0xff]
    %v461 = vld [vmem:[#allocation11 + $0x200] sm:$0xff]
    %v462 = vld [vmem:[#allocation11 + $0x208] sm:$0xff]
    %v463 = vld [vmem:[#allocation11 + $0x210] sm:$0xff]
    %v464 = vld [vmem:[#allocation11 + $0x218] sm:$0xff]
    %v465 = vld [vmem:[#allocation11 + $0x220] sm:$0xff]
    %v466 = vld [vmem:[#allocation11 + $0x228] sm:$0xff]
    %v467 = vld [vmem:[#allocation11 + $0x230] sm:$0xff]
    %v468 = vld [vmem:[#allocation11 + $0x238] sm:$0xff]
    %v469 = vld [vmem:[#allocation11 + $0x240] sm:$0xff]
    %v470 = vld [vmem:[#allocation11 + $0x248] sm:$0xff]
    %v471 = vld [vmem:[#allocation11 + $0x250] sm:$0xff]
    %v472 = vld [vmem:[#allocation11 + $0x258] sm:$0xff]
    %v473 = vld [vmem:[#allocation11 + $0x260] sm:$0xff]
    %v474 = vld [vmem:[#allocation11 + $0x268] sm:$0xff]
    %v475 = vld [vmem:[#allocation11 + $0x270] sm:$0xff]
    %v476 = vld [vmem:[#allocation11 + $0x278] sm:$0xff]
    %v477 = vld [vmem:[#allocation11 + $0x280] sm:$0xff]
    %v478 = vld [vmem:[#allocation11 + $0x288] sm:$0xff]
    %v479 = vld [vmem:[#allocation11 + $0x290] sm:$0xff]
    %v480 = vld [vmem:[#allocation11 + $0x298] sm:$0xff]
    %v481 = vld [vmem:[#allocation11 + $0x2a0] sm:$0xff]
    %v482 = vld [vmem:[#allocation11 + $0x2a8] sm:$0xff]
    %v483 = vld [vmem:[#allocation11 + $0x2b0] sm:$0xff]
    %v484 = vld [vmem:[#allocation11 + $0x2b8] sm:$0xff]
    %v485 = vld [vmem:[#allocation11 + $0x2c0] sm:$0xff]
    %v486 = vld [vmem:[#allocation11 + $0x2c8] sm:$0xff]
    %v487 = vld [vmem:[#allocation11 + $0x2d0] sm:$0xff]
    %v488 = vld [vmem:[#allocation11 + $0x2d8] sm:$0xff]
    %v489 = vld [vmem:[#allocation11 + $0x2e0] sm:$0xff]
    %v490 = vld [vmem:[#allocation11 + $0x2e8] sm:$0xff]
    %v491 = vld [vmem:[#allocation11 + $0x2f0] sm:$0xff]
    %v492 = vld [vmem:[#allocation11 + $0x2f8] sm:$0xff]
    %v493 = vld [vmem:[#allocation13] sm:$0x3f]
    %v495 = vperm.slane %v493, 0
    %v496 = vperm.slane %v493, 1
    %v497 = vperm.slane %v493, 2
    %v498 = vperm.slane %v493, 3
    %v499 = vperm.slane %v493, 4
    %v500 = vperm.slane %v493, 5
    %507 = vmatpush.msra.mxu0 %v487
    %508 = vmatpush.msra.mxu0 %v481
    %509 = vmatpush.msra.mxu0 %v475
    %510 = vmatpush.msra.mxu0 %v469
    %511 = vmatpush.msra.mxu0 %v463
    %512 = vmatpush.msra.mxu0 %v457
    %513 = vmatpush.msra.mxu0 %v451
    %514 = vmatpush.msra.mxu0 %v445
    %515 = vmatpush.msra.mxu0 %v439
    %516 = vmatpush.msra.mxu0 %v433
    %517 = vmatpush.msra.mxu0 %v427
    %518 = vmatpush.msra.mxu0 %v421
    %519 = vmatpush.msra.mxu0 %v415
    %520 = vmatpush.msra.mxu0 %v409
    %521 = vmatpush.msra.mxu0 %v403
    %522 = vmatpush.msra.mxu0 %v397
    %523 = vmatmul.f32.gmra.mxu0 %v396
    %v524 = vpop.f32.mrf.mxu0
    %v525 = vadd.f32 %v495, %v524
    %526 = vdwg.mxu0
    %527 = vmatpush.msra.mxu0 %v488
    %528 = vmatpush.msra.mxu0 %v482
    %529 = vmatpush.msra.mxu0 %v476
    %530 = vmatpush.msra.mxu0 %v470
    %531 = vmatpush.msra.mxu0 %v464
    %532 = vmatpush.msra.mxu0 %v458
    %533 = vmatpush.msra.mxu0 %v452
    %534 = vmatpush.msra.mxu0 %v446
    %535 = vmatpush.msra.mxu0 %v440
    %536 = vmatpush.msra.mxu0 %v434
    %537 = vmatpush.msra.mxu0 %v428
    %538 = vmatpush.msra.mxu0 %v422
    %539 = vmatpush.msra.mxu0 %v416
    %540 = vmatpush.msra.mxu0 %v410
    %541 = vmatpush.msra.mxu0 %v404
    %542 = vmatpush.msra.mxu0 %v398
    %543 = vmatmul.f32.gmra.mxu0 %v396
    %v544 = vpop.f32.mrf.mxu0
    %v545 = vadd.f32 %v496, %v544
    %546 = vdwg.mxu0
    %547 = vmatpush.msra.mxu0 %v489
    %548 = vmatpush.msra.mxu0 %v483
    %549 = vmatpush.msra.mxu0 %v477
    %550 = vmatpush.msra.mxu0 %v471
    %551 = vmatpush.msra.mxu0 %v465
    %552 = vmatpush.msra.mxu0 %v459
    %553 = vmatpush.msra.mxu0 %v453
    %554 = vmatpush.msra.mxu0 %v447
    %555 = vmatpush.msra.mxu0 %v441
    %556 = vmatpush.msra.mxu0 %v435
    %557 = vmatpush.msra.mxu0 %v429
    %558 = vmatpush.msra.mxu0 %v423
    %559 = vmatpush.msra.mxu0 %v417
    %560 = vmatpush.msra.mxu0 %v411
    %561 = vmatpush.msra.mxu0 %v405
    %562 = vmatpush.msra.mxu0 %v399
    %563 = vmatmul.f32.gmra.mxu0 %v396
    %v564 = vpop.f32.mrf.mxu0
    %v565 = vadd.f32 %v497, %v564
    %566 = vdwg.mxu0
    %567 = vmatpush.msra.mxu0 %v490
    %568 = vmatpush.msra.mxu0 %v484
    %569 = vmatpush.msra.mxu0 %v478
    %570 = vmatpush.msra.mxu0 %v472
    %571 = vmatpush.msra.mxu0 %v466
    %572 = vmatpush.msra.mxu0 %v460
    %573 = vmatpush.msra.mxu0 %v454
    %574 = vmatpush.msra.mxu0 %v448
    %575 = vmatpush.msra.mxu0 %v442
    %576 = vmatpush.msra.mxu0 %v436
    %577 = vmatpush.msra.mxu0 %v430
    %578 = vmatpush.msra.mxu0 %v424
    %579 = vmatpush.msra.mxu0 %v418
    %580 = vmatpush.msra.mxu0 %v412
    %581 = vmatpush.msra.mxu0 %v406
    %582 = vmatpush.msra.mxu0 %v400
    %583 = vmatmul.f32.gmra.mxu0 %v396
    %v584 = vpop.f32.mrf.mxu0
    %v585 = vadd.f32 %v498, %v584
    %586 = vdwg.mxu0
    %587 = vmatpush.msra.mxu0 %v491
    %588 = vmatpush.msra.mxu0 %v485
    %589 = vmatpush.msra.mxu0 %v479
    %590 = vmatpush.msra.mxu0 %v473
    %591 = vmatpush.msra.mxu0 %v467
    %592 = vmatpush.msra.mxu0 %v461
    %593 = vmatpush.msra.mxu0 %v455
    %594 = vmatpush.msra.mxu0 %v449
    %595 = vmatpush.msra.mxu0 %v443
    %596 = vmatpush.msra.mxu0 %v437
    %597 = vmatpush.msra.mxu0 %v431
    %598 = vmatpush.msra.mxu0 %v425
    %599 = vmatpush.msra.mxu0 %v419
    %600 = vmatpush.msra.mxu0 %v413
    %601 = vmatpush.msra.mxu0 %v407
    %602 = vmatpush.msra.mxu0 %v401
    %603 = vmatmul.f32.gmra.mxu0 %v396
    %v604 = vpop.f32.mrf.mxu0
    %v605 = vadd.f32 %v499, %v604
    %606 = vdwg.mxu0
    %607 = vmatpush.msra.mxu0 %v492
    %608 = vmatpush.msra.mxu0 %v486
    %609 = vmatpush.msra.mxu0 %v480
    %610 = vmatpush.msra.mxu0 %v474
    %611 = vmatpush.msra.mxu0 %v468
    %612 = vmatpush.msra.mxu0 %v462
    %613 = vmatpush.msra.mxu0 %v456
    %614 = vmatpush.msra.mxu0 %v450
    %615 = vmatpush.msra.mxu0 %v444
    %616 = vmatpush.msra.mxu0 %v438
    %617 = vmatpush.msra.mxu0 %v432
    %618 = vmatpush.msra.mxu0 %v426
    %619 = vmatpush.msra.mxu0 %v420
    %620 = vmatpush.msra.mxu0 %v414
    %621 = vmatpush.msra.mxu0 %v408
    %622 = vmatpush.msra.mxu0 %v402
    %623 = vmatmul.f32.gmra.mxu0 %v396
    %v624 = vpop.f32.mrf.mxu0
    %v625 = vadd.f32 %v500, %v624
    %626 = vdwg.mxu0
    %v627 = vperm.slane %v525, 0
    %v628 = vperm.slane %v525, 1
    %v629 = vadd.f32 %v545, 1.0
    %v630 = vperm.slane %v629, 0
    %v631 = vperm.slane %v629, 1
    %v632 = vperm.slane %v565, 0
    %v633 = vperm.slane %v565, 1
    %v634 = vperm.slane %v585, 0
    %v635 = vperm.slane %v585, 1
    %v636 = vadd.f32 %v605, 1.0
    %v637 = vperm.slane %v636, 0
    %v638 = vperm.slane %v636, 1
    %v639 = vperm.slane %v625, 0
    %v640 = vperm.slane %v625, 1
    %641 = vadd.xlane.f32.xlu0 %v375
    %v642 = vpop.xlane.xlu0 %641
    %643 = vadd.xlane.f32.xlu0 %v376
    %v644 = vpop.xlane.xlu0 %643
    %v645 = vmul.f32 %v642, %v330
    %v646 = vmul.f32 %v644, %v330
    %v647 = vsub.f32 %v375, %v645
    %v648 = vsub.f32 %v376, %v646
    %v649 = vmul.f32 %v647, %v647
    %v650 = vmul.f32 %v648, %v648
    %651 = vadd.xlane.f32.xlu0 %v649
    %v652 = vpop.xlane.xlu0 %651
    %653 = vadd.xlane.f32.xlu0 %v650
    %v654 = vpop.xlane.xlu0 %653
    %v655 = vmul.f32 %v652, %v330
    %v656 = vmul.f32 %v654, %v330
    %v657 = vadd.f32 %v655, 1e-06
    %v658 = vadd.f32 %v656, 1e-06
    %v659 = vrsqrt.pop %v657
    %v660 = vmul.f32 %v659, %v657
    %v661 = vmul.f32 %v660, %v659
    %v662 = vmul.f32 0.5, %v661
    %v663 = vsub.f32 1.5, %v662
    %v664 = vmul.f32 %v659, %v663
    %vm665 = vweird.f32 %v657
    %vm666 = vweird.f32 %v659
    %vm667 = vmor %vm665, %vm666
    %v668 = vsel %vm667, %v659, %v664
    %v669 = vrsqrt.pop %v658
    %v670 = vmul.f32 %v669, %v658
    %v671 = vmul.f32 %v670, %v669
    %v672 = vmul.f32 0.5, %v671
    %v673 = vsub.f32 1.5, %v672
    %v674 = vmul.f32 %v669, %v673
    %vm675 = vweird.f32 %v658
    %vm676 = vweird.f32 %v669
    %vm677 = vmor %vm675, %vm676
    %v678 = vsel %vm677, %v669, %v674
    %v679 = vmul.f32 %v647, %v668
    %v680 = vmul.f32 %v648, %v678
    %v681 = vmul.f32 %v679, %v630
    %v682 = vmul.f32 %v680, %v631
    %v683 = vadd.f32 %v681, %v627
    %v684 = vadd.f32 %v682, %v628
    %v685 = vld [vmem:[#allocation14] sm:$0xff]
    %v686 = vld [vmem:[#allocation14 + $0x8] sm:$0xff]
    %v687 = vld [vmem:[#allocation14 + $0x10] sm:$0xff]
    %v688 = vld [vmem:[#allocation14 + $0x18] sm:$0xff]
    %v689 = vld [vmem:[#allocation14 + $0x20] sm:$0xff]
    %v690 = vld [vmem:[#allocation14 + $0x28] sm:$0xff]
    %v691 = vld [vmem:[#allocation14 + $0x30] sm:$0xff]
    %v692 = vld [vmem:[#allocation14 + $0x38] sm:$0xff]
    %v693 = vld [vmem:[#allocation14 + $0x40] sm:$0xff]
    %v694 = vld [vmem:[#allocation14 + $0x48] sm:$0xff]
    %v695 = vld [vmem:[#allocation14 + $0x50] sm:$0xff]
    %v696 = vld [vmem:[#allocation14 + $0x58] sm:$0xff]
    %v697 = vld [vmem:[#allocation14 + $0x60] sm:$0xff]
    %v698 = vld [vmem:[#allocation14 + $0x68] sm:$0xff]
    %v699 = vld [vmem:[#allocation14 + $0x70] sm:$0xff]
    %v700 = vld [vmem:[#allocation14 + $0x78] sm:$0xff]
    %701 = vmatpush.msra.mxu0 %v700
    %702 = vmatpush.msra.mxu0 %v699
    %703 = vmatpush.msra.mxu0 %v698
    %704 = vmatpush.msra.mxu0 %v697
    %705 = vmatpush.msra.mxu0 %v696
    %706 = vmatpush.msra.mxu0 %v695
    %707 = vmatpush.msra.mxu0 %v694
    %708 = vmatpush.msra.mxu0 %v693
    %709 = vmatpush.msra.mxu0 %v692
    %710 = vmatpush.msra.mxu0 %v691
    %711 = vmatpush.msra.mxu0 %v690
    %712 = vmatpush.msra.mxu0 %v689
    %713 = vmatpush.msra.mxu0 %v688
    %714 = vmatpush.msra.mxu0 %v687
    %715 = vmatpush.msra.mxu0 %v686
    %716 = vmatpush.msra.mxu0 %v685
    %717 = vmatmul.f32.gmra.mxu0 %v683
    %v718 = vpop.f32.mrf.mxu0
    %v719 = vadd.f32 0.0, %v718
    %720 = vmatmul.f32.gmra.mxu0 %v684
    %v721 = vpop.f32.mrf.mxu0
    %v722 = vadd.f32 0.0, %v721
    %723 = vdwg.mxu0
    %v724 = vld [vmem:[#allocation16] sm:$0xff]
    %v725 = vld [vmem:[#allocation16 + $0x8] sm:$0xff]
    %v726 = vld [vmem:[#allocation16 + $0x10] sm:$0xff]
    %v727 = vld [vmem:[#allocation16 + $0x18] sm:$0xff]
    %v728 = vld [vmem:[#allocation16 + $0x20] sm:$0xff]
    %v729 = vld [vmem:[#allocation16 + $0x28] sm:$0xff]
    %v730 = vld [vmem:[#allocation16 + $0x30] sm:$0xff]
    %v731 = vld [vmem:[#allocation16 + $0x38] sm:$0xff]
    %v732 = vld [vmem:[#allocation16 + $0x40] sm:$0xff]
    %v733 = vld [vmem:[#allocation16 + $0x48] sm:$0xff]
    %v734 = vld [vmem:[#allocation16 + $0x50] sm:$0xff]
    %v735 = vld [vmem:[#allocation16 + $0x58] sm:$0xff]
    %v736 = vld [vmem:[#allocation16 + $0x60] sm:$0xff]
    %v737 = vld [vmem:[#allocation16 + $0x68] sm:$0xff]
    %v738 = vld [vmem:[#allocation16 + $0x70] sm:$0xff]
    %v739 = vld [vmem:[#allocation16 + $0x78] sm:$0xff]
    %740 = vmatpush.msra.mxu0 %v739
    %741 = vmatpush.msra.mxu0 %v738
    %742 = vmatpush.msra.mxu0 %v737
    %743 = vmatpush.msra.mxu0 %v736
    %744 = vmatpush.msra.mxu0 %v735
    %745 = vmatpush.msra.mxu0 %v734
    %746 = vmatpush.msra.mxu0 %v733
    %747 = vmatpush.msra.mxu0 %v732
    %748 = vmatpush.msra.mxu0 %v731
    %749 = vmatpush.msra.mxu0 %v730
    %750 = vmatpush.msra.mxu0 %v729
    %751 = vmatpush.msra.mxu0 %v728
    %752 = vmatpush.msra.mxu0 %v727
    %753 = vmatpush.msra.mxu0 %v726
    %754 = vmatpush.msra.mxu0 %v725
    %755 = vmatpush.msra.mxu0 %v724
    %756 = vmatmul.f32.gmra.mxu0 %v683
    %v757 = vpop.f32.mrf.mxu0
    %v758 = vadd.f32 0.0, %v757
    %759 = vmatmul.f32.gmra.mxu0 %v684
    %v760 = vpop.f32.mrf.mxu0
    %v761 = vadd.f32 0.0, %v760
    %762 = vdwg.mxu0
    %v763 = vld [vmem:[#allocation17] sm:$0xff]
    %v764 = vld [vmem:[#allocation17 + $0x8] sm:$0xff]
    %v765 = vld [vmem:[#allocation17 + $0x10] sm:$0xff]
    %v766 = vld [vmem:[#allocation17 + $0x18] sm:$0xff]
    %v767 = vld [vmem:[#allocation17 + $0x20] sm:$0xff]
    %v768 = vld [vmem:[#allocation17 + $0x28] sm:$0xff]
    %v769 = vld [vmem:[#allocation17 + $0x30] sm:$0xff]
    %v770 = vld [vmem:[#allocation17 + $0x38] sm:$0xff]
    %v771 = vld [vmem:[#allocation17 + $0x40] sm:$0xff]
    %v772 = vld [vmem:[#allocation17 + $0x48] sm:$0xff]
    %v773 = vld [vmem:[#allocation17 + $0x50] sm:$0xff]
    %v774 = vld [vmem:[#allocation17 + $0x58] sm:$0xff]
    %v775 = vld [vmem:[#allocation17 + $0x60] sm:$0xff]
    %v776 = vld [vmem:[#allocation17 + $0x68] sm:$0xff]
    %v777 = vld [vmem:[#allocation17 + $0x70] sm:$0xff]
    %v778 = vld [vmem:[#allocation17 + $0x78] sm:$0xff]
    %779 = vmatpush.msra.mxu0 %v778
    %780 = vmatpush.msra.mxu0 %v777
    %781 = vmatpush.msra.mxu0 %v776
    %782 = vmatpush.msra.mxu0 %v775
    %783 = vmatpush.msra.mxu0 %v774
    %784 = vmatpush.msra.mxu0 %v773
    %785 = vmatpush.msra.mxu0 %v772
    %786 = vmatpush.msra.mxu0 %v771
    %787 = vmatpush.msra.mxu0 %v770
    %788 = vmatpush.msra.mxu0 %v769
    %789 = vmatpush.msra.mxu0 %v768
    %790 = vmatpush.msra.mxu0 %v767
    %791 = vmatpush.msra.mxu0 %v766
    %792 = vmatpush.msra.mxu0 %v765
    %793 = vmatpush.msra.mxu0 %v764
    %794 = vmatpush.msra.mxu0 %v763
    %795 = vmatmul.f32.gmra.mxu0 %v683
    %v796 = vpop.f32.mrf.mxu0
    %v797 = vadd.f32 0.0, %v796
    %798 = vmatmul.f32.gmra.mxu0 %v684
    %v799 = vpop.f32.mrf.mxu0
    %v800 = vadd.f32 0.0, %v799
    %801 = vdwg.mxu0
    %v802 = vld [vmem:[#allocation19] sm:$0xff]
    %v803 = vld [vmem:[#allocation19 + $0x8] sm:$0xff]
    %v804 = vld [vmem:[#allocation19 + $0x10] sm:$0xff]
    %v805 = vld [vmem:[#allocation19 + $0x18] sm:$0xff]
    %v806 = vld [vmem:[#allocation19 + $0x20] sm:$0xff]
    %v807 = vld [vmem:[#allocation19 + $0x28] sm:$0xff]
    %v808 = vld [vmem:[#allocation19 + $0x30] sm:$0xff]
    %v809 = vld [vmem:[#allocation19 + $0x38] sm:$0xff]
    %v810 = vld [vmem:[#allocation19 + $0x40] sm:$0xff]
    %v811 = vld [vmem:[#allocation19 + $0x48] sm:$0xff]
    %v812 = vld [vmem:[#allocation19 + $0x50] sm:$0xff]
    %v813 = vld [vmem:[#allocation19 + $0x58] sm:$0xff]
    %v814 = vld [vmem:[#allocation19 + $0x60] sm:$0xff]
    %v815 = vld [vmem:[#allocation19 + $0x68] sm:$0xff]
    %v816 = vld [vmem:[#allocation19 + $0x70] sm:$0xff]
    %v817 = vld [vmem:[#allocation19 + $0x78] sm:$0xff]
    %vm818 = vcmask 261120
    %v820 = vsel %vm818, %v719, 0
    %v823 = vsel %vm818, %v722, 0
    %v826 = vsel %vm818, %v758, 0
    %v829 = vsel %vm818, %v761, 0
    %831 = vmatpush.xpose.msra.mxu0 0.0
    %832 = vmatpush.xpose.msra.mxu0 0.0
    %833 = vmatpush.xpose.msra.mxu0 0.0
    %834 = vmatpush.xpose.msra.mxu0 0.0
    %835 = vmatpush.xpose.msra.mxu0 0.0
    %836 = vmatpush.xpose.msra.mxu0 0.0
    %837 = vmatpush.xpose.msra.mxu0 0.0
    %838 = vmatpush.xpose.msra.mxu0 0.0
    %839 = vmatpush.xpose.msra.mxu0 0.0
    %840 = vmatpush.xpose.msra.mxu0 0.0
    %841 = vmatpush.xpose.msra.mxu0 0.0
    %842 = vmatpush.xpose.msra.mxu0 0.0
    %843 = vmatpush.xpose.msra.mxu0 0.0
    %844 = vmatpush.xpose.msra.mxu0 0.0
    %845 = vmatpush.xpose.msra.mxu0 %v829
    %846 = vmatpush.xpose.msra.mxu0 %v826
    %847 = vmatmul.f32.gmra.mxu0 %v820
    %v848 = vpop.f32.mrf.mxu0
    %v849 = vadd.f32 0.0, %v848
    %850 = vmatmul.f32.gmra.mxu0 %v823
    %v851 = vpop.f32.mrf.mxu0
    %v852 = vadd.f32 0.0, %v851
    %853 = vdwg.mxu0
    %v854 = vmul.f32 %v849, 0.17677669
    %v855 = vmul.f32 %v852, 0.17677669
    %v856 = vadd.f32 %v854, %v316
    %v857 = vadd.f32 %v855, %v317
    %vm858 = vcmask 130048
    %v859 = vsel %vm858, %v856, -inf
    %860 = vmax.xlane.f32.xlu0 %v859
    %v861 = vpop.xlane.xlu0 %860
    %v862 = vsel %vm858, %v857, -inf
    %863 = vmax.xlane.f32.xlu0 %v862
    %v864 = vpop.xlane.xlu0 %863
    %v865 = vsub.f32 %v856, %v861
    %v866 = vsub.f32 %v857, %v864
    %v867 = vmul.f32 %v865, 1.442695
    %v868 = vpow.pop %v867
    %v869 = vmul.f32 %v866, 1.442695
    %v870 = vpow.pop %v869
    %v871 = vsel %vm858, %v868, 0.0
    %872 = vadd.xlane.f32.xlu0 %v871
    %v873 = vpop.xlane.xlu0 %872
    %v874 = vsel %vm858, %v870, 0.0
    %875 = vadd.xlane.f32.xlu0 %v874
    %v876 = vpop.xlane.xlu0 %875
    %v877 = vrcp.pop %v873
    %v878 = vrcp.pop %v876
    %v879 = vmul.f32 %v868, %v877
    %v880 = vmul.f32 %v870, %v878
    %v882 = vsel %vm858, %v879, 0
    %v885 = vsel %vm858, %v880, 0
    %887 = vmatpush.msra.mxu0 0.0
    %888 = vmatpush.msra.mxu0 0.0
    %889 = vmatpush.msra.mxu0 0.0
    %890 = vmatpush.msra.mxu0 0.0
    %891 = vmatpush.msra.mxu0 0.0
    %892 = vmatpush.msra.mxu0 0.0
    %893 = vmatpush.msra.mxu0 0.0
    %894 = vmatpush.msra.mxu0 0.0
    %895 = vmatpush.msra.mxu0 0.0
    %896 = vmatpush.msra.mxu0 0.0
    %897 = vmatpush.msra.mxu0 0.0
    %898 = vmatpush.msra.mxu0 0.0
    %899 = vmatpush.msra.mxu0 0.0
    %900 = vmatpush.msra.mxu0 0.0
    %901 = vmatpush.msra.mxu0 %v800
    %902 = vmatpush.msra.mxu0 %v797
    %903 = vmatmul.f32.gmra.mxu0 %v882
    %v904 = vpop.f32.mrf.mxu0
    %v905 = vadd.f32 0.0, %v904
    %906 = vmatmul.f32.gmra.mxu0 %v885
    %v907 = vpop.f32.mrf.mxu0
    %v908 = vadd.f32 0.0, %v907
    %909 = vdwg.mxu0
    %910 = vrot.lane.b32.xlu0 %v719, 96
    %v911 = vpop.permute.xlu0 %910
    %912 = vrot.lane.b32.xlu0 %v722, 96
    %v913 = vpop.permute.xlu0 %912
    %914 = vrot.lane.b32.xlu0 %v758, 96
    %v915 = vpop.permute.xlu0 %914
    %916 = vrot.lane.b32.xlu0 %v761, 96
    %v917 = vpop.permute.xlu0 %916
    %v918 = vsel %vm818, %v911, 0
    %v920 = vsel %vm818, %v913, 0
    %v922 = vsel %vm818, %v915, 0
    %v924 = vsel %vm818, %v917, 0
    %926 = vmatpush.xpose.msra.mxu0 0.0
    %927 = vmatpush.xpose.msra.mxu0 0.0
    %928 = vmatpush.xpose.msra.mxu0 0.0
    %929 = vmatpush.xpose.msra.mxu0 0.0
    %930 = vmatpush.xpose.msra.mxu0 0.0
    %931 = vmatpush.xpose.msra.mxu0 0.0
    %932 = vmatpush.xpose.msra.mxu0 0.0
    %933 = vmatpush.xpose.msra.mxu0 0.0
    %934 = vmatpush.xpose.msra.mxu0 0.0
    %935 = vmatpush.xpose.msra.mxu0 0.0
    %936 = vmatpush.xpose.msra.mxu0 0.0
    %937 = vmatpush.xpose.msra.mxu0 0.0
    %938 = vmatpush.xpose.msra.mxu0 0.0
    %939 = vmatpush.xpose.msra.mxu0 0.0
    %940 = vmatpush.xpose.msra.mxu0 %v924
    %941 = vmatpush.xpose.msra.mxu0 %v922
    %942 = vmatmul.f32.gmra.mxu0 %v918
    %v943 = vpop.f32.mrf.mxu0
    %v944 = vadd.f32 0.0, %v943
    %945 = vmatmul.f32.gmra.mxu0 %v920
    %v946 = vpop.f32.mrf.mxu0
    %v947 = vadd.f32 0.0, %v946
    %948 = vdwg.mxu0
    %v949 = vmul.f32 %v944, 0.17677669
    %v950 = vmul.f32 %v947, 0.17677669
    %v951 = vadd.f32 %v949, %v316
    %v952 = vadd.f32 %v950, %v317
    %v953 = vsel %vm858, %v951, -inf
    %954 = vmax.xlane.f32.xlu0 %v953
    %v955 = vpop.xlane.xlu0 %954
    %v956 = vsel %vm858, %v952, -inf
    %957 = vmax.xlane.f32.xlu0 %v956
    %v958 = vpop.xlane.xlu0 %957
    %v959 = vsub.f32 %v951, %v955
    %v960 = vsub.f32 %v952, %v958
    %v961 = vmul.f32 %v959, 1.442695
    %v962 = vpow.pop %v961
    %v963 = vmul.f32 %v960, 1.442695
    %v964 = vpow.pop %v963
    %v965 = vsel %vm858, %v962, 0.0
    %966 = vadd.xlane.f32.xlu0 %v965
    %v967 = vpop.xlane.xlu0 %966
    %v968 = vsel %vm858, %v964, 0.0
    %969 = vadd.xlane.f32.xlu0 %v968
    %v970 = vpop.xlane.xlu0 %969
    %v971 = vrcp.pop %v967
    %v972 = vrcp.pop %v970
    %v973 = vmul.f32 %v962, %v971
    %v974 = vmul.f32 %v964, %v972
    %977 = vrot.lane.b32.xlu0 %v797, 96
    %v978 = vpop.permute.xlu0 %977
    %979 = vrot.lane.b32.xlu0 %v800, 96
    %v980 = vpop.permute.xlu0 %979
    %v984 = vsel %vm858, %v973, 0
    %v987 = vsel %vm858, %v974, 0
    %989 = vmatpush.msra.mxu0 0.0
    %990 = vmatpush.msra.mxu0 0.0
    %991 = vmatpush.msra.mxu0 0.0
    %992 = vmatpush.msra.mxu0 0.0
    %993 = vmatpush.msra.mxu0 0.0
    %994 = vmatpush.msra.mxu0 0.0
    %995 = vmatpush.msra.mxu0 0.0
    %996 = vmatpush.msra.mxu0 0.0
    %997 = vmatpush.msra.mxu0 0.0
    %998 = vmatpush.msra.mxu0 0.0
    %999 = vmatpush.msra.mxu0 0.0
    %1000 = vmatpush.msra.mxu0 0.0
    %1001 = vmatpush.msra.mxu0 0.0
    %1002 = vmatpush.msra.mxu0 0.0
    %1003 = vmatpush.msra.mxu0 %v980
    %1004 = vmatpush.msra.mxu0 %v978
    %1005 = vmatmul.f32.gmra.mxu0 %v984
    %v1006 = vpop.f32.mrf.mxu0
    %v1007 = vadd.f32 0.0, %v1006
    %1008 = vmatmul.f32.gmra.mxu0 %v987
    %v1009 = vpop.f32.mrf.mxu0
    %v1010 = vadd.f32 0.0, %v1009
    %1011 = vdwg.mxu0
    %v1013 = vsel %vm818, %v1007, 0
    %v1016 = vsel %vm818, %v1010, 0
    %1018 = vmatpush.msra.mxu0 0.0
    %1019 = vmatpush.msra.mxu0 0.0
    %1020 = vmatpush.msra.mxu0 0.0
    %1021 = vmatpush.msra.mxu0 0.0
    %1022 = vmatpush.msra.mxu0 0.0
    %1023 = vmatpush.msra.mxu0 0.0
    %1024 = vmatpush.msra.mxu0 0.0
    %1025 = vmatpush.msra.mxu0 0.0
    %1026 = vmatpush.msra.mxu0 0.0
    %1027 = vmatpush.msra.mxu0 0.0
    %1028 = vmatpush.msra.mxu0 0.0
    %1029 = vmatpush.msra.mxu0 0.0
    %1030 = vmatpush.msra.mxu0 %v809
    %1031 = vmatpush.msra.mxu0 %v808
    %1032 = vmatpush.msra.mxu0 %v807
    %1033 = vmatpush.msra.mxu0 %v806
    %1034 = vmatmul.f32.gmra.mxu0 %v1013
    %v1035 = vpop.f32.mrf.mxu0
    %v1036 = vadd.f32 0.0, %v1035
    %1037 = vmatmul.f32.gmra.mxu0 %v1016
    %v1038 = vpop.f32.mrf.mxu0
    %v1039 = vadd.f32 0.0, %v1038
    %1040 = vdwg.mxu0
    %v1042 = vsel %vm818, %v905, 0
    %v1045 = vsel %vm818, %v908, 0
    %1047 = vmatpush.msra.mxu0 0.0
    %1048 = vmatpush.msra.mxu0 0.0
    %1049 = vmatpush.msra.mxu0 0.0
    %1050 = vmatpush.msra.mxu0 0.0
    %1051 = vmatpush.msra.mxu0 0.0
    %1052 = vmatpush.msra.mxu0 0.0
    %1053 = vmatpush.msra.mxu0 0.0
    %1054 = vmatpush.msra.mxu0 0.0
    %1055 = vmatpush.msra.mxu0 0.0
    %1056 = vmatpush.msra.mxu0 0.0
    %1057 = vmatpush.msra.mxu0 0.0
    %1058 = vmatpush.msra.mxu0 0.0
    %1059 = vmatpush.msra.mxu0 %v805
    %1060 = vmatpush.msra.mxu0 %v804
    %1061 = vmatpush.msra.mxu0 %v803
    %1062 = vmatpush.msra.mxu0 %v802
    %1063 = vmatmul.f32.gmra.mxu0 %v1042
    %v1064 = vpop.f32.mrf.mxu0
    %v1065 = vadd.f32 %v1036, %v1064
    %1066 = vmatmul.f32.gmra.mxu0 %v1045
    %v1067 = vpop.f32.mrf.mxu0
    %v1068 = vadd.f32 %v1039, %v1067
    %1069 = vdwg.mxu0
    %1070 = vrot.lane.b32.xlu0 %v719, 64
    %v1071 = vpop.permute.xlu0 %1070
    %1072 = vrot.lane.b32.xlu0 %v722, 64
    %v1073 = vpop.permute.xlu0 %1072
    %1074 = vrot.lane.b32.xlu0 %v758, 64
    %v1075 = vpop.permute.xlu0 %1074
    %1076 = vrot.lane.b32.xlu0 %v761, 64
    %v1077 = vpop.permute.xlu0 %1076
    %v1078 = vsel %vm818, %v1071, 0
    %v1080 = vsel %vm818, %v1073, 0
    %v1082 = vsel %vm818, %v1075, 0
    %v1084 = vsel %vm818, %v1077, 0
    %1086 = vmatpush.xpose.msra.mxu0 0.0
    %1087 = vmatpush.xpose.msra.mxu0 0.0
    %1088 = vmatpush.xpose.msra.mxu0 0.0
    %1089 = vmatpush.xpose.msra.mxu0 0.0
    %1090 = vmatpush.xpose.msra.mxu0 0.0
    %1091 = vmatpush.xpose.msra.mxu0 0.0
    %1092 = vmatpush.xpose.msra.mxu0 0.0
    %1093 = vmatpush.xpose.msra.mxu0 0.0
    %1094 = vmatpush.xpose.msra.mxu0 0.0
    %1095 = vmatpush.xpose.msra.mxu0 0.0
    %1096 = vmatpush.xpose.msra.mxu0 0.0
    %1097 = vmatpush.xpose.msra.mxu0 0.0
    %1098 = vmatpush.xpose.msra.mxu0 0.0
    %1099 = vmatpush.xpose.msra.mxu0 0.0
    %1100 = vmatpush.xpose.msra.mxu0 %v1084
    %1101 = vmatpush.xpose.msra.mxu0 %v1082
    %1102 = vmatmul.f32.gmra.mxu0 %v1078
    %v1103 = vpop.f32.mrf.mxu0
    %v1104 = vadd.f32 0.0, %v1103
    %1105 = vmatmul.f32.gmra.mxu0 %v1080
    %v1106 = vpop.f32.mrf.mxu0
    %v1107 = vadd.f32 0.0, %v1106
    %1108 = vdwg.mxu0
    %v1109 = vmul.f32 %v1104, 0.17677669
    %v1110 = vmul.f32 %v1107, 0.17677669
    %v1111 = vadd.f32 %v1109, %v316
    %v1112 = vadd.f32 %v1110, %v317
    %v1113 = vsel %vm858, %v1111, -inf
    %1114 = vmax.xlane.f32.xlu0 %v1113
    %v1115 = vpop.xlane.xlu0 %1114
    %v1116 = vsel %vm858, %v1112, -inf
    %1117 = vmax.xlane.f32.xlu0 %v1116
    %v1118 = vpop.xlane.xlu0 %1117
    %v1119 = vsub.f32 %v1111, %v1115
    %v1120 = vsub.f32 %v1112, %v1118
    %v1121 = vmul.f32 %v1119, 1.442695
    %v1122 = vpow.pop %v1121
    %v1123 = vmul.f32 %v1120, 1.442695
    %v1124 = vpow.pop %v1123
    %v1125 = vsel %vm858, %v1122, 0.0
    %1126 = vadd.xlane.f32.xlu0 %v1125
    %v1127 = vpop.xlane.xlu0 %1126
    %v1128 = vsel %vm858, %v1124, 0.0
    %1129 = vadd.xlane.f32.xlu0 %v1128
    %v1130 = vpop.xlane.xlu0 %1129
    %v1131 = vrcp.pop %v1127
    %v1132 = vrcp.pop %v1130
    %v1133 = vmul.f32 %v1122, %v1131
    %v1134 = vmul.f32 %v1124, %v1132
    %1135 = vrot.lane.b32.xlu0 %v797, 64
    %v1136 = vpop.permute.xlu0 %1135
    %1137 = vrot.lane.b32.xlu0 %v800, 64
    %v1138 = vpop.permute.xlu0 %1137
    %v1142 = vsel %vm858, %v1133, 0
    %v1145 = vsel %vm858, %v1134, 0
    %1147 = vmatpush.msra.mxu0 0.0
    %1148 = vmatpush.msra.mxu0 0.0
    %1149 = vmatpush.msra.mxu0 0.0
    %1150 = vmatpush.msra.mxu0 0.0
    %1151 = vmatpush.msra.mxu0 0.0
    %1152 = vmatpush.msra.mxu0 0.0
    %1153 = vmatpush.msra.mxu0 0.0
    %1154 = vmatpush.msra.mxu0 0.0
    %1155 = vmatpush.msra.mxu0 0.0
    %1156 = vmatpush.msra.mxu0 0.0
    %1157 = vmatpush.msra.mxu0 0.0
    %1158 = vmatpush.msra.mxu0 0.0
    %1159 = vmatpush.msra.mxu0 0.0
    %1160 = vmatpush.msra.mxu0 0.0
    %1161 = vmatpush.msra.mxu0 %v1138
    %1162 = vmatpush.msra.mxu0 %v1136
    %1163 = vmatmul.f32.gmra.mxu0 %v1142
    %v1164 = vpop.f32.mrf.mxu0
    %v1165 = vadd.f32 0.0, %v1164
    %1166 = vmatmul.f32.gmra.mxu0 %v1145
    %v1167 = vpop.f32.mrf.mxu0
    %v1168 = vadd.f32 0.0, %v1167
    %1169 = vdwg.mxu0
    %v1171 = vsel %vm818, %v1165, 0
    %v1174 = vsel %vm818, %v1168, 0
    %1176 = vmatpush.msra.mxu0 0.0
    %1177 = vmatpush.msra.mxu0 0.0
    %1178 = vmatpush.msra.mxu0 0.0
    %1179 = vmatpush.msra.mxu0 0.0
    %1180 = vmatpush.msra.mxu0 0.0
    %1181 = vmatpush.msra.mxu0 0.0
    %1182 = vmatpush.msra.mxu0 0.0
    %1183 = vmatpush.msra.mxu0 0.0
    %1184 = vmatpush.msra.mxu0 0.0
    %1185 = vmatpush.msra.mxu0 0.0
    %1186 = vmatpush.msra.mxu0 0.0
    %1187 = vmatpush.msra.mxu0 0.0
    %1188 = vmatpush.msra.mxu0 %v813
    %1189 = vmatpush.msra.mxu0 %v812
    %1190 = vmatpush.msra.mxu0 %v811
    %1191 = vmatpush.msra.mxu0 %v810
    %1192 = vmatmul.f32.gmra.mxu0 %v1171
    %v1193 = vpop.f32.mrf.mxu0
    %v1194 = vadd.f32 0.0, %v1193
    %1195 = vmatmul.f32.gmra.mxu0 %v1174
    %v1196 = vpop.f32.mrf.mxu0
    %v1197 = vadd.f32 0.0, %v1196
    %1198 = vdwg.mxu0
    %v1199 = vadd.f32 %v1065, %v1194
    %v1200 = vadd.f32 %v1068, %v1197
    %1201 = vrot.lane.b32.xlu0 %v719, 32
    %v1202 = vpop.permute.xlu0 %1201
    %1203 = vrot.lane.b32.xlu0 %v722, 32
    %v1204 = vpop.permute.xlu0 %1203
    %1205 = vrot.lane.b32.xlu0 %v758, 32
    %v1206 = vpop.permute.xlu0 %1205
    %1207 = vrot.lane.b32.xlu0 %v761, 32
    %v1208 = vpop.permute.xlu0 %1207
    %v1209 = vsel %vm818, %v1202, 0
    %v1211 = vsel %vm818, %v1204, 0
    %v1213 = vsel %vm818, %v1206, 0
    %v1215 = vsel %vm818, %v1208, 0
    %1217 = vmatpush.xpose.msra.mxu0 0.0
    %1218 = vmatpush.xpose.msra.mxu0 0.0
    %1219 = vmatpush.xpose.msra.mxu0 0.0
    %1220 = vmatpush.xpose.msra.mxu0 0.0
    %1221 = vmatpush.xpose.msra.mxu0 0.0
    %1222 = vmatpush.xpose.msra.mxu0 0.0
    %1223 = vmatpush.xpose.msra.mxu0 0.0
    %1224 = vmatpush.xpose.msra.mxu0 0.0
    %1225 = vmatpush.xpose.msra.mxu0 0.0
    %1226 = vmatpush.xpose.msra.mxu0 0.0
    %1227 = vmatpush.xpose.msra.mxu0 0.0
    %1228 = vmatpush.xpose.msra.mxu0 0.0
    %1229 = vmatpush.xpose.msra.mxu0 0.0
    %1230 = vmatpush.xpose.msra.mxu0 0.0
    %1231 = vmatpush.xpose.msra.mxu0 %v1215
    %1232 = vmatpush.xpose.msra.mxu0 %v1213
    %1233 = vmatmul.f32.gmra.mxu0 %v1209
    %v1234 = vpop.f32.mrf.mxu0
    %v1235 = vadd.f32 0.0, %v1234
    %1236 = vmatmul.f32.gmra.mxu0 %v1211
    %v1237 = vpop.f32.mrf.mxu0
    %v1238 = vadd.f32 0.0, %v1237
    %1239 = vdwg.mxu0
    %v1240 = vmul.f32 %v1235, 0.17677669
    %v1241 = vmul.f32 %v1238, 0.17677669
    %v1242 = vadd.f32 %v1240, %v316
    %v1243 = vadd.f32 %v1241, %v317
    %v1244 = vsel %vm858, %v1242, -inf
    %1245 = vmax.xlane.f32.xlu0 %v1244
    %v1246 = vpop.xlane.xlu0 %1245
    %v1247 = vsel %vm858, %v1243, -inf
    %1248 = vmax.xlane.f32.xlu0 %v1247
    %v1249 = vpop.xlane.xlu0 %1248
    %v1250 = vsub.f32 %v1242, %v1246
    %v1251 = vsub.f32 %v1243, %v1249
    %v1252 = vmul.f32 %v1250, 1.442695
    %v1253 = vpow.pop %v1252
    %v1254 = vmul.f32 %v1251, 1.442695
    %v1255 = vpow.pop %v1254
    %v1256 = vsel %vm858, %v1253, 0.0
    %1257 = vadd.xlane.f32.xlu0 %v1256
    %v1258 = vpop.xlane.xlu0 %1257
    %v1259 = vsel %vm858, %v1255, 0.0
    %1260 = vadd.xlane.f32.xlu0 %v1259
    %v1261 = vpop.xlane.xlu0 %1260
    %v1262 = vrcp.pop %v1258
    %v1263 = vrcp.pop %v1261
    %v1264 = vmul.f32 %v1253, %v1262
    %v1265 = vmul.f32 %v1255, %v1263
    %1266 = vrot.lane.b32.xlu0 %v797, 32
    %v1267 = vpop.permute.xlu0 %1266
    %1268 = vrot.lane.b32.xlu0 %v800, 32
    %v1269 = vpop.permute.xlu0 %1268
    %v1273 = vsel %vm858, %v1264, 0
    %v1276 = vsel %vm858, %v1265, 0
    %1278 = vmatpush.msra.mxu0 0.0
    %1279 = vmatpush.msra.mxu0 0.0
    %1280 = vmatpush.msra.mxu0 0.0
    %1281 = vmatpush.msra.mxu0 0.0
    %1282 = vmatpush.msra.mxu0 0.0
    %1283 = vmatpush.msra.mxu0 0.0
    %1284 = vmatpush.msra.mxu0 0.0
    %1285 = vmatpush.msra.mxu0 0.0
    %1286 = vmatpush.msra.mxu0 0.0
    %1287 = vmatpush.msra.mxu0 0.0
    %1288 = vmatpush.msra.mxu0 0.0
    %1289 = vmatpush.msra.mxu0 0.0
    %1290 = vmatpush.msra.mxu0 0.0
    %1291 = vmatpush.msra.mxu0 0.0
    %1292 = vmatpush.msra.mxu0 %v1269
    %1293 = vmatpush.msra.mxu0 %v1267
    %1294 = vmatmul.f32.gmra.mxu0 %v1273
    %v1295 = vpop.f32.mrf.mxu0
    %v1296 = vadd.f32 0.0, %v1295
    %1297 = vmatmul.f32.gmra.mxu0 %v1276
    %v1298 = vpop.f32.mrf.mxu0
    %v1299 = vadd.f32 0.0, %v1298
    %1300 = vdwg.mxu0
    %v1302 = vsel %vm818, %v1296, 0
    %v1305 = vsel %vm818, %v1299, 0
    %1307 = vmatpush.msra.mxu0 0.0
    %1308 = vmatpush.msra.mxu0 0.0
    %1309 = vmatpush.msra.mxu0 0.0
    %1310 = vmatpush.msra.mxu0 0.0
    %1311 = vmatpush.msra.mxu0 0.0
    %1312 = vmatpush.msra.mxu0 0.0
    %1313 = vmatpush.msra.mxu0 0.0
    %1314 = vmatpush.msra.mxu0 0.0
    %1315 = vmatpush.msra.mxu0 0.0
    %1316 = vmatpush.msra.mxu0 0.0
    %1317 = vmatpush.msra.mxu0 0.0
    %1318 = vmatpush.msra.mxu0 0.0
    %1319 = vmatpush.msra.mxu0 %v817
    %1320 = vmatpush.msra.mxu0 %v816
    %1321 = vmatpush.msra.mxu0 %v815
    %1322 = vmatpush.msra.mxu0 %v814
    %1323 = vmatmul.f32.gmra.mxu0 %v1302
    %v1324 = vpop.f32.mrf.mxu0
    %v1325 = vadd.f32 0.0, %v1324
    %1326 = vmatmul.f32.gmra.mxu0 %v1305
    %v1327 = vpop.f32.mrf.mxu0
    %v1328 = vadd.f32 0.0, %v1327
    %1329 = vdwg.mxu0
    %v1330 = vadd.f32 %v1199, %v1325
    %v1331 = vadd.f32 %v1200, %v1328
    %v1332 = vmul.f32 %v632, %v1330
    %v1333 = vmul.f32 %v633, %v1331
    %v1334 = vld [vmem:[%s14] sm:$0x1]
    %v1335 = vld [vmem:[%s15] sm:$0x1]
    %1336 = vadd.xlane.f32.xlu0 %v1332
    %v1337 = vpop.xlane.xlu0 %1336
    %1338 = vadd.xlane.f32.xlu0 %v1333
    %v1339 = vpop.xlane.xlu0 %1338
    %v1340 = vmul.f32 %v1337, %v330
    %v1341 = vmul.f32 %v1339, %v330
    %v1342 = vsub.f32 %v1332, %v1340
    %v1343 = vsub.f32 %v1333, %v1341
    %v1344 = vmul.f32 %v1342, %v1342
    %v1345 = vmul.f32 %v1343, %v1343
    %1346 = vadd.xlane.f32.xlu0 %v1344
    %v1347 = vpop.xlane.xlu0 %1346
    %1348 = vadd.xlane.f32.xlu0 %v1345
    %v1349 = vpop.xlane.xlu0 %1348
    %v1350 = vmul.f32 %v1347, %v330
    %v1351 = vmul.f32 %v1349, %v330
    %v1352 = vadd.f32 %v1350, 1e-06
    %v1353 = vadd.f32 %v1351, 1e-06
    %v1354 = vrsqrt.pop %v1352
    %v1355 = vmul.f32 %v1354, %v1352
    %v1356 = vmul.f32 %v1355, %v1354
    %v1357 = vmul.f32 0.5, %v1356
    %v1358 = vsub.f32 1.5, %v1357
    %v1359 = vmul.f32 %v1354, %v1358
    %vm1360 = vweird.f32 %v1352
    %vm1361 = vweird.f32 %v1354
    %vm1362 = vmor %vm1360, %vm1361
    %v1363 = vsel %vm1362, %v1354, %v1359
    %v1364 = vrsqrt.pop %v1353
    %v1365 = vmul.f32 %v1364, %v1353
    %v1366 = vmul.f32 %v1365, %v1364
    %v1367 = vmul.f32 0.5, %v1366
    %v1368 = vsub.f32 1.5, %v1367
    %v1369 = vmul.f32 %v1364, %v1368
    %vm1370 = vweird.f32 %v1353
    %vm1371 = vweird.f32 %v1364
    %vm1372 = vmor %vm1370, %vm1371
    %v1373 = vsel %vm1372, %v1364, %v1369
    %v1374 = vmul.f32 %v1342, %v1363
    %v1375 = vmul.f32 %v1343, %v1373
    %v1377 = vperm.slane %v1334, 0
    %v1379 = vmul.f32 %v1374, %v1377
    %v1380 = vmul.f32 %v1375, %v1377
    %v1382 = vperm.slane %v1335, 0
    %v1384 = vadd.f32 %v1379, %v1382
    %v1385 = vadd.f32 %v1380, %v1382
    %v1386 = vadd.f32 %v375, %v1384
    %v1387 = vadd.f32 %v376, %v1385
    %1388 = vadd.xlane.f32.xlu0 %v1386
    %v1389 = vpop.xlane.xlu0 %1388
    %1390 = vadd.xlane.f32.xlu0 %v1387
    %v1391 = vpop.xlane.xlu0 %1390
    %v1392 = vmul.f32 %v1389, %v330
    %v1393 = vmul.f32 %v1391, %v330
    %v1394 = vsub.f32 %v1386, %v1392
    %v1395 = vsub.f32 %v1387, %v1393
    %v1396 = vmul.f32 %v1394, %v1394
    %v1397 = vmul.f32 %v1395, %v1395
    %1398 = vadd.xlane.f32.xlu0 %v1396
    %v1399 = vpop.xlane.xlu0 %1398
    %1400 = vadd.xlane.f32.xlu0 %v1397
    %v1401 = vpop.xlane.xlu0 %1400
    %v1402 = vmul.f32 %v1399, %v330
    %v1403 = vmul.f32 %v1401, %v330
    %v1404 = vadd.f32 %v1402, 1e-06
    %v1405 = vadd.f32 %v1403, 1e-06
    %v1406 = vrsqrt.pop %v1404
    %v1407 = vmul.f32 %v1406, %v1404
    %v1408 = vmul.f32 %v1407, %v1406
    %v1409 = vmul.f32 0.5, %v1408
    %v1410 = vsub.f32 1.5, %v1409
    %v1411 = vmul.f32 %v1406, %v1410
    %vm1412 = vweird.f32 %v1404
    %vm1413 = vweird.f32 %v1406
    %vm1414 = vmor %vm1412, %vm1413
    %v1415 = vsel %vm1414, %v1406, %v1411
    %v1416 = vrsqrt.pop %v1405
    %v1417 = vmul.f32 %v1416, %v1405
    %v1418 = vmul.f32 %v1417, %v1416
    %v1419 = vmul.f32 0.5, %v1418
    %v1420 = vsub.f32 1.5, %v1419
    %v1421 = vmul.f32 %v1416, %v1420
    %vm1422 = vweird.f32 %v1405
    %vm1423 = vweird.f32 %v1416
    %vm1424 = vmor %vm1422, %vm1423
    %v1425 = vsel %vm1424, %v1416, %v1421
    %v1426 = vmul.f32 %v1394, %v1415
    %v1427 = vmul.f32 %v1395, %v1425
    %v1428 = vmul.f32 %v1426, %v637
    %v1429 = vmul.f32 %v1427, %v638
    %v1430 = vadd.f32 %v1428, %v634
    %v1431 = vadd.f32 %v1429, %v635
    %v1432 = vld [vmem:[#allocation20] sm:$0xff]
    %v1433 = vld [vmem:[#allocation20 + $0x8] sm:$0xff]
    %v1434 = vld [vmem:[#allocation20 + $0x10] sm:$0xff]
    %v1435 = vld [vmem:[#allocation20 + $0x18] sm:$0xff]
    %v1436 = vld [vmem:[#allocation20 + $0x20] sm:$0xff]
    %v1437 = vld [vmem:[#allocation20 + $0x28] sm:$0xff]
    %v1438 = vld [vmem:[#allocation20 + $0x30] sm:$0xff]
    %v1439 = vld [vmem:[#allocation20 + $0x38] sm:$0xff]
    %v1440 = vld [vmem:[#allocation20 + $0x40] sm:$0xff]
    %v1441 = vld [vmem:[#allocation20 + $0x48] sm:$0xff]
    %v1442 = vld [vmem:[#allocation20 + $0x50] sm:$0xff]
    %v1443 = vld [vmem:[#allocation20 + $0x58] sm:$0xff]
    %v1444 = vld [vmem:[#allocation20 + $0x60] sm:$0xff]
    %v1445 = vld [vmem:[#allocation20 + $0x68] sm:$0xff]
    %v1446 = vld [vmem:[#allocation20 + $0x70] sm:$0xff]
    %v1447 = vld [vmem:[#allocation20 + $0x78] sm:$0xff]
    %v1448 = vld [vmem:[#allocation20 + $0x80] sm:$0xff]
    %v1449 = vld [vmem:[#allocation20 + $0x88] sm:$0xff]
    %v1450 = vld [vmem:[#allocation20 + $0x90] sm:$0xff]
    %v1451 = vld [vmem:[#allocation20 + $0x98] sm:$0xff]
    %v1452 = vld [vmem:[#allocation20 + $0xa0] sm:$0xff]
    %v1453 = vld [vmem:[#allocation20 + $0xa8] sm:$0xff]
    %v1454 = vld [vmem:[#allocation20 + $0xb0] sm:$0xff]
    %v1455 = vld [vmem:[#allocation20 + $0xb8] sm:$0xff]
    %v1456 = vld [vmem:[#allocation20 + $0xc0] sm:$0xff]
    %v1457 = vld [vmem:[#allocation20 + $0xc8] sm:$0xff]
    %v1458 = vld [vmem:[#allocation20 + $0xd0] sm:$0xff]
    %v1459 = vld [vmem:[#allocation20 + $0xd8] sm:$0xff]
    %v1460 = vld [vmem:[#allocation20 + $0xe0] sm:$0xff]
    %v1461 = vld [vmem:[#allocation20 + $0xe8] sm:$0xff]
    %v1462 = vld [vmem:[#allocation20 + $0xf0] sm:$0xff]
    %v1463 = vld [vmem:[#allocation20 + $0xf8] sm:$0xff]
    %v1464 = vld [vmem:[#allocation20 + $0x100] sm:$0xff]
    %v1465 = vld [vmem:[#allocation20 + $0x108] sm:$0xff]
    %v1466 = vld [vmem:[#allocation20 + $0x110] sm:$0xff]
    %v1467 = vld [vmem:[#allocation20 + $0x118] sm:$0xff]
    %v1468 = vld [vmem:[#allocation20 + $0x120] sm:$0xff]
    %v1469 = vld [vmem:[#allocation20 + $0x128] sm:$0xff]
    %v1470 = vld [vmem:[#allocation20 + $0x130] sm:$0xff]
    %v1471 = vld [vmem:[#allocation20 + $0x138] sm:$0xff]
    %v1472 = vld [vmem:[#allocation20 + $0x140] sm:$0xff]
    %v1473 = vld [vmem:[#allocation20 + $0x148] sm:$0xff]
    %v1474 = vld [vmem:[#allocation20 + $0x150] sm:$0xff]
    %v1475 = vld [vmem:[#allocation20 + $0x158] sm:$0xff]
    %v1476 = vld [vmem:[#allocation20 + $0x160] sm:$0xff]
    %v1477 = vld [vmem:[#allocation20 + $0x168] sm:$0xff]
    %v1478 = vld [vmem:[#allocation20 + $0x170] sm:$0xff]
    %v1479 = vld [vmem:[#allocation20 + $0x178] sm:$0xff]
    %v1480 = vld [vmem:[#allocation20 + $0x180] sm:$0xff]
    %v1481 = vld [vmem:[#allocation20 + $0x188] sm:$0xff]
    %v1482 = vld [vmem:[#allocation20 + $0x190] sm:$0xff]
    %v1483 = vld [vmem:[#allocation20 + $0x198] sm:$0xff]
    %v1484 = vld [vmem:[#allocation20 + $0x1a0] sm:$0xff]
    %v1485 = vld [vmem:[#allocation20 + $0x1a8] sm:$0xff]
    %v1486 = vld [vmem:[#allocation20 + $0x1b0] sm:$0xff]
    %v1487 = vld [vmem:[#allocation20 + $0x1b8] sm:$0xff]
    %v1488 = vld [vmem:[#allocation20 + $0x1c0] sm:$0xff]
    %v1489 = vld [vmem:[#allocation20 + $0x1c8] sm:$0xff]
    %v1490 = vld [vmem:[#allocation20 + $0x1d0] sm:$0xff]
    %v1491 = vld [vmem:[#allocation20 + $0x1d8] sm:$0xff]
    %v1492 = vld [vmem:[#allocation20 + $0x1e0] sm:$0xff]
    %v1493 = vld [vmem:[#allocation20 + $0x1e8] sm:$0xff]
    %v1494 = vld [vmem:[#allocation20 + $0x1f0] sm:$0xff]
    %v1495 = vld [vmem:[#allocation20 + $0x1f8] sm:$0xff]
    %1496 = vmatpush.msra.mxu0 %v1492
    %1497 = vmatpush.msra.mxu0 %v1488
    %1498 = vmatpush.msra.mxu0 %v1484
    %1499 = vmatpush.msra.mxu0 %v1480
    %1500 = vmatpush.msra.mxu0 %v1476
    %1501 = vmatpush.msra.mxu0 %v1472
    %1502 = vmatpush.msra.mxu0 %v1468
    %1503 = vmatpush.msra.mxu0 %v1464
    %1504 = vmatpush.msra.mxu0 %v1460
    %1505 = vmatpush.msra.mxu0 %v1456
    %1506 = vmatpush.msra.mxu0 %v1452
    %1507 = vmatpush.msra.mxu0 %v1448
    %1508 = vmatpush.msra.mxu0 %v1444
    %1509 = vmatpush.msra.mxu0 %v1440
    %1510 = vmatpush.msra.mxu0 %v1436
    %1511 = vmatpush.msra.mxu0 %v1432
    %1512 = vmatmul.f32.gmra.mxu0 %v1430
    %v1513 = vpop.f32.mrf.mxu0
    %v1514 = vadd.f32 0.0, %v1513
    %1515 = vmatmul.f32.gmra.mxu0 %v1431
    %v1516 = vpop.f32.mrf.mxu0
    %v1517 = vadd.f32 0.0, %v1516
    %1518 = vdwg.mxu0
    %1519 = vmatpush.msra.mxu0 %v1493
    %1520 = vmatpush.msra.mxu0 %v1489
    %1521 = vmatpush.msra.mxu0 %v1485
    %1522 = vmatpush.msra.mxu0 %v1481
    %1523 = vmatpush.msra.mxu0 %v1477
    %1524 = vmatpush.msra.mxu0 %v1473
    %1525 = vmatpush.msra.mxu0 %v1469
    %1526 = vmatpush.msra.mxu0 %v1465
    %1527 = vmatpush.msra.mxu0 %v1461
    %1528 = vmatpush.msra.mxu0 %v1457
    %1529 = vmatpush.msra.mxu0 %v1453
    %1530 = vmatpush.msra.mxu0 %v1449
    %1531 = vmatpush.msra.mxu0 %v1445
    %1532 = vmatpush.msra.mxu0 %v1441
    %1533 = vmatpush.msra.mxu0 %v1437
    %1534 = vmatpush.msra.mxu0 %v1433
    %1535 = vmatmul.f32.gmra.mxu0 %v1430
    %v1536 = vpop.f32.mrf.mxu0
    %v1537 = vadd.f32 0.0, %v1536
    %1538 = vmatmul.f32.gmra.mxu0 %v1431
    %v1539 = vpop.f32.mrf.mxu0
    %v1540 = vadd.f32 0.0, %v1539
    %1541 = vdwg.mxu0
    %1542 = vmatpush.msra.mxu0 %v1494
    %1543 = vmatpush.msra.mxu0 %v1490
    %1544 = vmatpush.msra.mxu0 %v1486
    %1545 = vmatpush.msra.mxu0 %v1482
    %1546 = vmatpush.msra.mxu0 %v1478
    %1547 = vmatpush.msra.mxu0 %v1474
    %1548 = vmatpush.msra.mxu0 %v1470
    %1549 = vmatpush.msra.mxu0 %v1466
    %1550 = vmatpush.msra.mxu0 %v1462
    %1551 = vmatpush.msra.mxu0 %v1458
    %1552 = vmatpush.msra.mxu0 %v1454
    %1553 = vmatpush.msra.mxu0 %v1450
    %1554 = vmatpush.msra.mxu0 %v1446
    %1555 = vmatpush.msra.mxu0 %v1442
    %1556 = vmatpush.msra.mxu0 %v1438
    %1557 = vmatpush.msra.mxu0 %v1434
    %1558 = vmatmul.f32.gmra.mxu0 %v1430
    %v1559 = vpop.f32.mrf.mxu0
    %v1560 = vadd.f32 0.0, %v1559
    %1561 = vmatmul.f32.gmra.mxu0 %v1431
    %v1562 = vpop.f32.mrf.mxu0
    %v1563 = vadd.f32 0.0, %v1562
    %1564 = vdwg.mxu0
    %1565 = vmatpush.msra.mxu0 %v1495
    %1566 = vmatpush.msra.mxu0 %v1491
    %1567 = vmatpush.msra.mxu0 %v1487
    %1568 = vmatpush.msra.mxu0 %v1483
    %1569 = vmatpush.msra.mxu0 %v1479
    %1570 = vmatpush.msra.mxu0 %v1475
    %1571 = vmatpush.msra.mxu0 %v1471
    %1572 = vmatpush.msra.mxu0 %v1467
    %1573 = vmatpush.msra.mxu0 %v1463
    %1574 = vmatpush.msra.mxu0 %v1459
    %1575 = vmatpush.msra.mxu0 %v1455
    %1576 = vmatpush.msra.mxu0 %v1451
    %1577 = vmatpush.msra.mxu0 %v1447
    %1578 = vmatpush.msra.mxu0 %v1443
    %1579 = vmatpush.msra.mxu0 %v1439
    %1580 = vmatpush.msra.mxu0 %v1435
    %1581 = vmatmul.f32.gmra.mxu0 %v1430
    %v1582 = vpop.f32.mrf.mxu0
    %v1583 = vadd.f32 0.0, %v1582
    %1584 = vmatmul.f32.gmra.mxu0 %v1431
    %v1585 = vpop.f32.mrf.mxu0
    %v1586 = vadd.f32 0.0, %v1585
    %1587 = vdwg.mxu0
    %v1588 = vld [vmem:[#allocation23] sm:$0xff]
    %v1589 = vld [vmem:[#allocation23 + $0x8] sm:$0xff]
    %v1590 = vld [vmem:[#allocation23 + $0x10] sm:$0xff]
    %v1591 = vld [vmem:[#allocation23 + $0x18] sm:$0xff]
    %v1592 = vld [vmem:[#allocation23 + $0x20] sm:$0xff]
    %v1593 = vld [vmem:[#allocation23 + $0x28] sm:$0xff]
    %v1594 = vld [vmem:[#allocation23 + $0x30] sm:$0xff]
    %v1595 = vld [vmem:[#allocation23 + $0x38] sm:$0xff]
    %v1596 = vld [vmem:[#allocation23 + $0x40] sm:$0xff]
    %v1597 = vld [vmem:[#allocation23 + $0x48] sm:$0xff]
    %v1598 = vld [vmem:[#allocation23 + $0x50] sm:$0xff]
    %v1599 = vld [vmem:[#allocation23 + $0x58] sm:$0xff]
    %v1600 = vld [vmem:[#allocation23 + $0x60] sm:$0xff]
    %v1601 = vld [vmem:[#allocation23 + $0x68] sm:$0xff]
    %v1602 = vld [vmem:[#allocation23 + $0x70] sm:$0xff]
    %v1603 = vld [vmem:[#allocation23 + $0x78] sm:$0xff]
    %v1604 = vld [vmem:[#allocation23 + $0x80] sm:$0xff]
    %v1605 = vld [vmem:[#allocation23 + $0x88] sm:$0xff]
    %v1606 = vld [vmem:[#allocation23 + $0x90] sm:$0xff]
    %v1607 = vld [vmem:[#allocation23 + $0x98] sm:$0xff]
    %v1608 = vld [vmem:[#allocation23 + $0xa0] sm:$0xff]
    %v1609 = vld [vmem:[#allocation23 + $0xa8] sm:$0xff]
    %v1610 = vld [vmem:[#allocation23 + $0xb0] sm:$0xff]
    %v1611 = vld [vmem:[#allocation23 + $0xb8] sm:$0xff]
    %v1612 = vld [vmem:[#allocation23 + $0xc0] sm:$0xff]
    %v1613 = vld [vmem:[#allocation23 + $0xc8] sm:$0xff]
    %v1614 = vld [vmem:[#allocation23 + $0xd0] sm:$0xff]
    %v1615 = vld [vmem:[#allocation23 + $0xd8] sm:$0xff]
    %v1616 = vld [vmem:[#allocation23 + $0xe0] sm:$0xff]
    %v1617 = vld [vmem:[#allocation23 + $0xe8] sm:$0xff]
    %v1618 = vld [vmem:[#allocation23 + $0xf0] sm:$0xff]
    %v1619 = vld [vmem:[#allocation23 + $0xf8] sm:$0xff]
    %v1620 = vld [vmem:[#allocation23 + $0x100] sm:$0xff]
    %v1621 = vld [vmem:[#allocation23 + $0x108] sm:$0xff]
    %v1622 = vld [vmem:[#allocation23 + $0x110] sm:$0xff]
    %v1623 = vld [vmem:[#allocation23 + $0x118] sm:$0xff]
    %v1624 = vld [vmem:[#allocation23 + $0x120] sm:$0xff]
    %v1625 = vld [vmem:[#allocation23 + $0x128] sm:$0xff]
    %v1626 = vld [vmem:[#allocation23 + $0x130] sm:$0xff]
    %v1627 = vld [vmem:[#allocation23 + $0x138] sm:$0xff]
    %v1628 = vld [vmem:[#allocation23 + $0x140] sm:$0xff]
    %v1629 = vld [vmem:[#allocation23 + $0x148] sm:$0xff]
    %v1630 = vld [vmem:[#allocation23 + $0x150] sm:$0xff]
    %v1631 = vld [vmem:[#allocation23 + $0x158] sm:$0xff]
    %v1632 = vld [vmem:[#allocation23 + $0x160] sm:$0xff]
    %v1633 = vld [vmem:[#allocation23 + $0x168] sm:$0xff]
    %v1634 = vld [vmem:[#allocation23 + $0x170] sm:$0xff]
    %v1635 = vld [vmem:[#allocation23 + $0x178] sm:$0xff]
    %v1636 = vld [vmem:[#allocation23 + $0x180] sm:$0xff]
    %v1637 = vld [vmem:[#allocation23 + $0x188] sm:$0xff]
    %v1638 = vld [vmem:[#allocation23 + $0x190] sm:$0xff]
    %v1639 = vld [vmem:[#allocation23 + $0x198] sm:$0xff]
    %v1640 = vld [vmem:[#allocation23 + $0x1a0] sm:$0xff]
    %v1641 = vld [vmem:[#allocation23 + $0x1a8] sm:$0xff]
    %v1642 = vld [vmem:[#allocation23 + $0x1b0] sm:$0xff]
    %v1643 = vld [vmem:[#allocation23 + $0x1b8] sm:$0xff]
    %v1644 = vld [vmem:[#allocation23 + $0x1c0] sm:$0xff]
    %v1645 = vld [vmem:[#allocation23 + $0x1c8] sm:$0xff]
    %v1646 = vld [vmem:[#allocation23 + $0x1d0] sm:$0xff]
    %v1647 = vld [vmem:[#allocation23 + $0x1d8] sm:$0xff]
    %v1648 = vld [vmem:[#allocation23 + $0x1e0] sm:$0xff]
    %v1649 = vld [vmem:[#allocation23 + $0x1e8] sm:$0xff]
    %v1650 = vld [vmem:[#allocation23 + $0x1f0] sm:$0xff]
    %v1651 = vld [vmem:[#allocation23 + $0x1f8] sm:$0xff]
    %1652 = vmatpush.msra.mxu0 %v1648
    %1653 = vmatpush.msra.mxu0 %v1644
    %1654 = vmatpush.msra.mxu0 %v1640
    %1655 = vmatpush.msra.mxu0 %v1636
    %1656 = vmatpush.msra.mxu0 %v1632
    %1657 = vmatpush.msra.mxu0 %v1628
    %1658 = vmatpush.msra.mxu0 %v1624
    %1659 = vmatpush.msra.mxu0 %v1620
    %1660 = vmatpush.msra.mxu0 %v1616
    %1661 = vmatpush.msra.mxu0 %v1612
    %1662 = vmatpush.msra.mxu0 %v1608
    %1663 = vmatpush.msra.mxu0 %v1604
    %1664 = vmatpush.msra.mxu0 %v1600
    %1665 = vmatpush.msra.mxu0 %v1596
    %1666 = vmatpush.msra.mxu0 %v1592
    %1667 = vmatpush.msra.mxu0 %v1588
    %1668 = vmatmul.f32.gmra.mxu0 %v1430
    %v1669 = vpop.f32.mrf.mxu0
    %v1670 = vadd.f32 0.0, %v1669
    %1671 = vmatmul.f32.gmra.mxu0 %v1431
    %v1672 = vpop.f32.mrf.mxu0
    %v1673 = vadd.f32 0.0, %v1672
    %1674 = vdwg.mxu0
    %1675 = vmatpush.msra.mxu0 %v1649
    %1676 = vmatpush.msra.mxu0 %v1645
    %1677 = vmatpush.msra.mxu0 %v1641
    %1678 = vmatpush.msra.mxu0 %v1637
    %1679 = vmatpush.msra.mxu0 %v1633
    %1680 = vmatpush.msra.mxu0 %v1629
    %1681 = vmatpush.msra.mxu0 %v1625
    %1682 = vmatpush.msra.mxu0 %v1621
    %1683 = vmatpush.msra.mxu0 %v1617
    %1684 = vmatpush.msra.mxu0 %v1613
    %1685 = vmatpush.msra.mxu0 %v1609
    %1686 = vmatpush.msra.mxu0 %v1605
    %1687 = vmatpush.msra.mxu0 %v1601
    %1688 = vmatpush.msra.mxu0 %v1597
    %1689 = vmatpush.msra.mxu0 %v1593
    %1690 = vmatpush.msra.mxu0 %v1589
    %1691 = vmatmul.f32.gmra.mxu0 %v1430
    %v1692 = vpop.f32.mrf.mxu0
    %v1693 = vadd.f32 0.0, %v1692
    %1694 = vmatmul.f32.gmra.mxu0 %v1431
    %v1695 = vpop.f32.mrf.mxu0
    %v1696 = vadd.f32 0.0, %v1695
    %1697 = vdwg.mxu0
    %1698 = vmatpush.msra.mxu0 %v1650
    %1699 = vmatpush.msra.mxu0 %v1646
    %1700 = vmatpush.msra.mxu0 %v1642
    %1701 = vmatpush.msra.mxu0 %v1638
    %1702 = vmatpush.msra.mxu0 %v1634
    %1703 = vmatpush.msra.mxu0 %v1630
    %1704 = vmatpush.msra.mxu0 %v1626
    %1705 = vmatpush.msra.mxu0 %v1622
    %1706 = vmatpush.msra.mxu0 %v1618
    %1707 = vmatpush.msra.mxu0 %v1614
    %1708 = vmatpush.msra.mxu0 %v1610
    %1709 = vmatpush.msra.mxu0 %v1606
    %1710 = vmatpush.msra.mxu0 %v1602
    %1711 = vmatpush.msra.mxu0 %v1598
    %1712 = vmatpush.msra.mxu0 %v1594
    %1713 = vmatpush.msra.mxu0 %v1590
    %1714 = vmatmul.f32.gmra.mxu0 %v1430
    %v1715 = vpop.f32.mrf.mxu0
    %v1716 = vadd.f32 0.0, %v1715
    %1717 = vmatmul.f32.gmra.mxu0 %v1431
    %v1718 = vpop.f32.mrf.mxu0
    %v1719 = vadd.f32 0.0, %v1718
    %1720 = vdwg.mxu0
    %1721 = vmatpush.msra.mxu0 %v1651
    %1722 = vmatpush.msra.mxu0 %v1647
    %1723 = vmatpush.msra.mxu0 %v1643
    %1724 = vmatpush.msra.mxu0 %v1639
    %1725 = vmatpush.msra.mxu0 %v1635
    %1726 = vmatpush.msra.mxu0 %v1631
    %1727 = vmatpush.msra.mxu0 %v1627
    %1728 = vmatpush.msra.mxu0 %v1623
    %1729 = vmatpush.msra.mxu0 %v1619
    %1730 = vmatpush.msra.mxu0 %v1615
    %1731 = vmatpush.msra.mxu0 %v1611
    %1732 = vmatpush.msra.mxu0 %v1607
    %1733 = vmatpush.msra.mxu0 %v1603
    %1734 = vmatpush.msra.mxu0 %v1599
    %1735 = vmatpush.msra.mxu0 %v1595
    %1736 = vmatpush.msra.mxu0 %v1591
    %1737 = vmatmul.f32.gmra.mxu0 %v1430
    %v1738 = vpop.f32.mrf.mxu0
    %v1739 = vadd.f32 0.0, %v1738
    %1740 = vmatmul.f32.gmra.mxu0 %v1431
    %v1741 = vpop.f32.mrf.mxu0
    %v1742 = vadd.f32 0.0, %v1741
    %1743 = vdwg.mxu0
    %v1744 = vxor.u32 %v1514, 2147483648
    %v1745 = vxor.u32 %v1537, 2147483648
    %v1746 = vxor.u32 %v1560, 2147483648
    %v1747 = vxor.u32 %v1583, 2147483648
    %v1748 = vxor.u32 %v1517, 2147483648
    %v1749 = vxor.u32 %v1540, 2147483648
    %v1750 = vxor.u32 %v1563, 2147483648
    %v1751 = vxor.u32 %v1586, 2147483648
    %v1752 = vmul.f32 %v1744, 1.442695
    %v1753 = vpow.pop %v1752
    %v1754 = vmul.f32 %v1745, 1.442695
    %v1755 = vpow.pop %v1754
    %v1756 = vmul.f32 %v1746, 1.442695
    %v1757 = vpow.pop %v1756
    %v1758 = vmul.f32 %v1747, 1.442695
    %v1759 = vpow.pop %v1758
    %v1760 = vmul.f32 %v1748, 1.442695
    %v1761 = vpow.pop %v1760
    %v1762 = vmul.f32 %v1749, 1.442695
    %v1763 = vpow.pop %v1762
    %v1764 = vmul.f32 %v1750, 1.442695
    %v1765 = vpow.pop %v1764
    %v1766 = vmul.f32 %v1751, 1.442695
    %v1767 = vpow.pop %v1766
    %v1768 = vadd.f32 %v1753, 1.0
    %v1769 = vadd.f32 %v1755, 1.0
    %v1770 = vadd.f32 %v1757, 1.0
    %v1771 = vadd.f32 %v1759, 1.0
    %v1772 = vadd.f32 %v1761, 1.0
    %v1773 = vadd.f32 %v1763, 1.0
    %v1774 = vadd.f32 %v1765, 1.0
    %v1775 = vadd.f32 %v1767, 1.0
    %v1776 = vrcp.pop %v1768
    %v1777 = vmul.f32 %v1768, %v1776
    %v1778 = vsub.f32 1.0, %v1777
    %v1779 = vmul.f32 %v1776, %v1778
    %v1780 = vadd.f32 %v1776, %v1779
    %vm1781 = vweird.f32 %v1768
    %vm1782 = vweird.f32 %v1776
    %vm1783 = vmor %vm1781, %vm1782
    %v1784 = vsel %vm1783, %v1776, %v1780
    %v1785 = vand.u32 2147483647, %v1768
    %vm1786 = vcmp.eq.f32.partialorder %v1785, 8.507059e+37
    %v1787 = vand.u32 %v1768, 2147483648
    %v1788 = vor.u32 1.1754944e-38, %v1787
    %v1789 = vsel %vm1786, %v1788, %v1784
    %v1790 = vmul.f32 1.0, %v1789
    %v1791 = vrcp.pop %v1769
    %v1792 = vmul.f32 %v1769, %v1791
    %v1793 = vsub.f32 1.0, %v1792
    %v1794 = vmul.f32 %v1791, %v1793
    %v1795 = vadd.f32 %v1791, %v1794
    %vm1796 = vweird.f32 %v1769
    %vm1797 = vweird.f32 %v1791
    %vm1798 = vmor %vm1796, %vm1797
    %v1799 = vsel %vm1798, %v1791, %v1795
    %v1800 = vand.u32 2147483647, %v1769
    %vm1801 = vcmp.eq.f32.partialorder %v1800, 8.507059e+37
    %v1802 = vand.u32 %v1769, 2147483648
    %v1803 = vor.u32 1.1754944e-38, %v1802
    %v1804 = vsel %vm1801, %v1803, %v1799
    %v1805 = vmul.f32 1.0, %v1804
    %v1806 = vrcp.pop %v1770
    %v1807 = vmul.f32 %v1770, %v1806
    %v1808 = vsub.f32 1.0, %v1807
    %v1809 = vmul.f32 %v1806, %v1808
    %v1810 = vadd.f32 %v1806, %v1809
    %vm1811 = vweird.f32 %v1770
    %vm1812 = vweird.f32 %v1806
    %vm1813 = vmor %vm1811, %vm1812
    %v1814 = vsel %vm1813, %v1806, %v1810
    %v1815 = vand.u32 2147483647, %v1770
    %vm1816 = vcmp.eq.f32.partialorder %v1815, 8.507059e+37
    %v1817 = vand.u32 %v1770, 2147483648
    %v1818 = vor.u32 1.1754944e-38, %v1817
    %v1819 = vsel %vm1816, %v1818, %v1814
    %v1820 = vmul.f32 1.0, %v1819
    %v1821 = vrcp.pop %v1771
    %v1822 = vmul.f32 %v1771, %v1821
    %v1823 = vsub.f32 1.0, %v1822
    %v1824 = vmul.f32 %v1821, %v1823
    %v1825 = vadd.f32 %v1821, %v1824
    %vm1826 = vweird.f32 %v1771
    %vm1827 = vweird.f32 %v1821
    %vm1828 = vmor %vm1826, %vm1827
    %v1829 = vsel %vm1828, %v1821, %v1825
    %v1830 = vand.u32 2147483647, %v1771
    %vm1831 = vcmp.eq.f32.partialorder %v1830, 8.507059e+37
    %v1832 = vand.u32 %v1771, 2147483648
    %v1833 = vor.u32 1.1754944e-38, %v1832
    %v1834 = vsel %vm1831, %v1833, %v1829
    %v1835 = vmul.f32 1.0, %v1834
    %v1836 = vrcp.pop %v1772
    %v1837 = vmul.f32 %v1772, %v1836
    %v1838 = vsub.f32 1.0, %v1837
    %v1839 = vmul.f32 %v1836, %v1838
    %v1840 = vadd.f32 %v1836, %v1839
    %vm1841 = vweird.f32 %v1772
    %vm1842 = vweird.f32 %v1836
    %vm1843 = vmor %vm1841, %vm1842
    %v1844 = vsel %vm1843, %v1836, %v1840
    %v1845 = vand.u32 2147483647, %v1772
    %vm1846 = vcmp.eq.f32.partialorder %v1845, 8.507059e+37
    %v1847 = vand.u32 %v1772, 2147483648
    %v1848 = vor.u32 1.1754944e-38, %v1847
    %v1849 = vsel %vm1846, %v1848, %v1844
    %v1850 = vmul.f32 1.0, %v1849
    %v1851 = vrcp.pop %v1773
    %v1852 = vmul.f32 %v1773, %v1851
    %v1853 = vsub.f32 1.0, %v1852
    %v1854 = vmul.f32 %v1851, %v1853
    %v1855 = vadd.f32 %v1851, %v1854
    %vm1856 = vweird.f32 %v1773
    %vm1857 = vweird.f32 %v1851
    %vm1858 = vmor %vm1856, %vm1857
    %v1859 = vsel %vm1858, %v1851, %v1855
    %v1860 = vand.u32 2147483647, %v1773
    %vm1861 = vcmp.eq.f32.partialorder %v1860, 8.507059e+37
    %v1862 = vand.u32 %v1773, 2147483648
    %v1863 = vor.u32 1.1754944e-38, %v1862
    %v1864 = vsel %vm1861, %v1863, %v1859
    %v1865 = vmul.f32 1.0, %v1864
    %v1866 = vrcp.pop %v1774
    %v1867 = vmul.f32 %v1774, %v1866
    %v1868 = vsub.f32 1.0, %v1867
    %v1869 = vmul.f32 %v1866, %v1868
    %v1870 = vadd.f32 %v1866, %v1869
    %vm1871 = vweird.f32 %v1774
    %vm1872 = vweird.f32 %v1866
    %vm1873 = vmor %vm1871, %vm1872
    %v1874 = vsel %vm1873, %v1866, %v1870
    %v1875 = vand.u32 2147483647, %v1774
    %vm1876 = vcmp.eq.f32.partialorder %v1875, 8.507059e+37
    %v1877 = vand.u32 %v1774, 2147483648
    %v1878 = vor.u32 1.1754944e-38, %v1877
    %v1879 = vsel %vm1876, %v1878, %v1874
    %v1880 = vmul.f32 1.0, %v1879
    %v1881 = vrcp.pop %v1775
    %v1882 = vmul.f32 %v1775, %v1881
    %v1883 = vsub.f32 1.0, %v1882
    %v1884 = vmul.f32 %v1881, %v1883
    %v1885 = vadd.f32 %v1881, %v1884
    %vm1886 = vweird.f32 %v1775
    %vm1887 = vweird.f32 %v1881
    %vm1888 = vmor %vm1886, %vm1887
    %v1889 = vsel %vm1888, %v1881, %v1885
    %v1890 = vand.u32 2147483647, %v1775
    %vm1891 = vcmp.eq.f32.partialorder %v1890, 8.507059e+37
    %v1892 = vand.u32 %v1775, 2147483648
    %v1893 = vor.u32 1.1754944e-38, %v1892
    %v1894 = vsel %vm1891, %v1893, %v1889
    %v1895 = vmul.f32 1.0, %v1894
    %v1896 = vmul.f32 %v1514, %v1790
    %v1897 = vmul.f32 %v1537, %v1805
    %v1898 = vmul.f32 %v1560, %v1820
    %v1899 = vmul.f32 %v1583, %v1835
    %v1900 = vmul.f32 %v1517, %v1850
    %v1901 = vmul.f32 %v1540, %v1865
    %v1902 = vmul.f32 %v1563, %v1880
    %v1903 = vmul.f32 %v1586, %v1895
    %v1904 = vmul.f32 %v1896, %v1670
    %v1905 = vmul.f32 %v1897, %v1693
    %v1906 = vmul.f32 %v1898, %v1716
    %v1907 = vmul.f32 %v1899, %v1739
    %v1908 = vmul.f32 %v1900, %v1673
    %v1909 = vmul.f32 %v1901, %v1696
    %v1910 = vmul.f32 %v1902, %v1719
    %v1911 = vmul.f32 %v1903, %v1742
    %v1912 = vld [vmem:[#allocation22] sm:$0xff]
    %v1913 = vld [vmem:[#allocation22 + $0x8] sm:$0xff]
    %v1914 = vld [vmem:[#allocation22 + $0x10] sm:$0xff]
    %v1915 = vld [vmem:[#allocation22 + $0x18] sm:$0xff]
    %v1916 = vld [vmem:[#allocation22 + $0x20] sm:$0xff]
    %v1917 = vld [vmem:[#allocation22 + $0x28] sm:$0xff]
    %v1918 = vld [vmem:[#allocation22 + $0x30] sm:$0xff]
    %v1919 = vld [vmem:[#allocation22 + $0x38] sm:$0xff]
    %v1920 = vld [vmem:[#allocation22 + $0x40] sm:$0xff]
    %v1921 = vld [vmem:[#allocation22 + $0x48] sm:$0xff]
    %v1922 = vld [vmem:[#allocation22 + $0x50] sm:$0xff]
    %v1923 = vld [vmem:[#allocation22 + $0x58] sm:$0xff]
    %v1924 = vld [vmem:[#allocation22 + $0x60] sm:$0xff]
    %v1925 = vld [vmem:[#allocation22 + $0x68] sm:$0xff]
    %v1926 = vld [vmem:[#allocation22 + $0x70] sm:$0xff]
    %v1927 = vld [vmem:[#allocation22 + $0x78] sm:$0xff]
    %v1928 = vld [vmem:[#allocation22 + $0x80] sm:$0xff]
    %v1929 = vld [vmem:[#allocation22 + $0x88] sm:$0xff]
    %v1930 = vld [vmem:[#allocation22 + $0x90] sm:$0xff]
    %v1931 = vld [vmem:[#allocation22 + $0x98] sm:$0xff]
    %v1932 = vld [vmem:[#allocation22 + $0xa0] sm:$0xff]
    %v1933 = vld [vmem:[#allocation22 + $0xa8] sm:$0xff]
    %v1934 = vld [vmem:[#allocation22 + $0xb0] sm:$0xff]
    %v1935 = vld [vmem:[#allocation22 + $0xb8] sm:$0xff]
    %v1936 = vld [vmem:[#allocation22 + $0xc0] sm:$0xff]
    %v1937 = vld [vmem:[#allocation22 + $0xc8] sm:$0xff]
    %v1938 = vld [vmem:[#allocation22 + $0xd0] sm:$0xff]
    %v1939 = vld [vmem:[#allocation22 + $0xd8] sm:$0xff]
    %v1940 = vld [vmem:[#allocation22 + $0xe0] sm:$0xff]
    %v1941 = vld [vmem:[#allocation22 + $0xe8] sm:$0xff]
    %v1942 = vld [vmem:[#allocation22 + $0xf0] sm:$0xff]
    %v1943 = vld [vmem:[#allocation22 + $0xf8] sm:$0xff]
    %v1944 = vld [vmem:[#allocation22 + $0x100] sm:$0xff]
    %v1945 = vld [vmem:[#allocation22 + $0x108] sm:$0xff]
    %v1946 = vld [vmem:[#allocation22 + $0x110] sm:$0xff]
    %v1947 = vld [vmem:[#allocation22 + $0x118] sm:$0xff]
    %v1948 = vld [vmem:[#allocation22 + $0x120] sm:$0xff]
    %v1949 = vld [vmem:[#allocation22 + $0x128] sm:$0xff]
    %v1950 = vld [vmem:[#allocation22 + $0x130] sm:$0xff]
    %v1951 = vld [vmem:[#allocation22 + $0x138] sm:$0xff]
    %v1952 = vld [vmem:[#allocation22 + $0x140] sm:$0xff]
    %v1953 = vld [vmem:[#allocation22 + $0x148] sm:$0xff]
    %v1954 = vld [vmem:[#allocation22 + $0x150] sm:$0xff]
    %v1955 = vld [vmem:[#allocation22 + $0x158] sm:$0xff]
    %v1956 = vld [vmem:[#allocation22 + $0x160] sm:$0xff]
    %v1957 = vld [vmem:[#allocation22 + $0x168] sm:$0xff]
    %v1958 = vld [vmem:[#allocation22 + $0x170] sm:$0xff]
    %v1959 = vld [vmem:[#allocation22 + $0x178] sm:$0xff]
    %v1960 = vld [vmem:[#allocation22 + $0x180] sm:$0xff]
    %v1961 = vld [vmem:[#allocation22 + $0x188] sm:$0xff]
    %v1962 = vld [vmem:[#allocation22 + $0x190] sm:$0xff]
    %v1963 = vld [vmem:[#allocation22 + $0x198] sm:$0xff]
    %v1964 = vld [vmem:[#allocation22 + $0x1a0] sm:$0xff]
    %v1965 = vld [vmem:[#allocation22 + $0x1a8] sm:$0xff]
    %v1966 = vld [vmem:[#allocation22 + $0x1b0] sm:$0xff]
    %v1967 = vld [vmem:[#allocation22 + $0x1b8] sm:$0xff]
    %v1968 = vld [vmem:[#allocation22 + $0x1c0] sm:$0xff]
    %v1969 = vld [vmem:[#allocation22 + $0x1c8] sm:$0xff]
    %v1970 = vld [vmem:[#allocation22 + $0x1d0] sm:$0xff]
    %v1971 = vld [vmem:[#allocation22 + $0x1d8] sm:$0xff]
    %v1972 = vld [vmem:[#allocation22 + $0x1e0] sm:$0xff]
    %v1973 = vld [vmem:[#allocation22 + $0x1e8] sm:$0xff]
    %v1974 = vld [vmem:[#allocation22 + $0x1f0] sm:$0xff]
    %v1975 = vld [vmem:[#allocation22 + $0x1f8] sm:$0xff]
    %1976 = vmatpush.msra.mxu0 %v1927
    %1977 = vmatpush.msra.mxu0 %v1926
    %1978 = vmatpush.msra.mxu0 %v1925
    %1979 = vmatpush.msra.mxu0 %v1924
    %1980 = vmatpush.msra.mxu0 %v1923
    %1981 = vmatpush.msra.mxu0 %v1922
    %1982 = vmatpush.msra.mxu0 %v1921
    %1983 = vmatpush.msra.mxu0 %v1920
    %1984 = vmatpush.msra.mxu0 %v1919
    %1985 = vmatpush.msra.mxu0 %v1918
    %1986 = vmatpush.msra.mxu0 %v1917
    %1987 = vmatpush.msra.mxu0 %v1916
    %1988 = vmatpush.msra.mxu0 %v1915
    %1989 = vmatpush.msra.mxu0 %v1914
    %1990 = vmatpush.msra.mxu0 %v1913
    %1991 = vmatpush.msra.mxu0 %v1912
    %1992 = vmatmul.f32.gmra.mxu0 %v1904
    %v1993 = vpop.f32.mrf.mxu0
    %v1994 = vadd.f32 0.0, %v1993
    %1995 = vmatmul.f32.gmra.mxu0 %v1908
    %v1996 = vpop.f32.mrf.mxu0
    %v1997 = vadd.f32 0.0, %v1996
    %1998 = vdwg.mxu0
    %1999 = vmatpush.msra.mxu0 %v1943
    %2000 = vmatpush.msra.mxu0 %v1942
    %2001 = vmatpush.msra.mxu0 %v1941
    %2002 = vmatpush.msra.mxu0 %v1940
    %2003 = vmatpush.msra.mxu0 %v1939
    %2004 = vmatpush.msra.mxu0 %v1938
    %2005 = vmatpush.msra.mxu0 %v1937
    %2006 = vmatpush.msra.mxu0 %v1936
    %2007 = vmatpush.msra.mxu0 %v1935
    %2008 = vmatpush.msra.mxu0 %v1934
    %2009 = vmatpush.msra.mxu0 %v1933
    %2010 = vmatpush.msra.mxu0 %v1932
    %2011 = vmatpush.msra.mxu0 %v1931
    %2012 = vmatpush.msra.mxu0 %v1930
    %2013 = vmatpush.msra.mxu0 %v1929
    %2014 = vmatpush.msra.mxu0 %v1928
    %2015 = vmatmul.f32.gmra.mxu0 %v1905
    %v2016 = vpop.f32.mrf.mxu0
    %v2017 = vadd.f32 %v1994, %v2016
    %2018 = vmatmul.f32.gmra.mxu0 %v1909
    %v2019 = vpop.f32.mrf.mxu0
    %v2020 = vadd.f32 %v1997, %v2019
    %2021 = vdwg.mxu0
    %2022 = vmatpush.msra.mxu0 %v1959
    %2023 = vmatpush.msra.mxu0 %v1958
    %2024 = vmatpush.msra.mxu0 %v1957
    %2025 = vmatpush.msra.mxu0 %v1956
    %2026 = vmatpush.msra.mxu0 %v1955
    %2027 = vmatpush.msra.mxu0 %v1954
    %2028 = vmatpush.msra.mxu0 %v1953
    %2029 = vmatpush.msra.mxu0 %v1952
    %2030 = vmatpush.msra.mxu0 %v1951
    %2031 = vmatpush.msra.mxu0 %v1950
    %2032 = vmatpush.msra.mxu0 %v1949
    %2033 = vmatpush.msra.mxu0 %v1948
    %2034 = vmatpush.msra.mxu0 %v1947
    %2035 = vmatpush.msra.mxu0 %v1946
    %2036 = vmatpush.msra.mxu0 %v1945
    %2037 = vmatpush.msra.mxu0 %v1944
    %2038 = vmatmul.f32.gmra.mxu0 %v1906
    %v2039 = vpop.f32.mrf.mxu0
    %v2040 = vadd.f32 %v2017, %v2039
    %2041 = vmatmul.f32.gmra.mxu0 %v1910
    %v2042 = vpop.f32.mrf.mxu0
    %v2043 = vadd.f32 %v2020, %v2042
    %2044 = vdwg.mxu0
    %2045 = vmatpush.msra.mxu0 %v1975
    %2046 = vmatpush.msra.mxu0 %v1974
    %2047 = vmatpush.msra.mxu0 %v1973
    %2048 = vmatpush.msra.mxu0 %v1972
    %2049 = vmatpush.msra.mxu0 %v1971
    %2050 = vmatpush.msra.mxu0 %v1970
    %2051 = vmatpush.msra.mxu0 %v1969
    %2052 = vmatpush.msra.mxu0 %v1968
    %2053 = vmatpush.msra.mxu0 %v1967
    %2054 = vmatpush.msra.mxu0 %v1966
    %2055 = vmatpush.msra.mxu0 %v1965
    %2056 = vmatpush.msra.mxu0 %v1964
    %2057 = vmatpush.msra.mxu0 %v1963
    %2058 = vmatpush.msra.mxu0 %v1962
    %2059 = vmatpush.msra.mxu0 %v1961
    %2060 = vmatpush.msra.mxu0 %v1960
    %2061 = vmatmul.f32.gmra.mxu0 %v1907
    %v2062 = vpop.f32.mrf.mxu0
    %v2063 = vadd.f32 %v2040, %v2062
    %2064 = vmatmul.f32.gmra.mxu0 %v1911
    %v2065 = vpop.f32.mrf.mxu0
    %v2066 = vadd.f32 %v2043, %v2065
    %2067 = vdwg.mxu0
    %v2068 = vmul.f32 %v639, %v2063
    %v2069 = vmul.f32 %v640, %v2066
    %v2070 = vld [vmem:[%s16] sm:$0x1]
    %v2071 = vld [vmem:[%s17] sm:$0x1]
    %2072 = vadd.xlane.f32.xlu0 %v2068
    %v2073 = vpop.xlane.xlu0 %2072
    %2074 = vadd.xlane.f32.xlu0 %v2069
    %v2075 = vpop.xlane.xlu0 %2074
    %v2076 = vmul.f32 %v2073, %v330
    %v2077 = vmul.f32 %v2075, %v330
    %v2078 = vsub.f32 %v2068, %v2076
    %v2079 = vsub.f32 %v2069, %v2077
    %v2080 = vmul.f32 %v2078, %v2078
    %v2081 = vmul.f32 %v2079, %v2079
    %2082 = vadd.xlane.f32.xlu0 %v2080
    %v2083 = vpop.xlane.xlu0 %2082
    %2084 = vadd.xlane.f32.xlu0 %v2081
    %v2085 = vpop.xlane.xlu0 %2084
    %v2086 = vmul.f32 %v2083, %v330
    %v2087 = vmul.f32 %v2085, %v330
    %v2088 = vadd.f32 %v2086, 1e-06
    %v2089 = vadd.f32 %v2087, 1e-06
    %v2090 = vrsqrt.pop %v2088
    %v2091 = vmul.f32 %v2090, %v2088
    %v2092 = vmul.f32 %v2091, %v2090
    %v2093 = vmul.f32 0.5, %v2092
    %v2094 = vsub.f32 1.5, %v2093
    %v2095 = vmul.f32 %v2090, %v2094
    %vm2096 = vweird.f32 %v2088
    %vm2097 = vweird.f32 %v2090
    %vm2098 = vmor %vm2096, %vm2097
    %v2099 = vsel %vm2098, %v2090, %v2095
    %v2100 = vrsqrt.pop %v2089
    %v2101 = vmul.f32 %v2100, %v2089
    %v2102 = vmul.f32 %v2101, %v2100
    %v2103 = vmul.f32 0.5, %v2102
    %v2104 = vsub.f32 1.5, %v2103
    %v2105 = vmul.f32 %v2100, %v2104
    %vm2106 = vweird.f32 %v2089
    %vm2107 = vweird.f32 %v2100
    %vm2108 = vmor %vm2106, %vm2107
    %v2109 = vsel %vm2108, %v2100, %v2105
    %v2110 = vmul.f32 %v2078, %v2099
    %v2111 = vmul.f32 %v2079, %v2109
    %v2113 = vperm.slane %v2070, 0
    %v2115 = vmul.f32 %v2110, %v2113
    %v2116 = vmul.f32 %v2111, %v2113
    %v2118 = vperm.slane %v2071, 0
    %v2120 = vadd.f32 %v2115, %v2118
    %v2121 = vadd.f32 %v2116, %v2118
    %v2122 = vadd.f32 %v1386, %v2120
    %v2123 = vadd.f32 %v1387, %v2121
    %2124 = vadd.xlane.f32.xlu0 %v2122
    %v2125 = vpop.xlane.xlu0 %2124
    %2126 = vadd.xlane.f32.xlu0 %v2123
    %v2127 = vpop.xlane.xlu0 %2126
    %v2128 = vmul.f32 %v2125, %v330
    %v2129 = vmul.f32 %v2127, %v330
    %v2130 = vsub.f32 %v2122, %v2128
    %v2131 = vsub.f32 %v2123, %v2129
    %v2132 = vmul.f32 %v2130, %v2130
    %v2133 = vmul.f32 %v2131, %v2131
    %2134 = vadd.xlane.f32.xlu0 %v2132
    %v2135 = vpop.xlane.xlu0 %2134
    %2136 = vadd.xlane.f32.xlu0 %v2133
    %v2137 = vpop.xlane.xlu0 %2136
    %v2138 = vmul.f32 %v2135, %v330
    %v2139 = vmul.f32 %v2137, %v330
    %v2140 = vadd.f32 %v2138, 1e-06
    %v2141 = vadd.f32 %v2139, 1e-06
    %v2142 = vrsqrt.pop %v2140
    %v2143 = vmul.f32 %v2142, %v2140
    %v2144 = vmul.f32 %v2143, %v2142
    %v2145 = vmul.f32 0.5, %v2144
    %v2146 = vsub.f32 1.5, %v2145
    %v2147 = vmul.f32 %v2142, %v2146
    %vm2148 = vweird.f32 %v2140
    %vm2149 = vweird.f32 %v2142
    %vm2150 = vmor %vm2148, %vm2149
    %v2151 = vsel %vm2150, %v2142, %v2147
    %v2152 = vrsqrt.pop %v2141
    %v2153 = vmul.f32 %v2152, %v2141
    %v2154 = vmul.f32 %v2153, %v2152
    %v2155 = vmul.f32 0.5, %v2154
    %v2156 = vsub.f32 1.5, %v2155
    %v2157 = vmul.f32 %v2152, %v2156
    %vm2158 = vweird.f32 %v2141
    %vm2159 = vweird.f32 %v2152
    %vm2160 = vmor %vm2158, %vm2159
    %v2161 = vsel %vm2160, %v2152, %v2157
    %v2162 = vmul.f32 %v2130, %v2151
    %v2163 = vmul.f32 %v2131, %v2161
    %v2164 = vmul.f32 %v2162, %v630
    %v2165 = vmul.f32 %v2163, %v631
    %v2166 = vadd.f32 %v2164, %v627
    %v2167 = vadd.f32 %v2165, %v628
    %s2168 = scalar_lea.vmem [#allocation14], 128
    %v2169 = vld [vmem:[%s2168] sm:$0xff]
    %v2170 = vld [vmem:[%s2168 + $0x8] sm:$0xff]
    %v2171 = vld [vmem:[%s2168 + $0x10] sm:$0xff]
    %v2172 = vld [vmem:[%s2168 + $0x18] sm:$0xff]
    %v2173 = vld [vmem:[%s2168 + $0x20] sm:$0xff]
    %v2174 = vld [vmem:[%s2168 + $0x28] sm:$0xff]
    %v2175 = vld [vmem:[%s2168 + $0x30] sm:$0xff]
    %v2176 = vld [vmem:[%s2168 + $0x38] sm:$0xff]
    %v2177 = vld [vmem:[%s2168 + $0x40] sm:$0xff]
    %v2178 = vld [vmem:[%s2168 + $0x48] sm:$0xff]
    %v2179 = vld [vmem:[%s2168 + $0x50] sm:$0xff]
    %v2180 = vld [vmem:[%s2168 + $0x58] sm:$0xff]
    %v2181 = vld [vmem:[%s2168 + $0x60] sm:$0xff]
    %v2182 = vld [vmem:[%s2168 + $0x68] sm:$0xff]
    %v2183 = vld [vmem:[%s2168 + $0x70] sm:$0xff]
    %v2184 = vld [vmem:[%s2168 + $0x78] sm:$0xff]
    %2185 = vmatpush.msra.mxu0 %v2184
    %2186 = vmatpush.msra.mxu0 %v2183
    %2187 = vmatpush.msra.mxu0 %v2182
    %2188 = vmatpush.msra.mxu0 %v2181
    %2189 = vmatpush.msra.mxu0 %v2180
    %2190 = vmatpush.msra.mxu0 %v2179
    %2191 = vmatpush.msra.mxu0 %v2178
    %2192 = vmatpush.msra.mxu0 %v2177
    %2193 = vmatpush.msra.mxu0 %v2176
    %2194 = vmatpush.msra.mxu0 %v2175
    %2195 = vmatpush.msra.mxu0 %v2174
    %2196 = vmatpush.msra.mxu0 %v2173
    %2197 = vmatpush.msra.mxu0 %v2172
    %2198 = vmatpush.msra.mxu0 %v2171
    %2199 = vmatpush.msra.mxu0 %v2170
    %2200 = vmatpush.msra.mxu0 %v2169
    %2201 = vmatmul.f32.gmra.mxu0 %v2166
    %v2202 = vpop.f32.mrf.mxu0
    %v2203 = vadd.f32 0.0, %v2202
    %2204 = vmatmul.f32.gmra.mxu0 %v2167
    %v2205 = vpop.f32.mrf.mxu0
    %v2206 = vadd.f32 0.0, %v2205
    %2207 = vdwg.mxu0
    %s2208 = scalar_lea.vmem [#allocation16], 128
    %v2209 = vld [vmem:[%s2208] sm:$0xff]
    %v2210 = vld [vmem:[%s2208 + $0x8] sm:$0xff]
    %v2211 = vld [vmem:[%s2208 + $0x10] sm:$0xff]
    %v2212 = vld [vmem:[%s2208 + $0x18] sm:$0xff]
    %v2213 = vld [vmem:[%s2208 + $0x20] sm:$0xff]
    %v2214 = vld [vmem:[%s2208 + $0x28] sm:$0xff]
    %v2215 = vld [vmem:[%s2208 + $0x30] sm:$0xff]
    %v2216 = vld [vmem:[%s2208 + $0x38] sm:$0xff]
    %v2217 = vld [vmem:[%s2208 + $0x40] sm:$0xff]
    %v2218 = vld [vmem:[%s2208 + $0x48] sm:$0xff]
    %v2219 = vld [vmem:[%s2208 + $0x50] sm:$0xff]
    %v2220 = vld [vmem:[%s2208 + $0x58] sm:$0xff]
    %v2221 = vld [vmem:[%s2208 + $0x60] sm:$0xff]
    %v2222 = vld [vmem:[%s2208 + $0x68] sm:$0xff]
    %v2223 = vld [vmem:[%s2208 + $0x70] sm:$0xff]
    %v2224 = vld [vmem:[%s2208 + $0x78] sm:$0xff]
    %2225 = vmatpush.msra.mxu0 %v2224
    %2226 = vmatpush.msra.mxu0 %v2223
    %2227 = vmatpush.msra.mxu0 %v2222
    %2228 = vmatpush.msra.mxu0 %v2221
    %2229 = vmatpush.msra.mxu0 %v2220
    %2230 = vmatpush.msra.mxu0 %v2219
    %2231 = vmatpush.msra.mxu0 %v2218
    %2232 = vmatpush.msra.mxu0 %v2217
    %2233 = vmatpush.msra.mxu0 %v2216
    %2234 = vmatpush.msra.mxu0 %v2215
    %2235 = vmatpush.msra.mxu0 %v2214
    %2236 = vmatpush.msra.mxu0 %v2213
    %2237 = vmatpush.msra.mxu0 %v2212
    %2238 = vmatpush.msra.mxu0 %v2211
    %2239 = vmatpush.msra.mxu0 %v2210
    %2240 = vmatpush.msra.mxu0 %v2209
    %2241 = vmatmul.f32.gmra.mxu0 %v2166
    %v2242 = vpop.f32.mrf.mxu0
    %v2243 = vadd.f32 0.0, %v2242
    %2244 = vmatmul.f32.gmra.mxu0 %v2167
    %v2245 = vpop.f32.mrf.mxu0
    %v2246 = vadd.f32 0.0, %v2245
    %2247 = vdwg.mxu0
    %s2248 = scalar_lea.vmem [#allocation17], 128
    %v2249 = vld [vmem:[%s2248] sm:$0xff]
    %v2250 = vld [vmem:[%s2248 + $0x8] sm:$0xff]
    %v2251 = vld [vmem:[%s2248 + $0x10] sm:$0xff]
    %v2252 = vld [vmem:[%s2248 + $0x18] sm:$0xff]
    %v2253 = vld [vmem:[%s2248 + $0x20] sm:$0xff]
    %v2254 = vld [vmem:[%s2248 + $0x28] sm:$0xff]
    %v2255 = vld [vmem:[%s2248 + $0x30] sm:$0xff]
    %v2256 = vld [vmem:[%s2248 + $0x38] sm:$0xff]
    %v2257 = vld [vmem:[%s2248 + $0x40] sm:$0xff]
    %v2258 = vld [vmem:[%s2248 + $0x48] sm:$0xff]
    %v2259 = vld [vmem:[%s2248 + $0x50] sm:$0xff]
    %v2260 = vld [vmem:[%s2248 + $0x58] sm:$0xff]
    %v2261 = vld [vmem:[%s2248 + $0x60] sm:$0xff]
    %v2262 = vld [vmem:[%s2248 + $0x68] sm:$0xff]
    %v2263 = vld [vmem:[%s2248 + $0x70] sm:$0xff]
    %v2264 = vld [vmem:[%s2248 + $0x78] sm:$0xff]
    %2265 = vmatpush.msra.mxu0 %v2264
    %2266 = vmatpush.msra.mxu0 %v2263
    %2267 = vmatpush.msra.mxu0 %v2262
    %2268 = vmatpush.msra.mxu0 %v2261
    %2269 = vmatpush.msra.mxu0 %v2260
    %2270 = vmatpush.msra.mxu0 %v2259
    %2271 = vmatpush.msra.mxu0 %v2258
    %2272 = vmatpush.msra.mxu0 %v2257
    %2273 = vmatpush.msra.mxu0 %v2256
    %2274 = vmatpush.msra.mxu0 %v2255
    %2275 = vmatpush.msra.mxu0 %v2254
    %2276 = vmatpush.msra.mxu0 %v2253
    %2277 = vmatpush.msra.mxu0 %v2252
    %2278 = vmatpush.msra.mxu0 %v2251
    %2279 = vmatpush.msra.mxu0 %v2250
    %2280 = vmatpush.msra.mxu0 %v2249
    %2281 = vmatmul.f32.gmra.mxu0 %v2166
    %v2282 = vpop.f32.mrf.mxu0
    %v2283 = vadd.f32 0.0, %v2282
    %2284 = vmatmul.f32.gmra.mxu0 %v2167
    %v2285 = vpop.f32.mrf.mxu0
    %v2286 = vadd.f32 0.0, %v2285
    %2287 = vdwg.mxu0
    %s2288 = scalar_lea.vmem [#allocation19], 128
    %v2289 = vld [vmem:[%s2288] sm:$0xff]
    %v2290 = vld [vmem:[%s2288 + $0x8] sm:$0xff]
    %v2291 = vld [vmem:[%s2288 + $0x10] sm:$0xff]
    %v2292 = vld [vmem:[%s2288 + $0x18] sm:$0xff]
    %v2293 = vld [vmem:[%s2288 + $0x20] sm:$0xff]
    %v2294 = vld [vmem:[%s2288 + $0x28] sm:$0xff]
    %v2295 = vld [vmem:[%s2288 + $0x30] sm:$0xff]
    %v2296 = vld [vmem:[%s2288 + $0x38] sm:$0xff]
    %v2297 = vld [vmem:[%s2288 + $0x40] sm:$0xff]
    %v2298 = vld [vmem:[%s2288 + $0x48] sm:$0xff]
    %v2299 = vld [vmem:[%s2288 + $0x50] sm:$0xff]
    %v2300 = vld [vmem:[%s2288 + $0x58] sm:$0xff]
    %v2301 = vld [vmem:[%s2288 + $0x60] sm:$0xff]
    %v2302 = vld [vmem:[%s2288 + $0x68] sm:$0xff]
    %v2303 = vld [vmem:[%s2288 + $0x70] sm:$0xff]
    %v2304 = vld [vmem:[%s2288 + $0x78] sm:$0xff]
    %v2306 = vsel %vm818, %v2203, 0
    %v2309 = vsel %vm818, %v2206, 0
    %v2312 = vsel %vm818, %v2243, 0
    %v2315 = vsel %vm818, %v2246, 0
    %2317 = vmatpush.xpose.msra.mxu0 0.0
    %2318 = vmatpush.xpose.msra.mxu0 0.0
    %2319 = vmatpush.xpose.msra.mxu0 0.0
    %2320 = vmatpush.xpose.msra.mxu0 0.0
    %2321 = vmatpush.xpose.msra.mxu0 0.0
    %2322 = vmatpush.xpose.msra.mxu0 0.0
    %2323 = vmatpush.xpose.msra.mxu0 0.0
    %2324 = vmatpush.xpose.msra.mxu0 0.0
    %2325 = vmatpush.xpose.msra.mxu0 0.0
    %2326 = vmatpush.xpose.msra.mxu0 0.0
    %2327 = vmatpush.xpose.msra.mxu0 0.0
    %2328 = vmatpush.xpose.msra.mxu0 0.0
    %2329 = vmatpush.xpose.msra.mxu0 0.0
    %2330 = vmatpush.xpose.msra.mxu0 0.0
    %2331 = vmatpush.xpose.msra.mxu0 %v2315
    %2332 = vmatpush.xpose.msra.mxu0 %v2312
    %2333 = vmatmul.f32.gmra.mxu0 %v2306
    %v2334 = vpop.f32.mrf.mxu0
    %v2335 = vadd.f32 0.0, %v2334
    %2336 = vmatmul.f32.gmra.mxu0 %v2309
    %v2337 = vpop.f32.mrf.mxu0
    %v2338 = vadd.f32 0.0, %v2337
    %2339 = vdwg.mxu0
    %v2340 = vmul.f32 %v2335, 0.17677669
    %v2341 = vmul.f32 %v2338, 0.17677669
    %v2342 = vadd.f32 %v2340, %v316
    %v2343 = vadd.f32 %v2341, %v317
    %v2344 = vsel %vm858, %v2342, -inf
    %2345 = vmax.xlane.f32.xlu0 %v2344
    %v2346 = vpop.xlane.xlu0 %2345
    %v2347 = vsel %vm858, %v2343, -inf
    %2348 = vmax.xlane.f32.xlu0 %v2347
    %v2349 = vpop.xlane.xlu0 %2348
    %v2350 = vsub.f32 %v2342, %v2346
    %v2351 = vsub.f32 %v2343, %v2349
    %v2352 = vmul.f32 %v2350, 1.442695
    %v2353 = vpow.pop %v2352
    %v2354 = vmul.f32 %v2351, 1.442695
    %v2355 = vpow.pop %v2354
    %v2356 = vsel %vm858, %v2353, 0.0
    %2357 = vadd.xlane.f32.xlu0 %v2356
    %v2358 = vpop.xlane.xlu0 %2357
    %v2359 = vsel %vm858, %v2355, 0.0
    %2360 = vadd.xlane.f32.xlu0 %v2359
    %v2361 = vpop.xlane.xlu0 %2360
    %v2362 = vrcp.pop %v2358
    %v2363 = vrcp.pop %v2361
    %v2364 = vmul.f32 %v2353, %v2362
    %v2365 = vmul.f32 %v2355, %v2363
    %v2367 = vsel %vm858, %v2364, 0
    %v2370 = vsel %vm858, %v2365, 0
    %2372 = vmatpush.msra.mxu0 0.0
    %2373 = vmatpush.msra.mxu0 0.0
    %2374 = vmatpush.msra.mxu0 0.0
    %2375 = vmatpush.msra.mxu0 0.0
    %2376 = vmatpush.msra.mxu0 0.0
    %2377 = vmatpush.msra.mxu0 0.0
    %2378 = vmatpush.msra.mxu0 0.0
    %2379 = vmatpush.msra.mxu0 0.0
    %2380 = vmatpush.msra.mxu0 0.0
    %2381 = vmatpush.msra.mxu0 0.0
    %2382 = vmatpush.msra.mxu0 0.0
    %2383 = vmatpush.msra.mxu0 0.0
    %2384 = vmatpush.msra.mxu0 0.0
    %2385 = vmatpush.msra.mxu0 0.0
    %2386 = vmatpush.msra.mxu0 %v2286
    %2387 = vmatpush.msra.mxu0 %v2283
    %2388 = vmatmul.f32.gmra.mxu0 %v2367
    %v2389 = vpop.f32.mrf.mxu0
    %v2390 = vadd.f32 0.0, %v2389
    %2391 = vmatmul.f32.gmra.mxu0 %v2370
    %v2392 = vpop.f32.mrf.mxu0
    %v2393 = vadd.f32 0.0, %v2392
    %2394 = vdwg.mxu0
    %2395 = vrot.lane.b32.xlu0 %v2203, 96
    %v2396 = vpop.permute.xlu0 %2395
    %2397 = vrot.lane.b32.xlu0 %v2206, 96
    %v2398 = vpop.permute.xlu0 %2397
    %2399 = vrot.lane.b32.xlu0 %v2243, 96
    %v2400 = vpop.permute.xlu0 %2399
    %2401 = vrot.lane.b32.xlu0 %v2246, 96
    %v2402 = vpop.permute.xlu0 %2401
    %v2403 = vsel %vm818, %v2396, 0
    %v2405 = vsel %vm818, %v2398, 0
    %v2407 = vsel %vm818, %v2400, 0
    %v2409 = vsel %vm818, %v2402, 0
    %2411 = vmatpush.xpose.msra.mxu0 0.0
    %2412 = vmatpush.xpose.msra.mxu0 0.0
    %2413 = vmatpush.xpose.msra.mxu0 0.0
    %2414 = vmatpush.xpose.msra.mxu0 0.0
    %2415 = vmatpush.xpose.msra.mxu0 0.0
    %2416 = vmatpush.xpose.msra.mxu0 0.0
    %2417 = vmatpush.xpose.msra.mxu0 0.0
    %2418 = vmatpush.xpose.msra.mxu0 0.0
    %2419 = vmatpush.xpose.msra.mxu0 0.0
    %2420 = vmatpush.xpose.msra.mxu0 0.0
    %2421 = vmatpush.xpose.msra.mxu0 0.0
    %2422 = vmatpush.xpose.msra.mxu0 0.0
    %2423 = vmatpush.xpose.msra.mxu0 0.0
    %2424 = vmatpush.xpose.msra.mxu0 0.0
    %2425 = vmatpush.xpose.msra.mxu0 %v2409
    %2426 = vmatpush.xpose.msra.mxu0 %v2407
    %2427 = vmatmul.f32.gmra.mxu0 %v2403
    %v2428 = vpop.f32.mrf.mxu0
    %v2429 = vadd.f32 0.0, %v2428
    %2430 = vmatmul.f32.gmra.mxu0 %v2405
    %v2431 = vpop.f32.mrf.mxu0
    %v2432 = vadd.f32 0.0, %v2431
    %2433 = vdwg.mxu0
    %v2434 = vmul.f32 %v2429, 0.17677669
    %v2435 = vmul.f32 %v2432, 0.17677669
    %v2436 = vadd.f32 %v2434, %v316
    %v2437 = vadd.f32 %v2435, %v317
    %v2438 = vsel %vm858, %v2436, -inf
    %2439 = vmax.xlane.f32.xlu0 %v2438
    %v2440 = vpop.xlane.xlu0 %2439
    %v2441 = vsel %vm858, %v2437, -inf
    %2442 = vmax.xlane.f32.xlu0 %v2441
    %v2443 = vpop.xlane.xlu0 %2442
    %v2444 = vsub.f32 %v2436, %v2440
    %v2445 = vsub.f32 %v2437, %v2443
    %v2446 = vmul.f32 %v2444, 1.442695
    %v2447 = vpow.pop %v2446
    %v2448 = vmul.f32 %v2445, 1.442695
    %v2449 = vpow.pop %v2448
    %v2450 = vsel %vm858, %v2447, 0.0
    %2451 = vadd.xlane.f32.xlu0 %v2450
    %v2452 = vpop.xlane.xlu0 %2451
    %v2453 = vsel %vm858, %v2449, 0.0
    %2454 = vadd.xlane.f32.xlu0 %v2453
    %v2455 = vpop.xlane.xlu0 %2454
    %v2456 = vrcp.pop %v2452
    %v2457 = vrcp.pop %v2455
    %v2458 = vmul.f32 %v2447, %v2456
    %v2459 = vmul.f32 %v2449, %v2457
    %2462 = vrot.lane.b32.xlu0 %v2283, 96
    %v2463 = vpop.permute.xlu0 %2462
    %2464 = vrot.lane.b32.xlu0 %v2286, 96
    %v2465 = vpop.permute.xlu0 %2464
    %v2469 = vsel %vm858, %v2458, 0
    %v2472 = vsel %vm858, %v2459, 0
    %2474 = vmatpush.msra.mxu0 0.0
    %2475 = vmatpush.msra.mxu0 0.0
    %2476 = vmatpush.msra.mxu0 0.0
    %2477 = vmatpush.msra.mxu0 0.0
    %2478 = vmatpush.msra.mxu0 0.0
    %2479 = vmatpush.msra.mxu0 0.0
    %2480 = vmatpush.msra.mxu0 0.0
    %2481 = vmatpush.msra.mxu0 0.0
    %2482 = vmatpush.msra.mxu0 0.0
    %2483 = vmatpush.msra.mxu0 0.0
    %2484 = vmatpush.msra.mxu0 0.0
    %2485 = vmatpush.msra.mxu0 0.0
    %2486 = vmatpush.msra.mxu0 0.0
    %2487 = vmatpush.msra.mxu0 0.0
    %2488 = vmatpush.msra.mxu0 %v2465
    %2489 = vmatpush.msra.mxu0 %v2463
    %2490 = vmatmul.f32.gmra.mxu0 %v2469
    %v2491 = vpop.f32.mrf.mxu0
    %v2492 = vadd.f32 0.0, %v2491
    %2493 = vmatmul.f32.gmra.mxu0 %v2472
    %v2494 = vpop.f32.mrf.mxu0
    %v2495 = vadd.f32 0.0, %v2494
    %2496 = vdwg.mxu0
    %v2498 = vsel %vm818, %v2492, 0
    %v2501 = vsel %vm818, %v2495, 0
    %2503 = vmatpush.msra.mxu0 0.0
    %2504 = vmatpush.msra.mxu0 0.0
    %2505 = vmatpush.msra.mxu0 0.0
    %2506 = vmatpush.msra.mxu0 0.0
    %2507 = vmatpush.msra.mxu0 0.0
    %2508 = vmatpush.msra.mxu0 0.0
    %2509 = vmatpush.msra.mxu0 0.0
    %2510 = vmatpush.msra.mxu0 0.0
    %2511 = vmatpush.msra.mxu0 0.0
    %2512 = vmatpush.msra.mxu0 0.0
    %2513 = vmatpush.msra.mxu0 0.0
    %2514 = vmatpush.msra.mxu0 0.0
    %2515 = vmatpush.msra.mxu0 %v2296
    %2516 = vmatpush.msra.mxu0 %v2295
    %2517 = vmatpush.msra.mxu0 %v2294
    %2518 = vmatpush.msra.mxu0 %v2293
    %2519 = vmatmul.f32.gmra.mxu0 %v2498
    %v2520 = vpop.f32.mrf.mxu0
    %v2521 = vadd.f32 0.0, %v2520
    %2522 = vmatmul.f32.gmra.mxu0 %v2501
    %v2523 = vpop.f32.mrf.mxu0
    %v2524 = vadd.f32 0.0, %v2523
    %2525 = vdwg.mxu0
    %v2527 = vsel %vm818, %v2390, 0
    %v2530 = vsel %vm818, %v2393, 0
    %2532 = vmatpush.msra.mxu0 0.0
    %2533 = vmatpush.msra.mxu0 0.0
    %2534 = vmatpush.msra.mxu0 0.0
    %2535 = vmatpush.msra.mxu0 0.0
    %2536 = vmatpush.msra.mxu0 0.0
    %2537 = vmatpush.msra.mxu0 0.0
    %2538 = vmatpush.msra.mxu0 0.0
    %2539 = vmatpush.msra.mxu0 0.0
    %2540 = vmatpush.msra.mxu0 0.0
    %2541 = vmatpush.msra.mxu0 0.0
    %2542 = vmatpush.msra.mxu0 0.0
    %2543 = vmatpush.msra.mxu0 0.0
    %2544 = vmatpush.msra.mxu0 %v2292
    %2545 = vmatpush.msra.mxu0 %v2291
    %2546 = vmatpush.msra.mxu0 %v2290
    %2547 = vmatpush.msra.mxu0 %v2289
    %2548 = vmatmul.f32.gmra.mxu0 %v2527
    %v2549 = vpop.f32.mrf.mxu0
    %v2550 = vadd.f32 %v2521, %v2549
    %2551 = vmatmul.f32.gmra.mxu0 %v2530
    %v2552 = vpop.f32.mrf.mxu0
    %v2553 = vadd.f32 %v2524, %v2552
    %2554 = vdwg.mxu0
    %2555 = vrot.lane.b32.xlu0 %v2203, 64
    %v2556 = vpop.permute.xlu0 %2555
    %2557 = vrot.lane.b32.xlu0 %v2206, 64
    %v2558 = vpop.permute.xlu0 %2557
    %2559 = vrot.lane.b32.xlu0 %v2243, 64
    %v2560 = vpop.permute.xlu0 %2559
    %2561 = vrot.lane.b32.xlu0 %v2246, 64
    %v2562 = vpop.permute.xlu0 %2561
    %v2563 = vsel %vm818, %v2556, 0
    %v2565 = vsel %vm818, %v2558, 0
    %v2567 = vsel %vm818, %v2560, 0
    %v2569 = vsel %vm818, %v2562, 0
    %2571 = vmatpush.xpose.msra.mxu0 0.0
    %2572 = vmatpush.xpose.msra.mxu0 0.0
    %2573 = vmatpush.xpose.msra.mxu0 0.0
    %2574 = vmatpush.xpose.msra.mxu0 0.0
    %2575 = vmatpush.xpose.msra.mxu0 0.0
    %2576 = vmatpush.xpose.msra.mxu0 0.0
    %2577 = vmatpush.xpose.msra.mxu0 0.0
    %2578 = vmatpush.xpose.msra.mxu0 0.0
    %2579 = vmatpush.xpose.msra.mxu0 0.0
    %2580 = vmatpush.xpose.msra.mxu0 0.0
    %2581 = vmatpush.xpose.msra.mxu0 0.0
    %2582 = vmatpush.xpose.msra.mxu0 0.0
    %2583 = vmatpush.xpose.msra.mxu0 0.0
    %2584 = vmatpush.xpose.msra.mxu0 0.0
    %2585 = vmatpush.xpose.msra.mxu0 %v2569
    %2586 = vmatpush.xpose.msra.mxu0 %v2567
    %2587 = vmatmul.f32.gmra.mxu0 %v2563
    %v2588 = vpop.f32.mrf.mxu0
    %v2589 = vadd.f32 0.0, %v2588
    %2590 = vmatmul.f32.gmra.mxu0 %v2565
    %v2591 = vpop.f32.mrf.mxu0
    %v2592 = vadd.f32 0.0, %v2591
    %2593 = vdwg.mxu0
    %v2594 = vmul.f32 %v2589, 0.17677669
    %v2595 = vmul.f32 %v2592, 0.17677669
    %v2596 = vadd.f32 %v2594, %v316
    %v2597 = vadd.f32 %v2595, %v317
    %v2598 = vsel %vm858, %v2596, -inf
    %2599 = vmax.xlane.f32.xlu0 %v2598
    %v2600 = vpop.xlane.xlu0 %2599
    %v2601 = vsel %vm858, %v2597, -inf
    %2602 = vmax.xlane.f32.xlu0 %v2601
    %v2603 = vpop.xlane.xlu0 %2602
    %v2604 = vsub.f32 %v2596, %v2600
    %v2605 = vsub.f32 %v2597, %v2603
    %v2606 = vmul.f32 %v2604, 1.442695
    %v2607 = vpow.pop %v2606
    %v2608 = vmul.f32 %v2605, 1.442695
    %v2609 = vpow.pop %v2608
    %v2610 = vsel %vm858, %v2607, 0.0
    %2611 = vadd.xlane.f32.xlu0 %v2610
    %v2612 = vpop.xlane.xlu0 %2611
    %v2613 = vsel %vm858, %v2609, 0.0
    %2614 = vadd.xlane.f32.xlu0 %v2613
    %v2615 = vpop.xlane.xlu0 %2614
    %v2616 = vrcp.pop %v2612
    %v2617 = vrcp.pop %v2615
    %v2618 = vmul.f32 %v2607, %v2616
    %v2619 = vmul.f32 %v2609, %v2617
    %2620 = vrot.lane.b32.xlu0 %v2283, 64
    %v2621 = vpop.permute.xlu0 %2620
    %2622 = vrot.lane.b32.xlu0 %v2286, 64
    %v2623 = vpop.permute.xlu0 %2622
    %v2627 = vsel %vm858, %v2618, 0
    %v2630 = vsel %vm858, %v2619, 0
    %2632 = vmatpush.msra.mxu0 0.0
    %2633 = vmatpush.msra.mxu0 0.0
    %2634 = vmatpush.msra.mxu0 0.0
    %2635 = vmatpush.msra.mxu0 0.0
    %2636 = vmatpush.msra.mxu0 0.0
    %2637 = vmatpush.msra.mxu0 0.0
    %2638 = vmatpush.msra.mxu0 0.0
    %2639 = vmatpush.msra.mxu0 0.0
    %2640 = vmatpush.msra.mxu0 0.0
    %2641 = vmatpush.msra.mxu0 0.0
    %2642 = vmatpush.msra.mxu0 0.0
    %2643 = vmatpush.msra.mxu0 0.0
    %2644 = vmatpush.msra.mxu0 0.0
    %2645 = vmatpush.msra.mxu0 0.0
    %2646 = vmatpush.msra.mxu0 %v2623
    %2647 = vmatpush.msra.mxu0 %v2621
    %2648 = vmatmul.f32.gmra.mxu0 %v2627
    %v2649 = vpop.f32.mrf.mxu0
    %v2650 = vadd.f32 0.0, %v2649
    %2651 = vmatmul.f32.gmra.mxu0 %v2630
    %v2652 = vpop.f32.mrf.mxu0
    %v2653 = vadd.f32 0.0, %v2652
    %2654 = vdwg.mxu0
    %v2656 = vsel %vm818, %v2650, 0
    %v2659 = vsel %vm818, %v2653, 0
    %2661 = vmatpush.msra.mxu0 0.0
    %2662 = vmatpush.msra.mxu0 0.0
    %2663 = vmatpush.msra.mxu0 0.0
    %2664 = vmatpush.msra.mxu0 0.0
    %2665 = vmatpush.msra.mxu0 0.0
    %2666 = vmatpush.msra.mxu0 0.0
    %2667 = vmatpush.msra.mxu0 0.0
    %2668 = vmatpush.msra.mxu0 0.0
    %2669 = vmatpush.msra.mxu0 0.0
    %2670 = vmatpush.msra.mxu0 0.0
    %2671 = vmatpush.msra.mxu0 0.0
    %2672 = vmatpush.msra.mxu0 0.0
    %2673 = vmatpush.msra.mxu0 %v2300
    %2674 = vmatpush.msra.mxu0 %v2299
    %2675 = vmatpush.msra.mxu0 %v2298
    %2676 = vmatpush.msra.mxu0 %v2297
    %2677 = vmatmul.f32.gmra.mxu0 %v2656
    %v2678 = vpop.f32.mrf.mxu0
    %v2679 = vadd.f32 0.0, %v2678
    %2680 = vmatmul.f32.gmra.mxu0 %v2659
    %v2681 = vpop.f32.mrf.mxu0
    %v2682 = vadd.f32 0.0, %v2681
    %2683 = vdwg.mxu0
    %v2684 = vadd.f32 %v2550, %v2679
    %v2685 = vadd.f32 %v2553, %v2682
    %2686 = vrot.lane.b32.xlu0 %v2203, 32
    %v2687 = vpop.permute.xlu0 %2686
    %2688 = vrot.lane.b32.xlu0 %v2206, 32
    %v2689 = vpop.permute.xlu0 %2688
    %2690 = vrot.lane.b32.xlu0 %v2243, 32
    %v2691 = vpop.permute.xlu0 %2690
    %2692 = vrot.lane.b32.xlu0 %v2246, 32
    %v2693 = vpop.permute.xlu0 %2692
    %v2694 = vsel %vm818, %v2687, 0
    %v2696 = vsel %vm818, %v2689, 0
    %v2698 = vsel %vm818, %v2691, 0
    %v2700 = vsel %vm818, %v2693, 0
    %2702 = vmatpush.xpose.msra.mxu0 0.0
    %2703 = vmatpush.xpose.msra.mxu0 0.0
    %2704 = vmatpush.xpose.msra.mxu0 0.0
    %2705 = vmatpush.xpose.msra.mxu0 0.0
    %2706 = vmatpush.xpose.msra.mxu0 0.0
    %2707 = vmatpush.xpose.msra.mxu0 0.0
    %2708 = vmatpush.xpose.msra.mxu0 0.0
    %2709 = vmatpush.xpose.msra.mxu0 0.0
    %2710 = vmatpush.xpose.msra.mxu0 0.0
    %2711 = vmatpush.xpose.msra.mxu0 0.0
    %2712 = vmatpush.xpose.msra.mxu0 0.0
    %2713 = vmatpush.xpose.msra.mxu0 0.0
    %2714 = vmatpush.xpose.msra.mxu0 0.0
    %2715 = vmatpush.xpose.msra.mxu0 0.0
    %2716 = vmatpush.xpose.msra.mxu0 %v2700
    %2717 = vmatpush.xpose.msra.mxu0 %v2698
    %2718 = vmatmul.f32.gmra.mxu0 %v2694
    %v2719 = vpop.f32.mrf.mxu0
    %v2720 = vadd.f32 0.0, %v2719
    %2721 = vmatmul.f32.gmra.mxu0 %v2696
    %v2722 = vpop.f32.mrf.mxu0
    %v2723 = vadd.f32 0.0, %v2722
    %2724 = vdwg.mxu0
    %v2725 = vmul.f32 %v2720, 0.17677669
    %v2726 = vmul.f32 %v2723, 0.17677669
    %v2727 = vadd.f32 %v2725, %v316
    %v2728 = vadd.f32 %v2726, %v317
    %v2729 = vsel %vm858, %v2727, -inf
    %2730 = vmax.xlane.f32.xlu0 %v2729
    %v2731 = vpop.xlane.xlu0 %2730
    %v2732 = vsel %vm858, %v2728, -inf
    %2733 = vmax.xlane.f32.xlu0 %v2732
    %v2734 = vpop.xlane.xlu0 %2733
    %v2735 = vsub.f32 %v2727, %v2731
    %v2736 = vsub.f32 %v2728, %v2734
    %v2737 = vmul.f32 %v2735, 1.442695
    %v2738 = vpow.pop %v2737
    %v2739 = vmul.f32 %v2736, 1.442695
    %v2740 = vpow.pop %v2739
    %v2741 = vsel %vm858, %v2738, 0.0
    %2742 = vadd.xlane.f32.xlu0 %v2741
    %v2743 = vpop.xlane.xlu0 %2742
    %v2744 = vsel %vm858, %v2740, 0.0
    %2745 = vadd.xlane.f32.xlu0 %v2744
    %v2746 = vpop.xlane.xlu0 %2745
    %v2747 = vrcp.pop %v2743
    %v2748 = vrcp.pop %v2746
    %v2749 = vmul.f32 %v2738, %v2747
    %v2750 = vmul.f32 %v2740, %v2748
    %2751 = vrot.lane.b32.xlu0 %v2283, 32
    %v2752 = vpop.permute.xlu0 %2751
    %2753 = vrot.lane.b32.xlu0 %v2286, 32
    %v2754 = vpop.permute.xlu0 %2753
    %v2758 = vsel %vm858, %v2749, 0
    %v2761 = vsel %vm858, %v2750, 0
    %2763 = vmatpush.msra.mxu0 0.0
    %2764 = vmatpush.msra.mxu0 0.0
    %2765 = vmatpush.msra.mxu0 0.0
    %2766 = vmatpush.msra.mxu0 0.0
    %2767 = vmatpush.msra.mxu0 0.0
    %2768 = vmatpush.msra.mxu0 0.0
    %2769 = vmatpush.msra.mxu0 0.0
    %2770 = vmatpush.msra.mxu0 0.0
    %2771 = vmatpush.msra.mxu0 0.0
    %2772 = vmatpush.msra.mxu0 0.0
    %2773 = vmatpush.msra.mxu0 0.0
    %2774 = vmatpush.msra.mxu0 0.0
    %2775 = vmatpush.msra.mxu0 0.0
    %2776 = vmatpush.msra.mxu0 0.0
    %2777 = vmatpush.msra.mxu0 %v2754
    %2778 = vmatpush.msra.mxu0 %v2752
    %2779 = vmatmul.f32.gmra.mxu0 %v2758
    %v2780 = vpop.f32.mrf.mxu0
    %v2781 = vadd.f32 0.0, %v2780
    %2782 = vmatmul.f32.gmra.mxu0 %v2761
    %v2783 = vpop.f32.mrf.mxu0
    %v2784 = vadd.f32 0.0, %v2783
    %2785 = vdwg.mxu0
    %v2787 = vsel %vm818, %v2781, 0
    %v2790 = vsel %vm818, %v2784, 0
    %2792 = vmatpush.msra.mxu0 0.0
    %2793 = vmatpush.msra.mxu0 0.0
    %2794 = vmatpush.msra.mxu0 0.0
    %2795 = vmatpush.msra.mxu0 0.0
    %2796 = vmatpush.msra.mxu0 0.0
    %2797 = vmatpush.msra.mxu0 0.0
    %2798 = vmatpush.msra.mxu0 0.0
    %2799 = vmatpush.msra.mxu0 0.0
    %2800 = vmatpush.msra.mxu0 0.0
    %2801 = vmatpush.msra.mxu0 0.0
    %2802 = vmatpush.msra.mxu0 0.0
    %2803 = vmatpush.msra.mxu0 0.0
    %2804 = vmatpush.msra.mxu0 %v2304
    %2805 = vmatpush.msra.mxu0 %v2303
    %2806 = vmatpush.msra.mxu0 %v2302
    %2807 = vmatpush.msra.mxu0 %v2301
    %2808 = vmatmul.f32.gmra.mxu0 %v2787
    %v2809 = vpop.f32.mrf.mxu0
    %v2810 = vadd.f32 0.0, %v2809
    %2811 = vmatmul.f32.gmra.mxu0 %v2790
    %v2812 = vpop.f32.mrf.mxu0
    %v2813 = vadd.f32 0.0, %v2812
    %2814 = vdwg.mxu0
    %v2815 = vadd.f32 %v2684, %v2810
    %v2816 = vadd.f32 %v2685, %v2813
    %v2817 = vmul.f32 %v632, %v2815
    %v2818 = vmul.f32 %v633, %v2816
    %s2819 = scalar_lea.vmem %s14, 1
    %v2820 = vld [vmem:[%s2819] sm:$0x1]
    %s2821 = scalar_lea.vmem %s15, 1
    %v2822 = vld [vmem:[%s2821] sm:$0x1]
    %2823 = vadd.xlane.f32.xlu0 %v2817
    %v2824 = vpop.xlane.xlu0 %2823
    %2825 = vadd.xlane.f32.xlu0 %v2818
    %v2826 = vpop.xlane.xlu0 %2825
    %v2827 = vmul.f32 %v2824, %v330
    %v2828 = vmul.f32 %v2826, %v330
    %v2829 = vsub.f32 %v2817, %v2827
    %v2830 = vsub.f32 %v2818, %v2828
    %v2831 = vmul.f32 %v2829, %v2829
    %v2832 = vmul.f32 %v2830, %v2830
    %2833 = vadd.xlane.f32.xlu0 %v2831
    %v2834 = vpop.xlane.xlu0 %2833
    %2835 = vadd.xlane.f32.xlu0 %v2832
    %v2836 = vpop.xlane.xlu0 %2835
    %v2837 = vmul.f32 %v2834, %v330
    %v2838 = vmul.f32 %v2836, %v330
    %v2839 = vadd.f32 %v2837, 1e-06
    %v2840 = vadd.f32 %v2838, 1e-06
    %v2841 = vrsqrt.pop %v2839
    %v2842 = vmul.f32 %v2841, %v2839
    %v2843 = vmul.f32 %v2842, %v2841
    %v2844 = vmul.f32 0.5, %v2843
    %v2845 = vsub.f32 1.5, %v2844
    %v2846 = vmul.f32 %v2841, %v2845
    %vm2847 = vweird.f32 %v2839
    %vm2848 = vweird.f32 %v2841
    %vm2849 = vmor %vm2847, %vm2848
    %v2850 = vsel %vm2849, %v2841, %v2846
    %v2851 = vrsqrt.pop %v2840
    %v2852 = vmul.f32 %v2851, %v2840
    %v2853 = vmul.f32 %v2852, %v2851
    %v2854 = vmul.f32 0.5, %v2853
    %v2855 = vsub.f32 1.5, %v2854
    %v2856 = vmul.f32 %v2851, %v2855
    %vm2857 = vweird.f32 %v2840
    %vm2858 = vweird.f32 %v2851
    %vm2859 = vmor %vm2857, %vm2858
    %v2860 = vsel %vm2859, %v2851, %v2856
    %v2861 = vmul.f32 %v2829, %v2850
    %v2862 = vmul.f32 %v2830, %v2860
    %v2864 = vperm.slane %v2820, 0
    %v2866 = vmul.f32 %v2861, %v2864
    %v2867 = vmul.f32 %v2862, %v2864
    %v2869 = vperm.slane %v2822, 0
    %v2871 = vadd.f32 %v2866, %v2869
    %v2872 = vadd.f32 %v2867, %v2869
    %v2873 = vadd.f32 %v2122, %v2871
    %v2874 = vadd.f32 %v2123, %v2872
    %2875 = vadd.xlane.f32.xlu0 %v2873
    %v2876 = vpop.xlane.xlu0 %2875
    %2877 = vadd.xlane.f32.xlu0 %v2874
    %v2878 = vpop.xlane.xlu0 %2877
    %v2879 = vmul.f32 %v2876, %v330
    %v2880 = vmul.f32 %v2878, %v330
    %v2881 = vsub.f32 %v2873, %v2879
    %v2882 = vsub.f32 %v2874, %v2880
    %v2883 = vmul.f32 %v2881, %v2881
    %v2884 = vmul.f32 %v2882, %v2882
    %2885 = vadd.xlane.f32.xlu0 %v2883
    %v2886 = vpop.xlane.xlu0 %2885
    %2887 = vadd.xlane.f32.xlu0 %v2884
    %v2888 = vpop.xlane.xlu0 %2887
    %v2889 = vmul.f32 %v2886, %v330
    %v2890 = vmul.f32 %v2888, %v330
    %v2891 = vadd.f32 %v2889, 1e-06
    %v2892 = vadd.f32 %v2890, 1e-06
    %v2893 = vrsqrt.pop %v2891
    %v2894 = vmul.f32 %v2893, %v2891
    %v2895 = vmul.f32 %v2894, %v2893
    %v2896 = vmul.f32 0.5, %v2895
    %v2897 = vsub.f32 1.5, %v2896
    %v2898 = vmul.f32 %v2893, %v2897
    %vm2899 = vweird.f32 %v2891
    %vm2900 = vweird.f32 %v2893
    %vm2901 = vmor %vm2899, %vm2900
    %v2902 = vsel %vm2901, %v2893, %v2898
    %v2903 = vrsqrt.pop %v2892
    %v2904 = vmul.f32 %v2903, %v2892
    %v2905 = vmul.f32 %v2904, %v2903
    %v2906 = vmul.f32 0.5, %v2905
    %v2907 = vsub.f32 1.5, %v2906
    %v2908 = vmul.f32 %v2903, %v2907
    %vm2909 = vweird.f32 %v2892
    %vm2910 = vweird.f32 %v2903
    %vm2911 = vmor %vm2909, %vm2910
    %v2912 = vsel %vm2911, %v2903, %v2908
    %v2913 = vmul.f32 %v2881, %v2902
    %v2914 = vmul.f32 %v2882, %v2912
    %v2915 = vmul.f32 %v2913, %v637
    %v2916 = vmul.f32 %v2914, %v638
    %v2917 = vadd.f32 %v2915, %v634
    %v2918 = vadd.f32 %v2916, %v635
    %s2919 = scalar_lea.vmem [#allocation20], 512
    %v2920 = vld [vmem:[%s2919] sm:$0xff]
    %v2921 = vld [vmem:[%s2919 + $0x8] sm:$0xff]
    %v2922 = vld [vmem:[%s2919 + $0x10] sm:$0xff]
    %v2923 = vld [vmem:[%s2919 + $0x18] sm:$0xff]
    %v2924 = vld [vmem:[%s2919 + $0x20] sm:$0xff]
    %v2925 = vld [vmem:[%s2919 + $0x28] sm:$0xff]
    %v2926 = vld [vmem:[%s2919 + $0x30] sm:$0xff]
    %v2927 = vld [vmem:[%s2919 + $0x38] sm:$0xff]
    %v2928 = vld [vmem:[%s2919 + $0x40] sm:$0xff]
    %v2929 = vld [vmem:[%s2919 + $0x48] sm:$0xff]
    %v2930 = vld [vmem:[%s2919 + $0x50] sm:$0xff]
    %v2931 = vld [vmem:[%s2919 + $0x58] sm:$0xff]
    %v2932 = vld [vmem:[%s2919 + $0x60] sm:$0xff]
    %v2933 = vld [vmem:[%s2919 + $0x68] sm:$0xff]
    %v2934 = vld [vmem:[%s2919 + $0x70] sm:$0xff]
    %v2935 = vld [vmem:[%s2919 + $0x78] sm:$0xff]
    %v2936 = vld [vmem:[%s2919 + $0x80] sm:$0xff]
    %v2937 = vld [vmem:[%s2919 + $0x88] sm:$0xff]
    %v2938 = vld [vmem:[%s2919 + $0x90] sm:$0xff]
    %v2939 = vld [vmem:[%s2919 + $0x98] sm:$0xff]
    %v2940 = vld [vmem:[%s2919 + $0xa0] sm:$0xff]
    %v2941 = vld [vmem:[%s2919 + $0xa8] sm:$0xff]
    %v2942 = vld [vmem:[%s2919 + $0xb0] sm:$0xff]
    %v2943 = vld [vmem:[%s2919 + $0xb8] sm:$0xff]
    %v2944 = vld [vmem:[%s2919 + $0xc0] sm:$0xff]
    %v2945 = vld [vmem:[%s2919 + $0xc8] sm:$0xff]
    %v2946 = vld [vmem:[%s2919 + $0xd0] sm:$0xff]
    %v2947 = vld [vmem:[%s2919 + $0xd8] sm:$0xff]
    %v2948 = vld [vmem:[%s2919 + $0xe0] sm:$0xff]
    %v2949 = vld [vmem:[%s2919 + $0xe8] sm:$0xff]
    %v2950 = vld [vmem:[%s2919 + $0xf0] sm:$0xff]
    %v2951 = vld [vmem:[%s2919 + $0xf8] sm:$0xff]
    %v2952 = vld [vmem:[%s2919 + $0x100] sm:$0xff]
    %v2953 = vld [vmem:[%s2919 + $0x108] sm:$0xff]
    %v2954 = vld [vmem:[%s2919 + $0x110] sm:$0xff]
    %v2955 = vld [vmem:[%s2919 + $0x118] sm:$0xff]
    %v2956 = vld [vmem:[%s2919 + $0x120] sm:$0xff]
    %v2957 = vld [vmem:[%s2919 + $0x128] sm:$0xff]
    %v2958 = vld [vmem:[%s2919 + $0x130] sm:$0xff]
    %v2959 = vld [vmem:[%s2919 + $0x138] sm:$0xff]
    %v2960 = vld [vmem:[%s2919 + $0x140] sm:$0xff]
    %v2961 = vld [vmem:[%s2919 + $0x148] sm:$0xff]
    %v2962 = vld [vmem:[%s2919 + $0x150] sm:$0xff]
    %v2963 = vld [vmem:[%s2919 + $0x158] sm:$0xff]
    %v2964 = vld [vmem:[%s2919 + $0x160] sm:$0xff]
    %v2965 = vld [vmem:[%s2919 + $0x168] sm:$0xff]
    %v2966 = vld [vmem:[%s2919 + $0x170] sm:$0xff]
    %v2967 = vld [vmem:[%s2919 + $0x178] sm:$0xff]
    %v2968 = vld [vmem:[%s2919 + $0x180] sm:$0xff]
    %v2969 = vld [vmem:[%s2919 + $0x188] sm:$0xff]
    %v2970 = vld [vmem:[%s2919 + $0x190] sm:$0xff]
    %v2971 = vld [vmem:[%s2919 + $0x198] sm:$0xff]
    %v2972 = vld [vmem:[%s2919 + $0x1a0] sm:$0xff]
    %v2973 = vld [vmem:[%s2919 + $0x1a8] sm:$0xff]
    %v2974 = vld [vmem:[%s2919 + $0x1b0] sm:$0xff]
    %v2975 = vld [vmem:[%s2919 + $0x1b8] sm:$0xff]
    %v2976 = vld [vmem:[%s2919 + $0x1c0] sm:$0xff]
    %v2977 = vld [vmem:[%s2919 + $0x1c8] sm:$0xff]
    %v2978 = vld [vmem:[%s2919 + $0x1d0] sm:$0xff]
    %v2979 = vld [vmem:[%s2919 + $0x1d8] sm:$0xff]
    %v2980 = vld [vmem:[%s2919 + $0x1e0] sm:$0xff]
    %v2981 = vld [vmem:[%s2919 + $0x1e8] sm:$0xff]
    %v2982 = vld [vmem:[%s2919 + $0x1f0] sm:$0xff]
    %v2983 = vld [vmem:[%s2919 + $0x1f8] sm:$0xff]
    %2984 = vmatpush.msra.mxu0 %v2980
    %2985 = vmatpush.msra.mxu0 %v2976
    %2986 = vmatpush.msra.mxu0 %v2972
    %2987 = vmatpush.msra.mxu0 %v2968
    %2988 = vmatpush.msra.mxu0 %v2964
    %2989 = vmatpush.msra.mxu0 %v2960
    %2990 = vmatpush.msra.mxu0 %v2956
    %2991 = vmatpush.msra.mxu0 %v2952
    %2992 = vmatpush.msra.mxu0 %v2948
    %2993 = vmatpush.msra.mxu0 %v2944
    %2994 = vmatpush.msra.mxu0 %v2940
    %2995 = vmatpush.msra.mxu0 %v2936
    %2996 = vmatpush.msra.mxu0 %v2932
    %2997 = vmatpush.msra.mxu0 %v2928
    %2998 = vmatpush.msra.mxu0 %v2924
    %2999 = vmatpush.msra.mxu0 %v2920
    %3000 = vmatmul.f32.gmra.mxu0 %v2917
    %v3001 = vpop.f32.mrf.mxu0
    %v3002 = vadd.f32 0.0, %v3001
    %3003 = vmatmul.f32.gmra.mxu0 %v2918
    %v3004 = vpop.f32.mrf.mxu0
    %v3005 = vadd.f32 0.0, %v3004
    %3006 = vdwg.mxu0
    %3007 = vmatpush.msra.mxu0 %v2981
    %3008 = vmatpush.msra.mxu0 %v2977
    %3009 = vmatpush.msra.mxu0 %v2973
    %3010 = vmatpush.msra.mxu0 %v2969
    %3011 = vmatpush.msra.mxu0 %v2965
    %3012 = vmatpush.msra.mxu0 %v2961
    %3013 = vmatpush.msra.mxu0 %v2957
    %3014 = vmatpush.msra.mxu0 %v2953
    %3015 = vmatpush.msra.mxu0 %v2949
    %3016 = vmatpush.msra.mxu0 %v2945
    %3017 = vmatpush.msra.mxu0 %v2941
    %3018 = vmatpush.msra.mxu0 %v2937
    %3019 = vmatpush.msra.mxu0 %v2933
    %3020 = vmatpush.msra.mxu0 %v2929
    %3021 = vmatpush.msra.mxu0 %v2925
    %3022 = vmatpush.msra.mxu0 %v2921
    %3023 = vmatmul.f32.gmra.mxu0 %v2917
    %v3024 = vpop.f32.mrf.mxu0
    %v3025 = vadd.f32 0.0, %v3024
    %3026 = vmatmul.f32.gmra.mxu0 %v2918
    %v3027 = vpop.f32.mrf.mxu0
    %v3028 = vadd.f32 0.0, %v3027
    %3029 = vdwg.mxu0
    %3030 = vmatpush.msra.mxu0 %v2982
    %3031 = vmatpush.msra.mxu0 %v2978
    %3032 = vmatpush.msra.mxu0 %v2974
    %3033 = vmatpush.msra.mxu0 %v2970
    %3034 = vmatpush.msra.mxu0 %v2966
    %3035 = vmatpush.msra.mxu0 %v2962
    %3036 = vmatpush.msra.mxu0 %v2958
    %3037 = vmatpush.msra.mxu0 %v2954
    %3038 = vmatpush.msra.mxu0 %v2950
    %3039 = vmatpush.msra.mxu0 %v2946
    %3040 = vmatpush.msra.mxu0 %v2942
    %3041 = vmatpush.msra.mxu0 %v2938
    %3042 = vmatpush.msra.mxu0 %v2934
    %3043 = vmatpush.msra.mxu0 %v2930
    %3044 = vmatpush.msra.mxu0 %v2926
    %3045 = vmatpush.msra.mxu0 %v2922
    %3046 = vmatmul.f32.gmra.mxu0 %v2917
    %v3047 = vpop.f32.mrf.mxu0
    %v3048 = vadd.f32 0.0, %v3047
    %3049 = vmatmul.f32.gmra.mxu0 %v2918
    %v3050 = vpop.f32.mrf.mxu0
    %v3051 = vadd.f32 0.0, %v3050
    %3052 = vdwg.mxu0
    %3053 = vmatpush.msra.mxu0 %v2983
    %3054 = vmatpush.msra.mxu0 %v2979
    %3055 = vmatpush.msra.mxu0 %v2975
    %3056 = vmatpush.msra.mxu0 %v2971
    %3057 = vmatpush.msra.mxu0 %v2967
    %3058 = vmatpush.msra.mxu0 %v2963
    %3059 = vmatpush.msra.mxu0 %v2959
    %3060 = vmatpush.msra.mxu0 %v2955
    %3061 = vmatpush.msra.mxu0 %v2951
    %3062 = vmatpush.msra.mxu0 %v2947
    %3063 = vmatpush.msra.mxu0 %v2943
    %3064 = vmatpush.msra.mxu0 %v2939
    %3065 = vmatpush.msra.mxu0 %v2935
    %3066 = vmatpush.msra.mxu0 %v2931
    %3067 = vmatpush.msra.mxu0 %v2927
    %3068 = vmatpush.msra.mxu0 %v2923
    %3069 = vmatmul.f32.gmra.mxu0 %v2917
    %v3070 = vpop.f32.mrf.mxu0
    %v3071 = vadd.f32 0.0, %v3070
    %3072 = vmatmul.f32.gmra.mxu0 %v2918
    %v3073 = vpop.f32.mrf.mxu0
    %v3074 = vadd.f32 0.0, %v3073
    %3075 = vdwg.mxu0
    %s3076 = scalar_lea.vmem [#allocation23], 512
    %v3077 = vld [vmem:[%s3076] sm:$0xff]
    %v3078 = vld [vmem:[%s3076 + $0x8] sm:$0xff]
    %v3079 = vld [vmem:[%s3076 + $0x10] sm:$0xff]
    %v3080 = vld [vmem:[%s3076 + $0x18] sm:$0xff]
    %v3081 = vld [vmem:[%s3076 + $0x20] sm:$0xff]
    %v3082 = vld [vmem:[%s3076 + $0x28] sm:$0xff]
    %v3083 = vld [vmem:[%s3076 + $0x30] sm:$0xff]
    %v3084 = vld [vmem:[%s3076 + $0x38] sm:$0xff]
    %v3085 = vld [vmem:[%s3076 + $0x40] sm:$0xff]
    %v3086 = vld [vmem:[%s3076 + $0x48] sm:$0xff]
    %v3087 = vld [vmem:[%s3076 + $0x50] sm:$0xff]
    %v3088 = vld [vmem:[%s3076 + $0x58] sm:$0xff]
    %v3089 = vld [vmem:[%s3076 + $0x60] sm:$0xff]
    %v3090 = vld [vmem:[%s3076 + $0x68] sm:$0xff]
    %v3091 = vld [vmem:[%s3076 + $0x70] sm:$0xff]
    %v3092 = vld [vmem:[%s3076 + $0x78] sm:$0xff]
    %v3093 = vld [vmem:[%s3076 + $0x80] sm:$0xff]
    %v3094 = vld [vmem:[%s3076 + $0x88] sm:$0xff]
    %v3095 = vld [vmem:[%s3076 + $0x90] sm:$0xff]
    %v3096 = vld [vmem:[%s3076 + $0x98] sm:$0xff]
    %v3097 = vld [vmem:[%s3076 + $0xa0] sm:$0xff]
    %v3098 = vld [vmem:[%s3076 + $0xa8] sm:$0xff]
    %v3099 = vld [vmem:[%s3076 + $0xb0] sm:$0xff]
    %v3100 = vld [vmem:[%s3076 + $0xb8] sm:$0xff]
    %v3101 = vld [vmem:[%s3076 + $0xc0] sm:$0xff]
    %v3102 = vld [vmem:[%s3076 + $0xc8] sm:$0xff]
    %v3103 = vld [vmem:[%s3076 + $0xd0] sm:$0xff]
    %v3104 = vld [vmem:[%s3076 + $0xd8] sm:$0xff]
    %v3105 = vld [vmem:[%s3076 + $0xe0] sm:$0xff]
    %v3106 = vld [vmem:[%s3076 + $0xe8] sm:$0xff]
    %v3107 = vld [vmem:[%s3076 + $0xf0] sm:$0xff]
    %v3108 = vld [vmem:[%s3076 + $0xf8] sm:$0xff]
    %v3109 = vld [vmem:[%s3076 + $0x100] sm:$0xff]
    %v3110 = vld [vmem:[%s3076 + $0x108] sm:$0xff]
    %v3111 = vld [vmem:[%s3076 + $0x110] sm:$0xff]
    %v3112 = vld [vmem:[%s3076 + $0x118] sm:$0xff]
    %v3113 = vld [vmem:[%s3076 + $0x120] sm:$0xff]
    %v3114 = vld [vmem:[%s3076 + $0x128] sm:$0xff]
    %v3115 = vld [vmem:[%s3076 + $0x130] sm:$0xff]
    %v3116 = vld [vmem:[%s3076 + $0x138] sm:$0xff]
    %v3117 = vld [vmem:[%s3076 + $0x140] sm:$0xff]
    %v3118 = vld [vmem:[%s3076 + $0x148] sm:$0xff]
    %v3119 = vld [vmem:[%s3076 + $0x150] sm:$0xff]
    %v3120 = vld [vmem:[%s3076 + $0x158] sm:$0xff]
    %v3121 = vld [vmem:[%s3076 + $0x160] sm:$0xff]
    %v3122 = vld [vmem:[%s3076 + $0x168] sm:$0xff]
    %v3123 = vld [vmem:[%s3076 + $0x170] sm:$0xff]
    %v3124 = vld [vmem:[%s3076 + $0x178] sm:$0xff]
    %v3125 = vld [vmem:[%s3076 + $0x180] sm:$0xff]
    %v3126 = vld [vmem:[%s3076 + $0x188] sm:$0xff]
    %v3127 = vld [vmem:[%s3076 + $0x190] sm:$0xff]
    %v3128 = vld [vmem:[%s3076 + $0x198] sm:$0xff]
    %v3129 = vld [vmem:[%s3076 + $0x1a0] sm:$0xff]
    %v3130 = vld [vmem:[%s3076 + $0x1a8] sm:$0xff]
    %v3131 = vld [vmem:[%s3076 + $0x1b0] sm:$0xff]
    %v3132 = vld [vmem:[%s3076 + $0x1b8] sm:$0xff]
    %v3133 = vld [vmem:[%s3076 + $0x1c0] sm:$0xff]
    %v3134 = vld [vmem:[%s3076 + $0x1c8] sm:$0xff]
    %v3135 = vld [vmem:[%s3076 + $0x1d0] sm:$0xff]
    %v3136 = vld [vmem:[%s3076 + $0x1d8] sm:$0xff]
    %v3137 = vld [vmem:[%s3076 + $0x1e0] sm:$0xff]
    %v3138 = vld [vmem:[%s3076 + $0x1e8] sm:$0xff]
    %v3139 = vld [vmem:[%s3076 + $0x1f0] sm:$0xff]
    %v3140 = vld [vmem:[%s3076 + $0x1f8] sm:$0xff]
    %3141 = vmatpush.msra.mxu0 %v3137
    %3142 = vmatpush.msra.mxu0 %v3133
    %3143 = vmatpush.msra.mxu0 %v3129
    %3144 = vmatpush.msra.mxu0 %v3125
    %3145 = vmatpush.msra.mxu0 %v3121
    %3146 = vmatpush.msra.mxu0 %v3117
    %3147 = vmatpush.msra.mxu0 %v3113
    %3148 = vmatpush.msra.mxu0 %v3109
    %3149 = vmatpush.msra.mxu0 %v3105
    %3150 = vmatpush.msra.mxu0 %v3101
    %3151 = vmatpush.msra.mxu0 %v3097
    %3152 = vmatpush.msra.mxu0 %v3093
    %3153 = vmatpush.msra.mxu0 %v3089
    %3154 = vmatpush.msra.mxu0 %v3085
    %3155 = vmatpush.msra.mxu0 %v3081
    %3156 = vmatpush.msra.mxu0 %v3077
    %3157 = vmatmul.f32.gmra.mxu0 %v2917
    %v3158 = vpop.f32.mrf.mxu0
    %v3159 = vadd.f32 0.0, %v3158
    %3160 = vmatmul.f32.gmra.mxu0 %v2918
    %v3161 = vpop.f32.mrf.mxu0
    %v3162 = vadd.f32 0.0, %v3161
    %3163 = vdwg.mxu0
    %3164 = vmatpush.msra.mxu0 %v3138
    %3165 = vmatpush.msra.mxu0 %v3134
    %3166 = vmatpush.msra.mxu0 %v3130
    %3167 = vmatpush.msra.mxu0 %v3126
    %3168 = vmatpush.msra.mxu0 %v3122
    %3169 = vmatpush.msra.mxu0 %v3118
    %3170 = vmatpush.msra.mxu0 %v3114
    %3171 = vmatpush.msra.mxu0 %v3110
    %3172 = vmatpush.msra.mxu0 %v3106
    %3173 = vmatpush.msra.mxu0 %v3102
    %3174 = vmatpush.msra.mxu0 %v3098
    %3175 = vmatpush.msra.mxu0 %v3094
    %3176 = vmatpush.msra.mxu0 %v3090
    %3177 = vmatpush.msra.mxu0 %v3086
    %3178 = vmatpush.msra.mxu0 %v3082
    %3179 = vmatpush.msra.mxu0 %v3078
    %3180 = vmatmul.f32.gmra.mxu0 %v2917
    %v3181 = vpop.f32.mrf.mxu0
    %v3182 = vadd.f32 0.0, %v3181
    %3183 = vmatmul.f32.gmra.mxu0 %v2918
    %v3184 = vpop.f32.mrf.mxu0
    %v3185 = vadd.f32 0.0, %v3184
    %3186 = vdwg.mxu0
    %3187 = vmatpush.msra.mxu0 %v3139
    %3188 = vmatpush.msra.mxu0 %v3135
    %3189 = vmatpush.msra.mxu0 %v3131
    %3190 = vmatpush.msra.mxu0 %v3127
    %3191 = vmatpush.msra.mxu0 %v3123
    %3192 = vmatpush.msra.mxu0 %v3119
    %3193 = vmatpush.msra.mxu0 %v3115
    %3194 = vmatpush.msra.mxu0 %v3111
    %3195 = vmatpush.msra.mxu0 %v3107
    %3196 = vmatpush.msra.mxu0 %v3103
    %3197 = vmatpush.msra.mxu0 %v3099
    %3198 = vmatpush.msra.mxu0 %v3095
    %3199 = vmatpush.msra.mxu0 %v3091
    %3200 = vmatpush.msra.mxu0 %v3087
    %3201 = vmatpush.msra.mxu0 %v3083
    %3202 = vmatpush.msra.mxu0 %v3079
    %3203 = vmatmul.f32.gmra.mxu0 %v2917
    %v3204 = vpop.f32.mrf.mxu0
    %v3205 = vadd.f32 0.0, %v3204
    %3206 = vmatmul.f32.gmra.mxu0 %v2918
    %v3207 = vpop.f32.mrf.mxu0
    %v3208 = vadd.f32 0.0, %v3207
    %3209 = vdwg.mxu0
    %3210 = vmatpush.msra.mxu0 %v3140
    %3211 = vmatpush.msra.mxu0 %v3136
    %3212 = vmatpush.msra.mxu0 %v3132
    %3213 = vmatpush.msra.mxu0 %v3128
    %3214 = vmatpush.msra.mxu0 %v3124
    %3215 = vmatpush.msra.mxu0 %v3120
    %3216 = vmatpush.msra.mxu0 %v3116
    %3217 = vmatpush.msra.mxu0 %v3112
    %3218 = vmatpush.msra.mxu0 %v3108
    %3219 = vmatpush.msra.mxu0 %v3104
    %3220 = vmatpush.msra.mxu0 %v3100
    %3221 = vmatpush.msra.mxu0 %v3096
    %3222 = vmatpush.msra.mxu0 %v3092
    %3223 = vmatpush.msra.mxu0 %v3088
    %3224 = vmatpush.msra.mxu0 %v3084
    %3225 = vmatpush.msra.mxu0 %v3080
    %3226 = vmatmul.f32.gmra.mxu0 %v2917
    %v3227 = vpop.f32.mrf.mxu0
    %v3228 = vadd.f32 0.0, %v3227
    %3229 = vmatmul.f32.gmra.mxu0 %v2918
    %v3230 = vpop.f32.mrf.mxu0
    %v3231 = vadd.f32 0.0, %v3230
    %3232 = vdwg.mxu0
    %v3233 = vxor.u32 %v3002, 2147483648
    %v3234 = vxor.u32 %v3025, 2147483648
    %v3235 = vxor.u32 %v3048, 2147483648
    %v3236 = vxor.u32 %v3071, 2147483648
    %v3237 = vxor.u32 %v3005, 2147483648
    %v3238 = vxor.u32 %v3028, 2147483648
    %v3239 = vxor.u32 %v3051, 2147483648
    %v3240 = vxor.u32 %v3074, 2147483648
    %v3241 = vmul.f32 %v3233, 1.442695
    %v3242 = vpow.pop %v3241
    %v3243 = vmul.f32 %v3234, 1.442695
    %v3244 = vpow.pop %v3243
    %v3245 = vmul.f32 %v3235, 1.442695
    %v3246 = vpow.pop %v3245
    %v3247 = vmul.f32 %v3236, 1.442695
    %v3248 = vpow.pop %v3247
    %v3249 = vmul.f32 %v3237, 1.442695
    %v3250 = vpow.pop %v3249
    %v3251 = vmul.f32 %v3238, 1.442695
    %v3252 = vpow.pop %v3251
    %v3253 = vmul.f32 %v3239, 1.442695
    %v3254 = vpow.pop %v3253
    %v3255 = vmul.f32 %v3240, 1.442695
    %v3256 = vpow.pop %v3255
    %v3257 = vadd.f32 %v3242, 1.0
    %v3258 = vadd.f32 %v3244, 1.0
    %v3259 = vadd.f32 %v3246, 1.0
    %v3260 = vadd.f32 %v3248, 1.0
    %v3261 = vadd.f32 %v3250, 1.0
    %v3262 = vadd.f32 %v3252, 1.0
    %v3263 = vadd.f32 %v3254, 1.0
    %v3264 = vadd.f32 %v3256, 1.0
    %v3265 = vrcp.pop %v3257
    %v3266 = vmul.f32 %v3257, %v3265
    %v3267 = vsub.f32 1.0, %v3266
    %v3268 = vmul.f32 %v3265, %v3267
    %v3269 = vadd.f32 %v3265, %v3268
    %vm3270 = vweird.f32 %v3257
    %vm3271 = vweird.f32 %v3265
    %vm3272 = vmor %vm3270, %vm3271
    %v3273 = vsel %vm3272, %v3265, %v3269
    %v3274 = vand.u32 2147483647, %v3257
    %vm3275 = vcmp.eq.f32.partialorder %v3274, 8.507059e+37
    %v3276 = vand.u32 %v3257, 2147483648
    %v3277 = vor.u32 1.1754944e-38, %v3276
    %v3278 = vsel %vm3275, %v3277, %v3273
    %v3279 = vmul.f32 1.0, %v3278
    %v3280 = vrcp.pop %v3258
    %v3281 = vmul.f32 %v3258, %v3280
    %v3282 = vsub.f32 1.0, %v3281
    %v3283 = vmul.f32 %v3280, %v3282
    %v3284 = vadd.f32 %v3280, %v3283
    %vm3285 = vweird.f32 %v3258
    %vm3286 = vweird.f32 %v3280
    %vm3287 = vmor %vm3285, %vm3286
    %v3288 = vsel %vm3287, %v3280, %v3284
    %v3289 = vand.u32 2147483647, %v3258
    %vm3290 = vcmp.eq.f32.partialorder %v3289, 8.507059e+37
    %v3291 = vand.u32 %v3258, 2147483648
    %v3292 = vor.u32 1.1754944e-38, %v3291
    %v3293 = vsel %vm3290, %v3292, %v3288
    %v3294 = vmul.f32 1.0, %v3293
    %v3295 = vrcp.pop %v3259
    %v3296 = vmul.f32 %v3259, %v3295
    %v3297 = vsub.f32 1.0, %v3296
    %v3298 = vmul.f32 %v3295, %v3297
    %v3299 = vadd.f32 %v3295, %v3298
    %vm3300 = vweird.f32 %v3259
    %vm3301 = vweird.f32 %v3295
    %vm3302 = vmor %vm3300, %vm3301
    %v3303 = vsel %vm3302, %v3295, %v3299
    %v3304 = vand.u32 2147483647, %v3259
    %vm3305 = vcmp.eq.f32.partialorder %v3304, 8.507059e+37
    %v3306 = vand.u32 %v3259, 2147483648
    %v3307 = vor.u32 1.1754944e-38, %v3306
    %v3308 = vsel %vm3305, %v3307, %v3303
    %v3309 = vmul.f32 1.0, %v3308
    %v3310 = vrcp.pop %v3260
    %v3311 = vmul.f32 %v3260, %v3310
    %v3312 = vsub.f32 1.0, %v3311
    %v3313 = vmul.f32 %v3310, %v3312
    %v3314 = vadd.f32 %v3310, %v3313
    %vm3315 = vweird.f32 %v3260
    %vm3316 = vweird.f32 %v3310
    %vm3317 = vmor %vm3315, %vm3316
    %v3318 = vsel %vm3317, %v3310, %v3314
    %v3319 = vand.u32 2147483647, %v3260
    %vm3320 = vcmp.eq.f32.partialorder %v3319, 8.507059e+37
    %v3321 = vand.u32 %v3260, 2147483648
    %v3322 = vor.u32 1.1754944e-38, %v3321
    %v3323 = vsel %vm3320, %v3322, %v3318
    %v3324 = vmul.f32 1.0, %v3323
    %v3325 = vrcp.pop %v3261
    %v3326 = vmul.f32 %v3261, %v3325
    %v3327 = vsub.f32 1.0, %v3326
    %v3328 = vmul.f32 %v3325, %v3327
    %v3329 = vadd.f32 %v3325, %v3328
    %vm3330 = vweird.f32 %v3261
    %vm3331 = vweird.f32 %v3325
    %vm3332 = vmor %vm3330, %vm3331
    %v3333 = vsel %vm3332, %v3325, %v3329
    %v3334 = vand.u32 2147483647, %v3261
    %vm3335 = vcmp.eq.f32.partialorder %v3334, 8.507059e+37
    %v3336 = vand.u32 %v3261, 2147483648
    %v3337 = vor.u32 1.1754944e-38, %v3336
    %v3338 = vsel %vm3335, %v3337, %v3333
    %v3339 = vmul.f32 1.0, %v3338
    %v3340 = vrcp.pop %v3262
    %v3341 = vmul.f32 %v3262, %v3340
    %v3342 = vsub.f32 1.0, %v3341
    %v3343 = vmul.f32 %v3340, %v3342
    %v3344 = vadd.f32 %v3340, %v3343
    %vm3345 = vweird.f32 %v3262
    %vm3346 = vweird.f32 %v3340
    %vm3347 = vmor %vm3345, %vm3346
    %v3348 = vsel %vm3347, %v3340, %v3344
    %v3349 = vand.u32 2147483647, %v3262
    %vm3350 = vcmp.eq.f32.partialorder %v3349, 8.507059e+37
    %v3351 = vand.u32 %v3262, 2147483648
    %v3352 = vor.u32 1.1754944e-38, %v3351
    %v3353 = vsel %vm3350, %v3352, %v3348
    %v3354 = vmul.f32 1.0, %v3353
    %v3355 = vrcp.pop %v3263
    %v3356 = vmul.f32 %v3263, %v3355
    %v3357 = vsub.f32 1.0, %v3356
    %v3358 = vmul.f32 %v3355, %v3357
    %v3359 = vadd.f32 %v3355, %v3358
    %vm3360 = vweird.f32 %v3263
    %vm3361 = vweird.f32 %v3355
    %vm3362 = vmor %vm3360, %vm3361
    %v3363 = vsel %vm3362, %v3355, %v3359
    %v3364 = vand.u32 2147483647, %v3263
    %vm3365 = vcmp.eq.f32.partialorder %v3364, 8.507059e+37
    %v3366 = vand.u32 %v3263, 2147483648
    %v3367 = vor.u32 1.1754944e-38, %v3366
    %v3368 = vsel %vm3365, %v3367, %v3363
    %v3369 = vmul.f32 1.0, %v3368
    %v3370 = vrcp.pop %v3264
    %v3371 = vmul.f32 %v3264, %v3370
    %v3372 = vsub.f32 1.0, %v3371
    %v3373 = vmul.f32 %v3370, %v3372
    %v3374 = vadd.f32 %v3370, %v3373
    %vm3375 = vweird.f32 %v3264
    %vm3376 = vweird.f32 %v3370
    %vm3377 = vmor %vm3375, %vm3376
    %v3378 = vsel %vm3377, %v3370, %v3374
    %v3379 = vand.u32 2147483647, %v3264
    %vm3380 = vcmp.eq.f32.partialorder %v3379, 8.507059e+37
    %v3381 = vand.u32 %v3264, 2147483648
    %v3382 = vor.u32 1.1754944e-38, %v3381
    %v3383 = vsel %vm3380, %v3382, %v3378
    %v3384 = vmul.f32 1.0, %v3383
    %v3385 = vmul.f32 %v3002, %v3279
    %v3386 = vmul.f32 %v3025, %v3294
    %v3387 = vmul.f32 %v3048, %v3309
    %v3388 = vmul.f32 %v3071, %v3324
    %v3389 = vmul.f32 %v3005, %v3339
    %v3390 = vmul.f32 %v3028, %v3354
    %v3391 = vmul.f32 %v3051, %v3369
    %v3392 = vmul.f32 %v3074, %v3384
    %v3393 = vmul.f32 %v3385, %v3159
    %v3394 = vmul.f32 %v3386, %v3182
    %v3395 = vmul.f32 %v3387, %v3205
    %v3396 = vmul.f32 %v3388, %v3228
    %v3397 = vmul.f32 %v3389, %v3162
    %v3398 = vmul.f32 %v3390, %v3185
    %v3399 = vmul.f32 %v3391, %v3208
    %v3400 = vmul.f32 %v3392, %v3231
    %s3401 = scalar_lea.vmem [#allocation22], 512
    %v3402 = vld [vmem:[%s3401] sm:$0xff]
    %v3403 = vld [vmem:[%s3401 + $0x8] sm:$0xff]
    %v3404 = vld [vmem:[%s3401 + $0x10] sm:$0xff]
    %v3405 = vld [vmem:[%s3401 + $0x18] sm:$0xff]
    %v3406 = vld [vmem:[%s3401 + $0x20] sm:$0xff]
    %v3407 = vld [vmem:[%s3401 + $0x28] sm:$0xff]
    %v3408 = vld [vmem:[%s3401 + $0x30] sm:$0xff]
    %v3409 = vld [vmem:[%s3401 + $0x38] sm:$0xff]
    %v3410 = vld [vmem:[%s3401 + $0x40] sm:$0xff]
    %v3411 = vld [vmem:[%s3401 + $0x48] sm:$0xff]
    %v3412 = vld [vmem:[%s3401 + $0x50] sm:$0xff]
    %v3413 = vld [vmem:[%s3401 + $0x58] sm:$0xff]
    %v3414 = vld [vmem:[%s3401 + $0x60] sm:$0xff]
    %v3415 = vld [vmem:[%s3401 + $0x68] sm:$0xff]
    %v3416 = vld [vmem:[%s3401 + $0x70] sm:$0xff]
    %v3417 = vld [vmem:[%s3401 + $0x78] sm:$0xff]
    %v3418 = vld [vmem:[%s3401 + $0x80] sm:$0xff]
    %v3419 = vld [vmem:[%s3401 + $0x88] sm:$0xff]
    %v3420 = vld [vmem:[%s3401 + $0x90] sm:$0xff]
    %v3421 = vld [vmem:[%s3401 + $0x98] sm:$0xff]
    %v3422 = vld [vmem:[%s3401 + $0xa0] sm:$0xff]
    %v3423 = vld [vmem:[%s3401 + $0xa8] sm:$0xff]
    %v3424 = vld [vmem:[%s3401 + $0xb0] sm:$0xff]
    %v3425 = vld [vmem:[%s3401 + $0xb8] sm:$0xff]
    %v3426 = vld [vmem:[%s3401 + $0xc0] sm:$0xff]
    %v3427 = vld [vmem:[%s3401 + $0xc8] sm:$0xff]
    %v3428 = vld [vmem:[%s3401 + $0xd0] sm:$0xff]
    %v3429 = vld [vmem:[%s3401 + $0xd8] sm:$0xff]
    %v3430 = vld [vmem:[%s3401 + $0xe0] sm:$0xff]
    %v3431 = vld [vmem:[%s3401 + $0xe8] sm:$0xff]
    %v3432 = vld [vmem:[%s3401 + $0xf0] sm:$0xff]
    %v3433 = vld [vmem:[%s3401 + $0xf8] sm:$0xff]
    %v3434 = vld [vmem:[%s3401 + $0x100] sm:$0xff]
    %v3435 = vld [vmem:[%s3401 + $0x108] sm:$0xff]
    %v3436 = vld [vmem:[%s3401 + $0x110] sm:$0xff]
    %v3437 = vld [vmem:[%s3401 + $0x118] sm:$0xff]
    %v3438 = vld [vmem:[%s3401 + $0x120] sm:$0xff]
    %v3439 = vld [vmem:[%s3401 + $0x128] sm:$0xff]
    %v3440 = vld [vmem:[%s3401 + $0x130] sm:$0xff]
    %v3441 = vld [vmem:[%s3401 + $0x138] sm:$0xff]
    %v3442 = vld [vmem:[%s3401 + $0x140] sm:$0xff]
    %v3443 = vld [vmem:[%s3401 + $0x148] sm:$0xff]
    %v3444 = vld [vmem:[%s3401 + $0x150] sm:$0xff]
    %v3445 = vld [vmem:[%s3401 + $0x158] sm:$0xff]
    %v3446 = vld [vmem:[%s3401 + $0x160] sm:$0xff]
    %v3447 = vld [vmem:[%s3401 + $0x168] sm:$0xff]
    %v3448 = vld [vmem:[%s3401 + $0x170] sm:$0xff]
    %v3449 = vld [vmem:[%s3401 + $0x178] sm:$0xff]
    %v3450 = vld [vmem:[%s3401 + $0x180] sm:$0xff]
    %v3451 = vld [vmem:[%s3401 + $0x188] sm:$0xff]
    %v3452 = vld [vmem:[%s3401 + $0x190] sm:$0xff]
    %v3453 = vld [vmem:[%s3401 + $0x198] sm:$0xff]
    %v3454 = vld [vmem:[%s3401 + $0x1a0] sm:$0xff]
    %v3455 = vld [vmem:[%s3401 + $0x1a8] sm:$0xff]
    %v3456 = vld [vmem:[%s3401 + $0x1b0] sm:$0xff]
    %v3457 = vld [vmem:[%s3401 + $0x1b8] sm:$0xff]
    %v3458 = vld [vmem:[%s3401 + $0x1c0] sm:$0xff]
    %v3459 = vld [vmem:[%s3401 + $0x1c8] sm:$0xff]
    %v3460 = vld [vmem:[%s3401 + $0x1d0] sm:$0xff]
    %v3461 = vld [vmem:[%s3401 + $0x1d8] sm:$0xff]
    %v3462 = vld [vmem:[%s3401 + $0x1e0] sm:$0xff]
    %v3463 = vld [vmem:[%s3401 + $0x1e8] sm:$0xff]
    %v3464 = vld [vmem:[%s3401 + $0x1f0] sm:$0xff]
    %v3465 = vld [vmem:[%s3401 + $0x1f8] sm:$0xff]
    %3466 = vmatpush.msra.mxu0 %v3417
    %3467 = vmatpush.msra.mxu0 %v3416
    %3468 = vmatpush.msra.mxu0 %v3415
    %3469 = vmatpush.msra.mxu0 %v3414
    %3470 = vmatpush.msra.mxu0 %v3413
    %3471 = vmatpush.msra.mxu0 %v3412
    %3472 = vmatpush.msra.mxu0 %v3411
    %3473 = vmatpush.msra.mxu0 %v3410
    %3474 = vmatpush.msra.mxu0 %v3409
    %3475 = vmatpush.msra.mxu0 %v3408
    %3476 = vmatpush.msra.mxu0 %v3407
    %3477 = vmatpush.msra.mxu0 %v3406
    %3478 = vmatpush.msra.mxu0 %v3405
    %3479 = vmatpush.msra.mxu0 %v3404
    %3480 = vmatpush.msra.mxu0 %v3403
    %3481 = vmatpush.msra.mxu0 %v3402
    %3482 = vmatmul.f32.gmra.mxu0 %v3393
    %v3483 = vpop.f32.mrf.mxu0
    %v3484 = vadd.f32 0.0, %v3483
    %3485 = vmatmul.f32.gmra.mxu0 %v3397
    %v3486 = vpop.f32.mrf.mxu0
    %v3487 = vadd.f32 0.0, %v3486
    %3488 = vdwg.mxu0
    %3489 = vmatpush.msra.mxu0 %v3433
    %3490 = vmatpush.msra.mxu0 %v3432
    %3491 = vmatpush.msra.mxu0 %v3431
    %3492 = vmatpush.msra.mxu0 %v3430
    %3493 = vmatpush.msra.mxu0 %v3429
    %3494 = vmatpush.msra.mxu0 %v3428
    %3495 = vmatpush.msra.mxu0 %v3427
    %3496 = vmatpush.msra.mxu0 %v3426
    %3497 = vmatpush.msra.mxu0 %v3425
    %3498 = vmatpush.msra.mxu0 %v3424
    %3499 = vmatpush.msra.mxu0 %v3423
    %3500 = vmatpush.msra.mxu0 %v3422
    %3501 = vmatpush.msra.mxu0 %v3421
    %3502 = vmatpush.msra.mxu0 %v3420
    %3503 = vmatpush.msra.mxu0 %v3419
    %3504 = vmatpush.msra.mxu0 %v3418
    %3505 = vmatmul.f32.gmra.mxu0 %v3394
    %v3506 = vpop.f32.mrf.mxu0
    %v3507 = vadd.f32 %v3484, %v3506
    %3508 = vmatmul.f32.gmra.mxu0 %v3398
    %v3509 = vpop.f32.mrf.mxu0
    %v3510 = vadd.f32 %v3487, %v3509
    %3511 = vdwg.mxu0
    %3512 = vmatpush.msra.mxu0 %v3449
    %3513 = vmatpush.msra.mxu0 %v3448
    %3514 = vmatpush.msra.mxu0 %v3447
    %3515 = vmatpush.msra.mxu0 %v3446
    %3516 = vmatpush.msra.mxu0 %v3445
    %3517 = vmatpush.msra.mxu0 %v3444
    %3518 = vmatpush.msra.mxu0 %v3443
    %3519 = vmatpush.msra.mxu0 %v3442
    %3520 = vmatpush.msra.mxu0 %v3441
    %3521 = vmatpush.msra.mxu0 %v3440
    %3522 = vmatpush.msra.mxu0 %v3439
    %3523 = vmatpush.msra.mxu0 %v3438
    %3524 = vmatpush.msra.mxu0 %v3437
    %3525 = vmatpush.msra.mxu0 %v3436
    %3526 = vmatpush.msra.mxu0 %v3435
    %3527 = vmatpush.msra.mxu0 %v3434
    %3528 = vmatmul.f32.gmra.mxu0 %v3395
    %v3529 = vpop.f32.mrf.mxu0
    %v3530 = vadd.f32 %v3507, %v3529
    %3531 = vmatmul.f32.gmra.mxu0 %v3399
    %v3532 = vpop.f32.mrf.mxu0
    %v3533 = vadd.f32 %v3510, %v3532
    %3534 = vdwg.mxu0
    %3535 = vmatpush.msra.mxu0 %v3465
    %3536 = vmatpush.msra.mxu0 %v3464
    %3537 = vmatpush.msra.mxu0 %v3463
    %3538 = vmatpush.msra.mxu0 %v3462
    %3539 = vmatpush.msra.mxu0 %v3461
    %3540 = vmatpush.msra.mxu0 %v3460
    %3541 = vmatpush.msra.mxu0 %v3459
    %3542 = vmatpush.msra.mxu0 %v3458
    %3543 = vmatpush.msra.mxu0 %v3457
    %3544 = vmatpush.msra.mxu0 %v3456
    %3545 = vmatpush.msra.mxu0 %v3455
    %3546 = vmatpush.msra.mxu0 %v3454
    %3547 = vmatpush.msra.mxu0 %v3453
    %3548 = vmatpush.msra.mxu0 %v3452
    %3549 = vmatpush.msra.mxu0 %v3451
    %3550 = vmatpush.msra.mxu0 %v3450
    %3551 = vmatmul.f32.gmra.mxu0 %v3396
    %v3552 = vpop.f32.mrf.mxu0
    %v3553 = vadd.f32 %v3530, %v3552
    %3554 = vmatmul.f32.gmra.mxu0 %v3400
    %v3555 = vpop.f32.mrf.mxu0
    %v3556 = vadd.f32 %v3533, %v3555
    %3557 = vdwg.mxu0
    %v3558 = vmul.f32 %v639, %v3553
    %v3559 = vmul.f32 %v640, %v3556
    %s3560 = scalar_lea.vmem %s16, 1
    %v3561 = vld [vmem:[%s3560] sm:$0x1]
    %s3562 = scalar_lea.vmem %s17, 1
    %v3563 = vld [vmem:[%s3562] sm:$0x1]
    %3564 = vadd.xlane.f32.xlu0 %v3558
    %v3565 = vpop.xlane.xlu0 %3564
    %3566 = vadd.xlane.f32.xlu0 %v3559
    %v3567 = vpop.xlane.xlu0 %3566
    %v3568 = vmul.f32 %v3565, %v330
    %v3569 = vmul.f32 %v3567, %v330
    %v3570 = vsub.f32 %v3558, %v3568
    %v3571 = vsub.f32 %v3559, %v3569
    %v3572 = vmul.f32 %v3570, %v3570
    %v3573 = vmul.f32 %v3571, %v3571
    %3574 = vadd.xlane.f32.xlu0 %v3572
    %v3575 = vpop.xlane.xlu0 %3574
    %3576 = vadd.xlane.f32.xlu0 %v3573
    %v3577 = vpop.xlane.xlu0 %3576
    %v3578 = vmul.f32 %v3575, %v330
    %v3579 = vmul.f32 %v3577, %v330
    %v3580 = vadd.f32 %v3578, 1e-06
    %v3581 = vadd.f32 %v3579, 1e-06
    %v3582 = vrsqrt.pop %v3580
    %v3583 = vmul.f32 %v3582, %v3580
    %v3584 = vmul.f32 %v3583, %v3582
    %v3585 = vmul.f32 0.5, %v3584
    %v3586 = vsub.f32 1.5, %v3585
    %v3587 = vmul.f32 %v3582, %v3586
    %vm3588 = vweird.f32 %v3580
    %vm3589 = vweird.f32 %v3582
    %vm3590 = vmor %vm3588, %vm3589
    %v3591 = vsel %vm3590, %v3582, %v3587
    %v3592 = vrsqrt.pop %v3581
    %v3593 = vmul.f32 %v3592, %v3581
    %v3594 = vmul.f32 %v3593, %v3592
    %v3595 = vmul.f32 0.5, %v3594
    %v3596 = vsub.f32 1.5, %v3595
    %v3597 = vmul.f32 %v3592, %v3596
    %vm3598 = vweird.f32 %v3581
    %vm3599 = vweird.f32 %v3592
    %vm3600 = vmor %vm3598, %vm3599
    %v3601 = vsel %vm3600, %v3592, %v3597
    %v3602 = vmul.f32 %v3570, %v3591
    %v3603 = vmul.f32 %v3571, %v3601
    %v3605 = vperm.slane %v3561, 0
    %v3607 = vmul.f32 %v3602, %v3605
    %v3608 = vmul.f32 %v3603, %v3605
    %v3610 = vperm.slane %v3563, 0
    %v3612 = vadd.f32 %v3607, %v3610
    %v3613 = vadd.f32 %v3608, %v3610
    %v3614 = vadd.f32 %v2873, %v3612
    %v3615 = vadd.f32 %v2874, %v3613
    %v3616 = vld [vmem:[#allocation25] sm:$0xff]
    %v3617 = vld [vmem:[#allocation25 + $0x8] sm:$0xff]
    %v3618 = vld [vmem:[#allocation25 + $0x10] sm:$0xff]
    %v3619 = vld [vmem:[#allocation25 + $0x18] sm:$0xff]
    %v3620 = vld [vmem:[#allocation25 + $0x20] sm:$0xff]
    %v3621 = vld [vmem:[#allocation25 + $0x28] sm:$0xff]
    %v3622 = vld [vmem:[#allocation25 + $0x30] sm:$0xff]
    %v3623 = vld [vmem:[#allocation25 + $0x38] sm:$0xff]
    %v3624 = vld [vmem:[#allocation25 + $0x40] sm:$0xff]
    %v3625 = vld [vmem:[#allocation25 + $0x48] sm:$0xff]
    %v3626 = vld [vmem:[#allocation25 + $0x50] sm:$0xff]
    %v3627 = vld [vmem:[#allocation25 + $0x58] sm:$0xff]
    %v3628 = vld [vmem:[#allocation25 + $0x60] sm:$0xff]
    %v3629 = vld [vmem:[#allocation25 + $0x68] sm:$0xff]
    %v3630 = vld [vmem:[#allocation25 + $0x70] sm:$0xff]
    %v3631 = vld [vmem:[#allocation25 + $0x78] sm:$0xff]
    %v3632 = vld [vmem:[#allocation25 + $0x80] sm:$0xff]
    %v3633 = vld [vmem:[#allocation25 + $0x88] sm:$0xff]
    %v3634 = vld [vmem:[#allocation25 + $0x90] sm:$0xff]
    %v3635 = vld [vmem:[#allocation25 + $0x98] sm:$0xff]
    %v3636 = vld [vmem:[#allocation25 + $0xa0] sm:$0xff]
    %v3637 = vld [vmem:[#allocation25 + $0xa8] sm:$0xff]
    %v3638 = vld [vmem:[#allocation25 + $0xb0] sm:$0xff]
    %v3639 = vld [vmem:[#allocation25 + $0xb8] sm:$0xff]
    %v3640 = vld [vmem:[#allocation25 + $0xc0] sm:$0xff]
    %v3641 = vld [vmem:[#allocation25 + $0xc8] sm:$0xff]
    %v3642 = vld [vmem:[#allocation25 + $0xd0] sm:$0xff]
    %v3643 = vld [vmem:[#allocation25 + $0xd8] sm:$0xff]
    %v3644 = vld [vmem:[#allocation25 + $0xe0] sm:$0xff]
    %v3645 = vld [vmem:[#allocation25 + $0xe8] sm:$0xff]
    %v3646 = vld [vmem:[#allocation25 + $0xf0] sm:$0xff]
    %v3647 = vld [vmem:[#allocation25 + $0xf8] sm:$0xff]
    %v3648 = vld [vmem:[%s19] sm:$0x3]
    %v3650 = vperm.slane %v3648, 0
    %v3651 = vperm.slane %v3648, 1
    %3654 = vmatpush.msra.mxu0 %v3646
    %3655 = vmatpush.msra.mxu0 %v3644
    %3656 = vmatpush.msra.mxu0 %v3642
    %3657 = vmatpush.msra.mxu0 %v3640
    %3658 = vmatpush.msra.mxu0 %v3638
    %3659 = vmatpush.msra.mxu0 %v3636
    %3660 = vmatpush.msra.mxu0 %v3634
    %3661 = vmatpush.msra.mxu0 %v3632
    %3662 = vmatpush.msra.mxu0 %v3630
    %3663 = vmatpush.msra.mxu0 %v3628
    %3664 = vmatpush.msra.mxu0 %v3626
    %3665 = vmatpush.msra.mxu0 %v3624
    %3666 = vmatpush.msra.mxu0 %v3622
    %3667 = vmatpush.msra.mxu0 %v3620
    %3668 = vmatpush.msra.mxu0 %v3618
    %3669 = vmatpush.msra.mxu0 %v3616
    %3670 = vmatmul.f32.gmra.mxu0 %v396
    %v3671 = vpop.f32.mrf.mxu0
    %v3672 = vadd.f32 %v3650, %v3671
    %3673 = vdwg.mxu0
    %3674 = vmatpush.msra.mxu0 %v3647
    %3675 = vmatpush.msra.mxu0 %v3645
    %3676 = vmatpush.msra.mxu0 %v3643
    %3677 = vmatpush.msra.mxu0 %v3641
    %3678 = vmatpush.msra.mxu0 %v3639
    %3679 = vmatpush.msra.mxu0 %v3637
    %3680 = vmatpush.msra.mxu0 %v3635
    %3681 = vmatpush.msra.mxu0 %v3633
    %3682 = vmatpush.msra.mxu0 %v3631
    %3683 = vmatpush.msra.mxu0 %v3629
    %3684 = vmatpush.msra.mxu0 %v3627
    %3685 = vmatpush.msra.mxu0 %v3625
    %3686 = vmatpush.msra.mxu0 %v3623
    %3687 = vmatpush.msra.mxu0 %v3621
    %3688 = vmatpush.msra.mxu0 %v3619
    %3689 = vmatpush.msra.mxu0 %v3617
    %3690 = vmatmul.f32.gmra.mxu0 %v396
    %v3691 = vpop.f32.mrf.mxu0
    %v3692 = vadd.f32 %v3651, %v3691
    %3693 = vdwg.mxu0
    %v3694 = vperm.slane %v3672, 0
    %v3695 = vperm.slane %v3672, 1
    %v3696 = vadd.f32 %v3692, 1.0
    %v3697 = vperm.slane %v3696, 0
    %v3698 = vperm.slane %v3696, 1
    %3699 = vadd.xlane.f32.xlu0 %v3614
    %v3700 = vpop.xlane.xlu0 %3699
    %3701 = vadd.xlane.f32.xlu0 %v3615
    %v3702 = vpop.xlane.xlu0 %3701
    %v3703 = vmul.f32 %v3700, %v330
    %v3704 = vmul.f32 %v3702, %v330
    %v3705 = vsub.f32 %v3614, %v3703
    %v3706 = vsub.f32 %v3615, %v3704
    %v3707 = vmul.f32 %v3705, %v3705
    %v3708 = vmul.f32 %v3706, %v3706
    %3709 = vadd.xlane.f32.xlu0 %v3707
    %v3710 = vpop.xlane.xlu0 %3709
    %3711 = vadd.xlane.f32.xlu0 %v3708
    %v3712 = vpop.xlane.xlu0 %3711
    %v3713 = vmul.f32 %v3710, %v330
    %v3714 = vmul.f32 %v3712, %v330
    %v3715 = vadd.f32 %v3713, 1e-05
    %v3716 = vadd.f32 %v3714, 1e-05
    %v3717 = vrsqrt.pop %v3715
    %v3718 = vmul.f32 %v3717, %v3715
    %v3719 = vmul.f32 %v3718, %v3717
    %v3720 = vmul.f32 0.5, %v3719
    %v3721 = vsub.f32 1.5, %v3720
    %v3722 = vmul.f32 %v3717, %v3721
    %vm3723 = vweird.f32 %v3715
    %vm3724 = vweird.f32 %v3717
    %vm3725 = vmor %vm3723, %vm3724
    %v3726 = vsel %vm3725, %v3717, %v3722
    %v3727 = vrsqrt.pop %v3716
    %v3728 = vmul.f32 %v3727, %v3716
    %v3729 = vmul.f32 %v3728, %v3727
    %v3730 = vmul.f32 0.5, %v3729
    %v3731 = vsub.f32 1.5, %v3730
    %v3732 = vmul.f32 %v3727, %v3731
    %vm3733 = vweird.f32 %v3716
    %vm3734 = vweird.f32 %v3727
    %vm3735 = vmor %vm3733, %vm3734
    %v3736 = vsel %vm3735, %v3727, %v3732
    %v3737 = vmul.f32 %v3705, %v3726
    %v3738 = vmul.f32 %v3706, %v3736
    %v3739 = vmul.f32 %v3737, %v3697
    %v3740 = vmul.f32 %v3738, %v3698
    %v3741 = vadd.f32 %v3739, %v3694
    %v3742 = vadd.f32 %v3740, %v3695
    %v3743 = vld [vmem:[#allocation26] sm:$0xff]
    %v3744 = vld [vmem:[#allocation26 + $0x8] sm:$0xff]
    %v3745 = vld [vmem:[#allocation26 + $0x10] sm:$0xff]
    %v3746 = vld [vmem:[#allocation26 + $0x18] sm:$0xff]
    %v3747 = vld [vmem:[#allocation26 + $0x20] sm:$0xff]
    %v3748 = vld [vmem:[#allocation26 + $0x28] sm:$0xff]
    %v3749 = vld [vmem:[#allocation26 + $0x30] sm:$0xff]
    %v3750 = vld [vmem:[#allocation26 + $0x38] sm:$0xff]
    %v3751 = vld [vmem:[#allocation26 + $0x40] sm:$0xff]
    %v3752 = vld [vmem:[#allocation26 + $0x48] sm:$0xff]
    %v3753 = vld [vmem:[#allocation26 + $0x50] sm:$0xff]
    %v3754 = vld [vmem:[#allocation26 + $0x58] sm:$0xff]
    %v3755 = vld [vmem:[#allocation26 + $0x60] sm:$0xff]
    %v3756 = vld [vmem:[#allocation26 + $0x68] sm:$0xff]
    %v3757 = vld [vmem:[#allocation26 + $0x70] sm:$0xff]
    %v3758 = vld [vmem:[#allocation26 + $0x78] sm:$0xff]
    %v3759 = vld [vmem:[#allocation26 + $0x80] sm:$0xff]
    %v3760 = vld [vmem:[#allocation26 + $0x88] sm:$0xff]
    %v3761 = vld [vmem:[#allocation26 + $0x90] sm:$0xff]
    %v3762 = vld [vmem:[#allocation26 + $0x98] sm:$0xff]
    %v3763 = vld [vmem:[#allocation26 + $0xa0] sm:$0xff]
    %v3764 = vld [vmem:[#allocation26 + $0xa8] sm:$0xff]
    %v3765 = vld [vmem:[#allocation26 + $0xb0] sm:$0xff]
    %v3766 = vld [vmem:[#allocation26 + $0xb8] sm:$0xff]
    %v3767 = vld [vmem:[#allocation26 + $0xc0] sm:$0xff]
    %v3768 = vld [vmem:[#allocation26 + $0xc8] sm:$0xff]
    %v3769 = vld [vmem:[#allocation26 + $0xd0] sm:$0xff]
    %v3770 = vld [vmem:[#allocation26 + $0xd8] sm:$0xff]
    %v3771 = vld [vmem:[#allocation26 + $0xe0] sm:$0xff]
    %v3772 = vld [vmem:[#allocation26 + $0xe8] sm:$0xff]
    %v3773 = vld [vmem:[#allocation26 + $0xf0] sm:$0xff]
    %v3774 = vld [vmem:[#allocation26 + $0xf8] sm:$0xff]
    %v3775 = vld [vmem:[%s21] sm:$0x3]
    %v3777 = vperm.slane %v3775, 0
    %v3778 = vperm.slane %v3775, 1
    %3781 = vmatpush.msra.mxu0 %v3773
    %3782 = vmatpush.msra.mxu0 %v3771
    %3783 = vmatpush.msra.mxu0 %v3769
    %3784 = vmatpush.msra.mxu0 %v3767
    %3785 = vmatpush.msra.mxu0 %v3765
    %3786 = vmatpush.msra.mxu0 %v3763
    %3787 = vmatpush.msra.mxu0 %v3761
    %3788 = vmatpush.msra.mxu0 %v3759
    %3789 = vmatpush.msra.mxu0 %v3757
    %3790 = vmatpush.msra.mxu0 %v3755
    %3791 = vmatpush.msra.mxu0 %v3753
    %3792 = vmatpush.msra.mxu0 %v3751
    %3793 = vmatpush.msra.mxu0 %v3749
    %3794 = vmatpush.msra.mxu0 %v3747
    %3795 = vmatpush.msra.mxu0 %v3745
    %3796 = vmatpush.msra.mxu0 %v3743
    %3797 = vmatmul.f32.gmra.mxu0 %v3741
    %v3798 = vpop.f32.mrf.mxu0
    %v3799 = vadd.f32 %v3777, %v3798
    %3800 = vmatmul.f32.gmra.mxu0 %v3742
    %v3801 = vpop.f32.mrf.mxu0
    %v3802 = vadd.f32 %v3777, %v3801
    %3803 = vdwg.mxu0
    %3804 = vmatpush.msra.mxu0 %v3774
    %3805 = vmatpush.msra.mxu0 %v3772
    %3806 = vmatpush.msra.mxu0 %v3770
    %3807 = vmatpush.msra.mxu0 %v3768
    %3808 = vmatpush.msra.mxu0 %v3766
    %3809 = vmatpush.msra.mxu0 %v3764
    %3810 = vmatpush.msra.mxu0 %v3762
    %3811 = vmatpush.msra.mxu0 %v3760
    %3812 = vmatpush.msra.mxu0 %v3758
    %3813 = vmatpush.msra.mxu0 %v3756
    %3814 = vmatpush.msra.mxu0 %v3754
    %3815 = vmatpush.msra.mxu0 %v3752
    %3816 = vmatpush.msra.mxu0 %v3750
    %3817 = vmatpush.msra.mxu0 %v3748
    %3818 = vmatpush.msra.mxu0 %v3746
    %3819 = vmatpush.msra.mxu0 %v3744
    %3820 = vmatmul.f32.gmra.mxu0 %v3741
    %v3821 = vpop.f32.mrf.mxu0
    %v3822 = vadd.f32 %v3778, %v3821
    %3823 = vmatmul.f32.gmra.mxu0 %v3742
    %v3824 = vpop.f32.mrf.mxu0
    %v3825 = vadd.f32 %v3778, %v3824
    %3826 = vdwg.mxu0
    %3827 = vst [vmem:[#allocation28] sm:$0xff] %v3799
    %3828 = vst [vmem:[#allocation28 + $0x8] sm:$0xff] %v3822
    %3829 = vst [vmem:[#allocation28 + $0x10] sm:$0xff] %v3802
    %3830 = vst [vmem:[#allocation28 + $0x18] sm:$0xff] %v3825
    // Predicated region
    $region154: #{tpu_custom_call.1} parent=1 // pred_check
      _
    $region155: #{tpu_custom_call.1} parent=1 // pred_check_branch
      %3832 = sbr.rel (0) target = $region157
    $region156: #{tpu_custom_call.1} parent=1 // pred_region
      %3834 = vsyncadd [#allocation4], 0
      %s3835 = sshll.u32 [#allocation28], 4
      %s3836 = int_to_ptr.vmem [resolvable:$true] %s3835
      %s3837 = sshll.u32 %s22, 4
      %s3838 = int_to_ptr.hbm [resolvable:$true] %s3837
      %3843 = dma.vmem_to_hbm [thread:$0]  %s3836, 512, %s3838, [#allocation4], 256, 256, 16
    $region157: #{tpu_custom_call.1} parent=1 // pred_fallthru
      _
    // Predicated region
    $region158: #{tpu_custom_call.1} parent=1 // pred_check
      _
    $region159: #{tpu_custom_call.1} parent=1 // pred_check_branch
      %3845 = sbr.rel (0) target = $region161
    $region160: #{tpu_custom_call.1} parent=1 // pred_region
      %3847 = dma.done [#allocation4], 512
    $region161: #{tpu_custom_call.1} parent=1 // pred_fallthru
      _
    %3848 = vsyncpa [#allocation3], 1
    %3849 = vsyncpa [#allocation6], 1
    %3850 = vsyncpa [#allocation9], 1
    %3851 = vsyncpa [#allocation12], 1
    %3852 = vsyncpa [#allocation15], 1
    %3853 = vsyncpa [#allocation18], 1
    %3854 = vsyncpa [#allocation21], 1
    %3855 = vsyncpa [#allocation24], 1
    %3856 = vsyncpa [#allocation27], 1
    %3857 = vsyncpa [#allocation4], 1

</llo_original>
